<compile_context>
chip_gen: v5e
topology: v5e:2x2
jax: 0.10.0
libtpu: 0.0.40
codegen_flags: <defaults>
</compile_context>

<pallas_src>
import math
from functools import partial

import jax
import jax.numpy as jnp
from jax.experimental import pallas as pl
from jax.experimental.pallas import tpu as pltpu

LN_EPS = 1e-5  # nn.LayerNorm default


def _q_tile(s):
    """Query-row tile: use the whole sequence unless it is long (tiles must be sublane multiples).
    Splitting tiny row counts is pure per-grid-step overhead (~0.35 us/step)."""
    if s <= 512:
        return s
    for t in (512, 256, 128, 64, 32, 16, 8):
        if s % t == 0:
            return t
    return s


# ----------------------------------------------------------------------------
# Fused decoder-layer kernel (one grid step = one batch element x one query-row tile)
# ----------------------------------------------------------------------------
def _decoder_layer_kernel(
    xq_ref, xfull_ref, enc_ref,
    wq1_ref, bq1_ref, wkv1_ref, bkv1_ref, wo1_ref, bo1_ref, g1_ref, be1_ref,
    wq2_ref, bq2_ref, wkv2_ref, bkv2_ref, wo2_ref, bo2_ref, g2_ref, be2_ref,
    w1_ref, bff1_ref, w2_ref, bff2_ref, g3_ref, be3_ref,
    o_ref, *, head_num, scale,
):
    d = xq_ref.shape[-1]
    dh = d // head_num

    def layer_norm(y, g_ref, b_ref):
        # Biased variance (matches torch LayerNorm); f32 throughout.
        mu = jnp.mean(y, axis=-1, keepdims=True)
        var = jnp.mean(jnp.square(y - mu), axis=-1, keepdims=True)
        return (y - mu) * jax.lax.rsqrt(var + LN_EPS) * g_ref[...] + b_ref[...]

    def attention(q_in, kv_in, wq_ref, bq_ref, wkv_ref, bkv_ref, wo_ref, bo_ref):
        # Projections: bf16 operands on the MXU, f32 accumulation.
        # Fold the 1/sqrt(dh) scale into q (cheaper than scaling the (Sq,Skv) score tile).
        q = (jnp.dot(q_in.astype(jnp.bfloat16), wq_ref[...],
                     preferred_element_type=jnp.float32) + bq_ref[...]) * scale
        kv = jnp.dot(kv_in.astype(jnp.bfloat16), wkv_ref[...],
                     preferred_element_type=jnp.float32) + bkv_ref[...]
        k = kv[:, :d]
        v = kv[:, d:]

        # Per-head attention.  No explicit k.T (dot_general contracts the last axis of BOTH
        # operands) and no python-list + concatenate: each head's context is folded directly
        # into the output projection, so no (Sq, d) context tile is ever materialised or
        # re-laid-out, and only one (Sq, d) accumulator stays live.
        out = bo_ref[...]                                            # (1, d) -> broadcasts up
        for h in range(head_num):
            sl = slice(h * dh, (h + 1) * dh)
            s = jax.lax.dot_general(                                  # (Sq, Skv), f32
                q[:, sl], k[:, sl],
                dimension_numbers=(((1,), (1,)), ((), ())),
                preferred_element_type=jnp.float32)
            m = jnp.max(s, axis=-1, keepdims=True)
            e = jnp.exp(s - m)
            p = e / jnp.sum(e, axis=-1, keepdims=True)                # exact softmax (f32)
            ctx_h = jnp.dot(p, v[:, sl], preferred_element_type=jnp.float32)
            out = out + jnp.dot(ctx_h.astype(jnp.bfloat16), wo_ref[sl, :],
                                preferred_element_type=jnp.float32)
        return out

    xq = xq_ref[0]        # (tq, D) f32 — query rows, also the residual skip
    xfull = xfull_ref[0]  # (S,  D) f32 — self-attention K/V source (full decoder sequence)
    enc = enc_ref[0]      # (Sk, D) f32 — cross-attention K/V source (encoder activations)

    # 1) self-attention + residual + LN1
    a1 = attention(xq, xfull, wq1_ref, bq1_ref, wkv1_ref, bkv1_ref, wo1_ref, bo1_ref)
    h1 = layer_norm(a1 + xq, g1_ref, be1_ref)

    # 2) cross-attention (K/V from encoder) + residual + LN2
    a2 = attention(h1, enc, wq2_ref, bq2_ref, wkv2_ref, bkv2_ref, wo2_ref, bo2_ref)
    h2 = layer_norm(a2 + h1, g2_ref, be2_ref)

    # 3) feed-forward (W1 -> ReLU -> W2) + residual + LN3
    t = jnp.dot(h2.astype(jnp.bfloat16), w1_ref[...],
                preferred_element_type=jnp.float32) + bff1_ref[...]
    t = jnp.maximum(t, 0.0)
    ff = jnp.dot(t.astype(jnp.bfloat16), w2_ref[...],
                 preferred_element_type=jnp.float32) + bff2_ref[...]
    o_ref[0] = layer_norm(ff + h2, g3_ref, be3_ref).astype(o_ref.dtype)


# ----------------------------------------------------------------------------
# Wrapper: one pallas_call per decoder layer
# ----------------------------------------------------------------------------
def decoder_layer_pallas(x_dec, act_enc, lp, head_num):
    B, S, D = x_dec.shape
    Sk = act_enc.shape[1]
    hid = lp["ff"]["w1"].shape[1]
    assert D % head_num == 0
    scale = 1.0 / math.sqrt(D // head_num)
    tq = _q_tile(S)
    n_q = S // tq

    m1, m2, ff = lp["mha1"], lp["mha2"], lp["ff"]
    const = lambda i, j: (0, 0)

    # Explicit VMEM budget: bf16 weights + f32 activation tiles, x2 for Pallas double buffering.
    w_bytes = 2 * (8 * D * D + 2 * D * hid)
    a_bytes = 4 * D * (2 * tq + S + Sk) + 4 * tq * hid
    vmem_limit = int(min(max(32 << 20, 2 * (w_bytes + a_bytes) + (4 << 20)), 128 << 20))

    return pl.pallas_call(
        partial(_decoder_layer_kernel, head_num=head_num, scale=scale),
        out_shape=jax.ShapeDtypeStruct((B, S, D), jnp.float32),
        grid=(B, n_q),
        in_specs=[
            pl.BlockSpec((1, tq, D), lambda i, j: (i, j, 0)),   # query rows / residual skip
            pl.BlockSpec((1, S, D), lambda i, j: (i, 0, 0)),    # full sequence (self K/V)
            pl.BlockSpec((1, Sk, D), lambda i, j: (i, 0, 0)),   # encoder acts (cross K/V)
            # self-attention block
            pl.BlockSpec((D, D), const),        # wq1 (bf16)
            pl.BlockSpec((1, D), const),        # bq1
            pl.BlockSpec((D, 2 * D), const),    # wkv1 (bf16, wk|wv fused)
            pl.BlockSpec((1, 2 * D), const),    # bkv1
            pl.BlockSpec((D, D), const),        # wo1 (bf16)
            pl.BlockSpec((1, D), const),        # bo1
            pl.BlockSpec((1, D), const),        # ln1 gamma
            pl.BlockSpec((1, D), const),        # ln1 beta
            # cross-attention block
            pl.BlockSpec((D, D), const),        # wq2 (bf16)
            pl.BlockSpec((1, D), const),        # bq2
            pl.BlockSpec((D, 2 * D), const),    # wkv2 (bf16)
            pl.BlockSpec((1, 2 * D), const),    # bkv2
            pl.BlockSpec((D, D), const),        # wo2 (bf16)
            pl.BlockSpec((1, D), const),        # bo2
            pl.BlockSpec((1, D), const),        # ln2 gamma
            pl.BlockSpec((1, D), const),        # ln2 beta
            # feed-forward block
            pl.BlockSpec((D, hid), const),      # w1 (bf16)
            pl.BlockSpec((1, hid), const),      # b1
            pl.BlockSpec((hid, D), const),      # w2 (bf16)
            pl.BlockSpec((1, D), const),        # b2
            pl.BlockSpec((1, D), const),        # ln3 gamma
            pl.BlockSpec((1, D), const),        # ln3 beta
        ],
        out_specs=pl.BlockSpec((1, tq, D), lambda i, j: (i, j, 0)),
        compiler_params=pltpu.CompilerParams(
            dimension_semantics=("parallel", "parallel"),
            vmem_limit_bytes=vmem_limit),
    )(x_dec, x_dec, act_enc,
      m1["wq"], m1["bq"], m1["wkv"], m1["bkv"], m1["wo"], m1["bo"], lp["ln1_g"], lp["ln1_b"],
      m2["wq"], m2["bq"], m2["wkv"], m2["bkv"], m2["wo"], m2["bo"], lp["ln2_g"], lp["ln2_b"],
      ff["w1"], ff["b1"], ff["w2"], ff["b2"], lp["ln3_g"], lp["ln3_b"])


# ----------------------------------------------------------------------------
# Decoder forward: embedding + positional encoding (XLA glue) + fused layers
# ----------------------------------------------------------------------------
def sinusoidal_pe(max_seq_len, model_dim):
    pos = jnp.arange(max_seq_len, dtype=jnp.float32)[:, None]
    i = jnp.arange(0, model_dim, 2, dtype=jnp.float32)
    div = jnp.exp(-jnp.log(10000.0) * i / model_dim)
    pe = jnp.zeros((max_seq_len, model_dim), jnp.float32)
    pe = pe.at[:, 0::2].set(jnp.sin(pos * div))
    pe = pe.at[:, 1::2].set(jnp.cos(pos * div))
    return pe


def decoder_forward(x_dec_tokens, act_enc, params, head_num):
    # TransformerEmbedding: token embedding + sinusoidal positional encoding.
    # TODO(synk): dropout inside TransformerEmbedding (if present) omitted — eval-mode semantics.
    B, S = x_dec_tokens.shape
    emb = jnp.take(params["embedding"], x_dec_tokens, axis=0)       # (B, S, D)
    act = emb + params["pe"][:S][None, :, :]
    for lp in params["layers"]:
        act = decoder_layer_pallas(act, act_enc, lp, head_num)
    return act


# ----------------------------------------------------------------------------
# Deterministic parameter init (mirrors the torch module) + one-time fused packing
# ----------------------------------------------------------------------------
def init_params(key, dict_size, model_dim, max_seq_len, hidden_size, num_layers):
    def dense(k, din, dout):
        kw, _ = jax.random.split(k)
        w = jax.random.normal(kw, (din, dout), jnp.float32) * 0.02
        b = jnp.zeros((dout,), jnp.float32)
        return w, b

    keys = jax.random.split(key, 1 + num_layers)
    params = {
        "embedding": jax.random.normal(keys[0], (dict_size, model_dim), jnp.float32) * 0.02,
        "pe": sinusoidal_pe(max_seq_len, model_dim),
        "layers": [],
    }
    for li in range(num_layers):
        lk = jax.random.split(keys[1 + li], 12)

        def mha_params(ks):
            wq, bq = dense(ks[0], model_dim, model_dim)
            wk, bk = dense(ks[1], model_dim, model_dim)
            wv, bv = dense(ks[2], model_dim, model_dim)
            wo, bo = dense(ks[3], model_dim, model_dim)
            return dict(wq=wq, bq=bq, wk=wk, bk=bk, wv=wv, bv=bv, wo=wo, bo=bo)

        w1, b1 = dense(lk[8], model_dim, hidden_size)
        w2, b2 = dense(lk[9], hidden_size, model_dim)
        params["layers"].append(
            dict(
                mha1=mha_params(lk[0:4]),
                mha2=mha_params(lk[4:8]),
                ff=dict(w1=w1, b1=b1, w2=w2, b2=b2),
                ln1_g=jnp.ones((model_dim,), jnp.float32),
                ln1_b=jnp.zeros((model_dim,), jnp.float32),
                ln2_g=jnp.ones((model_dim,), jnp.float32),
                ln2_b=jnp.zeros((model_dim,), jnp.float32),
                ln3_g=jnp.ones((model_dim,), jnp.float32),
                ln3_b=jnp.zeros((model_dim,), jnp.float32),
            )
        )
    return params


def fuse_params(params, model_dim):
    """One-time (outside jit) packing into the fused-kernel layout:
    wk|wv concatenated into (D, 2D); matmul weights stored bf16 (halves DMA / VMEM, MXU-native);
    biases / LN params kept f32 and reshaped to (1, N) rows."""
    D = model_dim
    bf = jnp.bfloat16

    def fuse_mha(p):
        return dict(
            wq=p["wq"].astype(bf), bq=p["bq"].reshape(1, D),
            wkv=jnp.concatenate([p["wk"], p["wv"]], axis=1).astype(bf),
            bkv=jnp.concatenate([p["bk"], p["bv"]]).reshape(1, 2 * D),
            wo=p["wo"].astype(bf), bo=p["bo"].reshape(1, D),
        )

    layers = []
    for lp in params["layers"]:
        layers.append(dict(
            mha1=fuse_mha(lp["mha1"]),
            mha2=fuse_mha(lp["mha2"]),
            ff=dict(w1=lp["ff"]["w1"].astype(bf), b1=lp["ff"]["b1"].reshape(1, -1),
                    w2=lp["ff"]["w2"].astype(bf), b2=lp["ff"]["b2"].reshape(1, D)),
            ln1_g=lp["ln1_g"].reshape(1, D), ln1_b=lp["ln1_b"].reshape(1, D),
            ln2_g=lp["ln2_g"].reshape(1, D), ln2_b=lp["ln2_b"].reshape(1, D),
            ln3_g=lp["ln3_g"].reshape(1, D), ln3_b=lp["ln3_b"].reshape(1, D),
        ))
    return dict(embedding=params["embedding"], pe=params["pe"], layers=layers)


# ----------------------------------------------------------------------------
# Main
# ----------------------------------------------------------------------------
if __name__ == "__main__":
    DICT_SIZE = 100
    MODEL_DIM = 32
    MAX_SEQ_LEN = 16
    HEAD_NUM = 4
    HIDDEN_SIZE = 64
    NUM_LAYERS = 2
    BATCH = 2
    SEQ = 8

    root = jax.random.PRNGKey(0)
    k_tok, k_enc, k_param = jax.random.split(root, 3)

    x_dec = jax.random.randint(k_tok, (BATCH, SEQ), 0, DICT_SIZE, dtype=jnp.int32)
    act_enc = jax.random.normal(k_enc, (BATCH, SEQ, MODEL_DIM), jnp.float32)

    params = init_params(k_param, DICT_SIZE, MODEL_DIM, MAX_SEQ_LEN, HIDDEN_SIZE, NUM_LAYERS)
    fused = fuse_params(params, MODEL_DIM)

    fwd = jax.jit(partial(decoder_forward, head_num=HEAD_NUM))
    out = fwd(x_dec, act_enc, fused)
    jax.block_until_ready(out)

    assert out.shape == (BATCH, SEQ, MODEL_DIM)
    assert jnp.all(jnp.isfinite(out))
    print("KERNEL_OK")
</pallas_src>

<mosaic_0001>
module attributes {stable_mosaic.version = 11 : i64} {
  func.func @_decoder_layer_kernel(%arg0: i32, %arg1: i32, %arg2: memref<1x8x32xf32, #tpu.memory_space<vmem>>, %arg3: memref<1x8x32xf32, #tpu.memory_space<vmem>>, %arg4: memref<1x8x32xf32, #tpu.memory_space<vmem>>, %arg5: memref<32x32xbf16, #tpu.memory_space<vmem>>, %arg6: memref<1x32xf32, #tpu.memory_space<vmem>>, %arg7: memref<32x64xbf16, #tpu.memory_space<vmem>>, %arg8: memref<1x64xf32, #tpu.memory_space<vmem>>, %arg9: memref<32x32xbf16, #tpu.memory_space<vmem>>, %arg10: memref<1x32xf32, #tpu.memory_space<vmem>>, %arg11: memref<1x32xf32, #tpu.memory_space<vmem>>, %arg12: memref<1x32xf32, #tpu.memory_space<vmem>>, %arg13: memref<32x32xbf16, #tpu.memory_space<vmem>>, %arg14: memref<1x32xf32, #tpu.memory_space<vmem>>, %arg15: memref<32x64xbf16, #tpu.memory_space<vmem>>, %arg16: memref<1x64xf32, #tpu.memory_space<vmem>>, %arg17: memref<32x32xbf16, #tpu.memory_space<vmem>>, %arg18: memref<1x32xf32, #tpu.memory_space<vmem>>, %arg19: memref<1x32xf32, #tpu.memory_space<vmem>>, %arg20: memref<1x32xf32, #tpu.memory_space<vmem>>, %arg21: memref<32x64xbf16, #tpu.memory_space<vmem>>, %arg22: memref<1x64xf32, #tpu.memory_space<vmem>>, %arg23: memref<64x32xbf16, #tpu.memory_space<vmem>>, %arg24: memref<1x32xf32, #tpu.memory_space<vmem>>, %arg25: memref<1x32xf32, #tpu.memory_space<vmem>>, %arg26: memref<1x32xf32, #tpu.memory_space<vmem>>, %arg27: memref<1x8x32xf32, #tpu.memory_space<vmem>>) attributes {dimension_semantics = [#tpu.dimension_semantics<parallel>, #tpu.dimension_semantics<parallel>], iteration_bounds = array<i64: 2, 1>, scalar_prefetch = 0 : i64, scratch_operands = 0 : i64, tpu.core_type = #tpu.core_type<tc>, window_params = [{transform_indices = @transform_0, window_bounds = array<i64: 1, 8, 32>}, {transform_indices = @transform_1, window_bounds = array<i64: 1, 8, 32>}, {transform_indices = @transform_2, window_bounds = array<i64: 1, 8, 32>}, {pipeline_mode = #tpu.pipeline_mode<synchronous>, transform_indices = @transform_3, window_bounds = array<i64: 32, 32>}, {pipeline_mode = #tpu.pipeline_mode<synchronous>, transform_indices = @transform_4, window_bounds = array<i64: 1, 32>}, {pipeline_mode = #tpu.pipeline_mode<synchronous>, transform_indices = @transform_5, window_bounds = array<i64: 32, 64>}, {pipeline_mode = #tpu.pipeline_mode<synchronous>, transform_indices = @transform_6, window_bounds = array<i64: 1, 64>}, {pipeline_mode = #tpu.pipeline_mode<synchronous>, transform_indices = @transform_7, window_bounds = array<i64: 32, 32>}, {pipeline_mode = #tpu.pipeline_mode<synchronous>, transform_indices = @transform_8, window_bounds = array<i64: 1, 32>}, {pipeline_mode = #tpu.pipeline_mode<synchronous>, transform_indices = @transform_9, window_bounds = array<i64: 1, 32>}, {pipeline_mode = #tpu.pipeline_mode<synchronous>, transform_indices = @transform_10, window_bounds = array<i64: 1, 32>}, {pipeline_mode = #tpu.pipeline_mode<synchronous>, transform_indices = @transform_11, window_bounds = array<i64: 32, 32>}, {pipeline_mode = #tpu.pipeline_mode<synchronous>, transform_indices = @transform_12, window_bounds = array<i64: 1, 32>}, {pipeline_mode = #tpu.pipeline_mode<synchronous>, transform_indices = @transform_13, window_bounds = array<i64: 32, 64>}, {pipeline_mode = #tpu.pipeline_mode<synchronous>, transform_indices = @transform_14, window_bounds = array<i64: 1, 64>}, {pipeline_mode = #tpu.pipeline_mode<synchronous>, transform_indices = @transform_15, window_bounds = array<i64: 32, 32>}, {pipeline_mode = #tpu.pipeline_mode<synchronous>, transform_indices = @transform_16, window_bounds = array<i64: 1, 32>}, {pipeline_mode = #tpu.pipeline_mode<synchronous>, transform_indices = @transform_17, window_bounds = array<i64: 1, 32>}, {pipeline_mode = #tpu.pipeline_mode<synchronous>, transform_indices = @transform_18, window_bounds = array<i64: 1, 32>}, {pipeline_mode = #tpu.pipeline_mode<synchronous>, transform_indices = @transform_19, window_bounds = array<i64: 32, 64>}, {pipeline_mode = #tpu.pipeline_mode<synchronous>, transform_indices = @transform_20, window_bounds = array<i64: 1, 64>}, {pipeline_mode = #tpu.pipeline_mode<synchronous>, transform_indices = @transform_21, window_bounds = array<i64: 64, 32>}, {pipeline_mode = #tpu.pipeline_mode<synchronous>, transform_indices = @transform_22, window_bounds = array<i64: 1, 32>}, {pipeline_mode = #tpu.pipeline_mode<synchronous>, transform_indices = @transform_23, window_bounds = array<i64: 1, 32>}, {pipeline_mode = #tpu.pipeline_mode<synchronous>, transform_indices = @transform_24, window_bounds = array<i64: 1, 32>}, {transform_indices = @transform_25, window_bounds = array<i64: 1, 8, 32>}]} {
    %c0 = arith.constant 0 : index
    %c0_0 = arith.constant 0 : index
    %c0_1 = arith.constant 0 : index
    %0 = vector.load %arg2[%c0, %c0_0, %c0_1] : memref<1x8x32xf32, #tpu.memory_space<vmem>>, vector<1x8x32xf32>
    %1 = vector.shape_cast %0 : vector<1x8x32xf32> to vector<8x32xf32>
    %c0_2 = arith.constant 0 : index
    %c0_3 = arith.constant 0 : index
    %c0_4 = arith.constant 0 : index
    %2 = vector.load %arg3[%c0_2, %c0_3, %c0_4] : memref<1x8x32xf32, #tpu.memory_space<vmem>>, vector<1x8x32xf32>
    %3 = vector.shape_cast %2 : vector<1x8x32xf32> to vector<8x32xf32>
    %c0_5 = arith.constant 0 : index
    %c0_6 = arith.constant 0 : index
    %c0_7 = arith.constant 0 : index
    %4 = vector.load %arg4[%c0_5, %c0_6, %c0_7] : memref<1x8x32xf32, #tpu.memory_space<vmem>>, vector<1x8x32xf32>
    %5 = vector.shape_cast %4 : vector<1x8x32xf32> to vector<8x32xf32>
    %6 = arith.truncf %1 : vector<8x32xf32> to vector<8x32xbf16>
    %c0_8 = arith.constant 0 : index
    %c0_9 = arith.constant 0 : index
    %7 = vector.load %arg5[%c0_8, %c0_9] : memref<32x32xbf16, #tpu.memory_space<vmem>>, vector<32x32xbf16>
    %cst = arith.constant dense<0.000000e+00> : vector<8x32xf32>
    %8 = tpu.matmul %6, %7, %cst {dimension_numbers = #tpu.dot_dimension_numbers<[1], [0], [0], [1], [0, 0, 1, 1], [], []>} : vector<8x32xbf16>, vector<32x32xbf16>, vector<8x32xf32> -> vector<8x32xf32>
    %c0_10 = arith.constant 0 : index
    %c0_11 = arith.constant 0 : index
    %9 = vector.load %arg6[%c0_10, %c0_11] : memref<1x32xf32, #tpu.memory_space<vmem>>, vector<1x32xf32>
    %10 = vector.broadcast %9 : vector<1x32xf32> to vector<8x32xf32>
    %11 = arith.addf %8, %10 : vector<8x32xf32>
    %cst_12 = arith.constant 0.353553385 : f32
    %12 = vector.broadcast %cst_12 : f32 to vector<8x32xf32>
    %13 = arith.mulf %11, %12 : vector<8x32xf32>
    %14 = arith.truncf %3 : vector<8x32xf32> to vector<8x32xbf16>
    %c0_13 = arith.constant 0 : index
    %c0_14 = arith.constant 0 : index
    %15 = vector.load %arg7[%c0_13, %c0_14] : memref<32x64xbf16, #tpu.memory_space<vmem>>, vector<32x64xbf16>
    %cst_15 = arith.constant dense<0.000000e+00> : vector<8x64xf32>
    %16 = tpu.matmul %14, %15, %cst_15 {dimension_numbers = #tpu.dot_dimension_numbers<[1], [0], [0], [1], [0, 0, 1, 1], [], []>} : vector<8x32xbf16>, vector<32x64xbf16>, vector<8x64xf32> -> vector<8x64xf32>
    %c0_16 = arith.constant 0 : index
    %c0_17 = arith.constant 0 : index
    %17 = vector.load %arg8[%c0_16, %c0_17] : memref<1x64xf32, #tpu.memory_space<vmem>>, vector<1x64xf32>
    %18 = vector.broadcast %17 : vector<1x64xf32> to vector<8x64xf32>
    %19 = arith.addf %16, %18 : vector<8x64xf32>
    %20 = vector.extract_strided_slice %19 {offsets = [0, 0], sizes = [8, 32], strides = [1, 1]} : vector<8x64xf32> to vector<8x32xf32>
    %21 = vector.extract_strided_slice %19 {offsets = [0, 32], sizes = [8, 32], strides = [1, 1]} : vector<8x64xf32> to vector<8x32xf32>
    %c0_18 = arith.constant 0 : index
    %c0_19 = arith.constant 0 : index
    %22 = vector.load %arg10[%c0_18, %c0_19] : memref<1x32xf32, #tpu.memory_space<vmem>>, vector<1x32xf32>
    %23 = vector.extract_strided_slice %13 {offsets = [0, 0], sizes = [8, 8], strides = [1, 1]} : vector<8x32xf32> to vector<8x8xf32>
    %24 = vector.extract_strided_slice %20 {offsets = [0, 0], sizes = [8, 8], strides = [1, 1]} : vector<8x32xf32> to vector<8x8xf32>
    %cst_20 = arith.constant dense<0.000000e+00> : vector<8x8xf32>
    %25 = tpu.matmul %23, %24, %cst_20 {dimension_numbers = #tpu.dot_dimension_numbers<[1], [1], [0], [0], [0, 0, 1, 0], [], []>} : vector<8x8xf32>, vector<8x8xf32>, vector<8x8xf32> -> vector<8x8xf32>
    %cst_21 = arith.constant dense<0xFF800000> : vector<8xf32>
    %26 = vector.multi_reduction <maximumf>, %25, %cst_21 [1] : vector<8x8xf32> to vector<8xf32>
    %27 = vector.shape_cast %26 : vector<8xf32> to vector<8x1xf32>
    %28 = vector.broadcast %27 : vector<8x1xf32> to vector<8x8xf32>
    %29 = arith.subf %25, %28 : vector<8x8xf32>
    %30 = math.exp %29 : vector<8x8xf32>
    %cst_22 = arith.constant dense<0.000000e+00> : vector<8xf32>
    %31 = vector.multi_reduction <add>, %30, %cst_22 [1] : vector<8x8xf32> to vector<8xf32>
    %32 = vector.shape_cast %31 : vector<8xf32> to vector<8x1xf32>
    %33 = vector.broadcast %32 : vector<8x1xf32> to vector<8x8xf32>
    %34 = arith.divf %30, %33 : vector<8x8xf32>
    %35 = vector.extract_strided_slice %21 {offsets = [0, 0], sizes = [8, 8], strides = [1, 1]} : vector<8x32xf32> to vector<8x8xf32>
    %cst_23 = arith.constant dense<0.000000e+00> : vector<8x8xf32>
    %36 = tpu.matmul %34, %35, %cst_23 {dimension_numbers = #tpu.dot_dimension_numbers<[1], [0], [0], [1], [0, 0, 1, 1], [], []>} : vector<8x8xf32>, vector<8x8xf32>, vector<8x8xf32> -> vector<8x8xf32>
    %37 = arith.truncf %36 : vector<8x8xf32> to vector<8x8xbf16>
    %c0_24 = arith.constant 0 : index
    %c0_25 = arith.constant 0 : index
    %38 = vector.load %arg9[%c0_24, %c0_25] : memref<32x32xbf16, #tpu.memory_space<vmem>>, vector<8x32xbf16>
    %cst_26 = arith.constant dense<0.000000e+00> : vector<8x32xf32>
    %39 = tpu.matmul %37, %38, %cst_26 {dimension_numbers = #tpu.dot_dimension_numbers<[1], [0], [0], [1], [0, 0, 1, 1], [], []>} : vector<8x8xbf16>, vector<8x32xbf16>, vector<8x32xf32> -> vector<8x32xf32>
    %40 = vector.broadcast %22 : vector<1x32xf32> to vector<8x32xf32>
    %41 = arith.addf %40, %39 : vector<8x32xf32>
    %42 = vector.extract_strided_slice %13 {offsets = [0, 8], sizes = [8, 8], strides = [1, 1]} : vector<8x32xf32> to vector<8x8xf32>
    %43 = vector.extract_strided_slice %20 {offsets = [0, 8], sizes = [8, 8], strides = [1, 1]} : vector<8x32xf32> to vector<8x8xf32>
    %cst_27 = arith.constant dense<0.000000e+00> : vector<8x8xf32>
    %44 = tpu.matmul %42, %43, %cst_27 {dimension_numbers = #tpu.dot_dimension_numbers<[1], [1], [0], [0], [0, 0, 1, 0], [], []>} : vector<8x8xf32>, vector<8x8xf32>, vector<8x8xf32> -> vector<8x8xf32>
    %cst_28 = arith.constant dense<0xFF800000> : vector<8xf32>
    %45 = vector.multi_reduction <maximumf>, %44, %cst_28 [1] : vector<8x8xf32> to vector<8xf32>
    %46 = vector.shape_cast %45 : vector<8xf32> to vector<8x1xf32>
    %47 = vector.broadcast %46 : vector<8x1xf32> to vector<8x8xf32>
    %48 = arith.subf %44, %47 : vector<8x8xf32>
    %49 = math.exp %48 : vector<8x8xf32>
    %cst_29 = arith.constant dense<0.000000e+00> : vector<8xf32>
    %50 = vector.multi_reduction <add>, %49, %cst_29 [1] : vector<8x8xf32> to vector<8xf32>
    %51 = vector.shape_cast %50 : vector<8xf32> to vector<8x1xf32>
    %52 = vector.broadcast %51 : vector<8x1xf32> to vector<8x8xf32>
    %53 = arith.divf %49, %52 : vector<8x8xf32>
    %54 = vector.extract_strided_slice %21 {offsets = [0, 8], sizes = [8, 8], strides = [1, 1]} : vector<8x32xf32> to vector<8x8xf32>
    %cst_30 = arith.constant dense<0.000000e+00> : vector<8x8xf32>
    %55 = tpu.matmul %53, %54, %cst_30 {dimension_numbers = #tpu.dot_dimension_numbers<[1], [0], [0], [1], [0, 0, 1, 1], [], []>} : vector<8x8xf32>, vector<8x8xf32>, vector<8x8xf32> -> vector<8x8xf32>
    %56 = arith.truncf %55 : vector<8x8xf32> to vector<8x8xbf16>
    %c8 = arith.constant 8 : index
    %c0_31 = arith.constant 0 : index
    %57 = vector.load %arg9[%c8, %c0_31] : memref<32x32xbf16, #tpu.memory_space<vmem>>, vector<8x32xbf16>
    %cst_32 = arith.constant dense<0.000000e+00> : vector<8x32xf32>
    %58 = tpu.matmul %56, %57, %cst_32 {dimension_numbers = #tpu.dot_dimension_numbers<[1], [0], [0], [1], [0, 0, 1, 1], [], []>} : vector<8x8xbf16>, vector<8x32xbf16>, vector<8x32xf32> -> vector<8x32xf32>
    %59 = arith.addf %41, %58 : vector<8x32xf32>
    %60 = vector.extract_strided_slice %13 {offsets = [0, 16], sizes = [8, 8], strides = [1, 1]} : vector<8x32xf32> to vector<8x8xf32>
    %61 = vector.extract_strided_slice %20 {offsets = [0, 16], sizes = [8, 8], strides = [1, 1]} : vector<8x32xf32> to vector<8x8xf32>
    %cst_33 = arith.constant dense<0.000000e+00> : vector<8x8xf32>
    %62 = tpu.matmul %60, %61, %cst_33 {dimension_numbers = #tpu.dot_dimension_numbers<[1], [1], [0], [0], [0, 0, 1, 0], [], []>} : vector<8x8xf32>, vector<8x8xf32>, vector<8x8xf32> -> vector<8x8xf32>
    %cst_34 = arith.constant dense<0xFF800000> : vector<8xf32>
    %63 = vector.multi_reduction <maximumf>, %62, %cst_34 [1] : vector<8x8xf32> to vector<8xf32>
    %64 = vector.shape_cast %63 : vector<8xf32> to vector<8x1xf32>
    %65 = vector.broadcast %64 : vector<8x1xf32> to vector<8x8xf32>
    %66 = arith.subf %62, %65 : vector<8x8xf32>
    %67 = math.exp %66 : vector<8x8xf32>
    %cst_35 = arith.constant dense<0.000000e+00> : vector<8xf32>
    %68 = vector.multi_reduction <add>, %67, %cst_35 [1] : vector<8x8xf32> to vector<8xf32>
    %69 = vector.shape_cast %68 : vector<8xf32> to vector<8x1xf32>
    %70 = vector.broadcast %69 : vector<8x1xf32> to vector<8x8xf32>
    %71 = arith.divf %67, %70 : vector<8x8xf32>
    %72 = vector.extract_strided_slice %21 {offsets = [0, 16], sizes = [8, 8], strides = [1, 1]} : vector<8x32xf32> to vector<8x8xf32>
    %cst_36 = arith.constant dense<0.000000e+00> : vector<8x8xf32>
    %73 = tpu.matmul %71, %72, %cst_36 {dimension_numbers = #tpu.dot_dimension_numbers<[1], [0], [0], [1], [0, 0, 1, 1], [], []>} : vector<8x8xf32>, vector<8x8xf32>, vector<8x8xf32> -> vector<8x8xf32>
    %74 = arith.truncf %73 : vector<8x8xf32> to vector<8x8xbf16>
    %c16 = arith.constant 16 : index
    %c0_37 = arith.constant 0 : index
    %75 = vector.load %arg9[%c16, %c0_37] : memref<32x32xbf16, #tpu.memory_space<vmem>>, vector<8x32xbf16>
    %cst_38 = arith.constant dense<0.000000e+00> : vector<8x32xf32>
    %76 = tpu.matmul %74, %75, %cst_38 {dimension_numbers = #tpu.dot_dimension_numbers<[1], [0], [0], [1], [0, 0, 1, 1], [], []>} : vector<8x8xbf16>, vector<8x32xbf16>, vector<8x32xf32> -> vector<8x32xf32>
    %77 = arith.addf %59, %76 : vector<8x32xf32>
    %78 = vector.extract_strided_slice %13 {offsets = [0, 24], sizes = [8, 8], strides = [1, 1]} : vector<8x32xf32> to vector<8x8xf32>
    %79 = vector.extract_strided_slice %20 {offsets = [0, 24], sizes = [8, 8], strides = [1, 1]} : vector<8x32xf32> to vector<8x8xf32>
    %cst_39 = arith.constant dense<0.000000e+00> : vector<8x8xf32>
    %80 = tpu.matmul %78, %79, %cst_39 {dimension_numbers = #tpu.dot_dimension_numbers<[1], [1], [0], [0], [0, 0, 1, 0], [], []>} : vector<8x8xf32>, vector<8x8xf32>, vector<8x8xf32> -> vector<8x8xf32>
    %cst_40 = arith.constant dense<0xFF800000> : vector<8xf32>
    %81 = vector.multi_reduction <maximumf>, %80, %cst_40 [1] : vector<8x8xf32> to vector<8xf32>
    %82 = vector.shape_cast %81 : vector<8xf32> to vector<8x1xf32>
    %83 = vector.broadcast %82 : vector<8x1xf32> to vector<8x8xf32>
    %84 = arith.subf %80, %83 : vector<8x8xf32>
    %85 = math.exp %84 : vector<8x8xf32>
    %cst_41 = arith.constant dense<0.000000e+00> : vector<8xf32>
    %86 = vector.multi_reduction <add>, %85, %cst_41 [1] : vector<8x8xf32> to vector<8xf32>
    %87 = vector.shape_cast %86 : vector<8xf32> to vector<8x1xf32>
    %88 = vector.broadcast %87 : vector<8x1xf32> to vector<8x8xf32>
    %89 = arith.divf %85, %88 : vector<8x8xf32>
    %90 = vector.extract_strided_slice %21 {offsets = [0, 24], sizes = [8, 8], strides = [1, 1]} : vector<8x32xf32> to vector<8x8xf32>
    %cst_42 = arith.constant dense<0.000000e+00> : vector<8x8xf32>
    %91 = tpu.matmul %89, %90, %cst_42 {dimension_numbers = #tpu.dot_dimension_numbers<[1], [0], [0], [1], [0, 0, 1, 1], [], []>} : vector<8x8xf32>, vector<8x8xf32>, vector<8x8xf32> -> vector<8x8xf32>
    %92 = arith.truncf %91 : vector<8x8xf32> to vector<8x8xbf16>
    %c24 = arith.constant 24 : index
    %c0_43 = arith.constant 0 : index
    %93 = vector.load %arg9[%c24, %c0_43] : memref<32x32xbf16, #tpu.memory_space<vmem>>, vector<8x32xbf16>
    %cst_44 = arith.constant dense<0.000000e+00> : vector<8x32xf32>
    %94 = tpu.matmul %92, %93, %cst_44 {dimension_numbers = #tpu.dot_dimension_numbers<[1], [0], [0], [1], [0, 0, 1, 1], [], []>} : vector<8x8xbf16>, vector<8x32xbf16>, vector<8x32xf32> -> vector<8x32xf32>
    %95 = arith.addf %77, %94 : vector<8x32xf32>
    %96 = arith.addf %95, %1 : vector<8x32xf32>
    %cst_45 = arith.constant dense<0.000000e+00> : vector<8xf32>
    %97 = vector.multi_reduction <add>, %96, %cst_45 [1] : vector<8x32xf32> to vector<8xf32>
    %98 = vector.shape_cast %97 : vector<8xf32> to vector<8x1xf32>
    %cst_46 = arith.constant 3.200000e+01 : f32
    %99 = vector.broadcast %cst_46 : f32 to vector<8x1xf32>
    %100 = arith.divf %98, %99 : vector<8x1xf32>
    %101 = vector.broadcast %100 : vector<8x1xf32> to vector<8x32xf32>
    %102 = arith.subf %96, %101 : vector<8x32xf32>
    %103 = arith.mulf %102, %102 : vector<8x32xf32>
    %cst_47 = arith.constant dense<0.000000e+00> : vector<8xf32>
    %104 = vector.multi_reduction <add>, %103, %cst_47 [1] : vector<8x32xf32> to vector<8xf32>
    %105 = vector.shape_cast %104 : vector<8xf32> to vector<8x1xf32>
    %cst_48 = arith.constant 3.200000e+01 : f32
    %106 = vector.broadcast %cst_48 : f32 to vector<8x1xf32>
    %107 = arith.divf %105, %106 : vector<8x1xf32>
    %108 = vector.broadcast %100 : vector<8x1xf32> to vector<8x32xf32>
    %109 = arith.subf %96, %108 : vector<8x32xf32>
    %cst_49 = arith.constant 9.99999974E-6 : f32
    %110 = vector.broadcast %cst_49 : f32 to vector<8x1xf32>
    %111 = arith.addf %107, %110 : vector<8x1xf32>
    %112 = math.rsqrt %111 : vector<8x1xf32>
    %113 = vector.broadcast %112 : vector<8x1xf32> to vector<8x32xf32>
    %114 = arith.mulf %109, %113 : vector<8x32xf32>
    %c0_50 = arith.constant 0 : index
    %c0_51 = arith.constant 0 : index
    %115 = vector.load %arg11[%c0_50, %c0_51] : memref<1x32xf32, #tpu.memory_space<vmem>>, vector<1x32xf32>
    %116 = vector.broadcast %115 : vector<1x32xf32> to vector<8x32xf32>
    %117 = arith.mulf %114, %116 : vector<8x32xf32>
    %c0_52 = arith.constant 0 : index
    %c0_53 = arith.constant 0 : index
    %118 = vector.load %arg12[%c0_52, %c0_53] : memref<1x32xf32, #tpu.memory_space<vmem>>, vector<1x32xf32>
    %119 = vector.broadcast %118 : vector<1x32xf32> to vector<8x32xf32>
    %120 = arith.addf %117, %119 : vector<8x32xf32>
    %121 = arith.truncf %120 : vector<8x32xf32> to vector<8x32xbf16>
    %c0_54 = arith.constant 0 : index
    %c0_55 = arith.constant 0 : index
    %122 = vector.load %arg13[%c0_54, %c0_55] : memref<32x32xbf16, #tpu.memory_space<vmem>>, vector<32x32xbf16>
    %cst_56 = arith.constant dense<0.000000e+00> : vector<8x32xf32>
    %123 = tpu.matmul %121, %122, %cst_56 {dimension_numbers = #tpu.dot_dimension_numbers<[1], [0], [0], [1], [0, 0, 1, 1], [], []>} : vector<8x32xbf16>, vector<32x32xbf16>, vector<8x32xf32> -> vector<8x32xf32>
    %c0_57 = arith.constant 0 : index
    %c0_58 = arith.constant 0 : index
    %124 = vector.load %arg14[%c0_57, %c0_58] : memref<1x32xf32, #tpu.memory_space<vmem>>, vector<1x32xf32>
    %125 = vector.broadcast %124 : vector<1x32xf32> to vector<8x32xf32>
    %126 = arith.addf %123, %125 : vector<8x32xf32>
    %cst_59 = arith.constant 0.353553385 : f32
    %127 = vector.broadcast %cst_59 : f32 to vector<8x32xf32>
    %128 = arith.mulf %126, %127 : vector<8x32xf32>
    %129 = arith.truncf %5 : vector<8x32xf32> to vector<8x32xbf16>
    %c0_60 = arith.constant 0 : index
    %c0_61 = arith.constant 0 : index
    %130 = vector.load %arg15[%c0_60, %c0_61] : memref<32x64xbf16, #tpu.memory_space<vmem>>, vector<32x64xbf16>
    %cst_62 = arith.constant dense<0.000000e+00> : vector<8x64xf32>
    %131 = tpu.matmul %129, %130, %cst_62 {dimension_numbers = #tpu.dot_dimension_numbers<[1], [0], [0], [1], [0, 0, 1, 1], [], []>} : vector<8x32xbf16>, vector<32x64xbf16>, vector<8x64xf32> -> vector<8x64xf32>
    %c0_63 = arith.constant 0 : index
    %c0_64 = arith.constant 0 : index
    %132 = vector.load %arg16[%c0_63, %c0_64] : memref<1x64xf32, #tpu.memory_space<vmem>>, vector<1x64xf32>
    %133 = vector.broadcast %132 : vector<1x64xf32> to vector<8x64xf32>
    %134 = arith.addf %131, %133 : vector<8x64xf32>
    %135 = vector.extract_strided_slice %134 {offsets = [0, 0], sizes = [8, 32], strides = [1, 1]} : vector<8x64xf32> to vector<8x32xf32>
    %136 = vector.extract_strided_slice %134 {offsets = [0, 32], sizes = [8, 32], strides = [1, 1]} : vector<8x64xf32> to vector<8x32xf32>
    %c0_65 = arith.constant 0 : index
    %c0_66 = arith.constant 0 : index
    %137 = vector.load %arg18[%c0_65, %c0_66] : memref<1x32xf32, #tpu.memory_space<vmem>>, vector<1x32xf32>
    %138 = vector.extract_strided_slice %128 {offsets = [0, 0], sizes = [8, 8], strides = [1, 1]} : vector<8x32xf32> to vector<8x8xf32>
    %139 = vector.extract_strided_slice %135 {offsets = [0, 0], sizes = [8, 8], strides = [1, 1]} : vector<8x32xf32> to vector<8x8xf32>
    %cst_67 = arith.constant dense<0.000000e+00> : vector<8x8xf32>
    %140 = tpu.matmul %138, %139, %cst_67 {dimension_numbers = #tpu.dot_dimension_numbers<[1], [1], [0], [0], [0, 0, 1, 0], [], []>} : vector<8x8xf32>, vector<8x8xf32>, vector<8x8xf32> -> vector<8x8xf32>
    %cst_68 = arith.constant dense<0xFF800000> : vector<8xf32>
    %141 = vector.multi_reduction <maximumf>, %140, %cst_68 [1] : vector<8x8xf32> to vector<8xf32>
    %142 = vector.shape_cast %141 : vector<8xf32> to vector<8x1xf32>
    %143 = vector.broadcast %142 : vector<8x1xf32> to vector<8x8xf32>
    %144 = arith.subf %140, %143 : vector<8x8xf32>
    %145 = math.exp %144 : vector<8x8xf32>
    %cst_69 = arith.constant dense<0.000000e+00> : vector<8xf32>
    %146 = vector.multi_reduction <add>, %145, %cst_69 [1] : vector<8x8xf32> to vector<8xf32>
    %147 = vector.shape_cast %146 : vector<8xf32> to vector<8x1xf32>
    %148 = vector.broadcast %147 : vector<8x1xf32> to vector<8x8xf32>
    %149 = arith.divf %145, %148 : vector<8x8xf32>
    %150 = vector.extract_strided_slice %136 {offsets = [0, 0], sizes = [8, 8], strides = [1, 1]} : vector<8x32xf32> to vector<8x8xf32>
    %cst_70 = arith.constant dense<0.000000e+00> : vector<8x8xf32>
    %151 = tpu.matmul %149, %150, %cst_70 {dimension_numbers = #tpu.dot_dimension_numbers<[1], [0], [0], [1], [0, 0, 1, 1], [], []>} : vector<8x8xf32>, vector<8x8xf32>, vector<8x8xf32> -> vector<8x8xf32>
    %152 = arith.truncf %151 : vector<8x8xf32> to vector<8x8xbf16>
    %c0_71 = arith.constant 0 : index
    %c0_72 = arith.constant 0 : index
    %153 = vector.load %arg17[%c0_71, %c0_72] : memref<32x32xbf16, #tpu.memory_space<vmem>>, vector<8x32xbf16>
    %cst_73 = arith.constant dense<0.000000e+00> : vector<8x32xf32>
    %154 = tpu.matmul %152, %153, %cst_73 {dimension_numbers = #tpu.dot_dimension_numbers<[1], [0], [0], [1], [0, 0, 1, 1], [], []>} : vector<8x8xbf16>, vector<8x32xbf16>, vector<8x32xf32> -> vector<8x32xf32>
    %155 = vector.broadcast %137 : vector<1x32xf32> to vector<8x32xf32>
    %156 = arith.addf %155, %154 : vector<8x32xf32>
    %157 = vector.extract_strided_slice %128 {offsets = [0, 8], sizes = [8, 8], strides = [1, 1]} : vector<8x32xf32> to vector<8x8xf32>
    %158 = vector.extract_strided_slice %135 {offsets = [0, 8], sizes = [8, 8], strides = [1, 1]} : vector<8x32xf32> to vector<8x8xf32>
    %cst_74 = arith.constant dense<0.000000e+00> : vector<8x8xf32>
    %159 = tpu.matmul %157, %158, %cst_74 {dimension_numbers = #tpu.dot_dimension_numbers<[1], [1], [0], [0], [0, 0, 1, 0], [], []>} : vector<8x8xf32>, vector<8x8xf32>, vector<8x8xf32> -> vector<8x8xf32>
    %cst_75 = arith.constant dense<0xFF800000> : vector<8xf32>
    %160 = vector.multi_reduction <maximumf>, %159, %cst_75 [1] : vector<8x8xf32> to vector<8xf32>
    %161 = vector.shape_cast %160 : vector<8xf32> to vector<8x1xf32>
    %162 = vector.broadcast %161 : vector<8x1xf32> to vector<8x8xf32>
    %163 = arith.subf %159, %162 : vector<8x8xf32>
    %164 = math.exp %163 : vector<8x8xf32>
    %cst_76 = arith.constant dense<0.000000e+00> : vector<8xf32>
    %165 = vector.multi_reduction <add>, %164, %cst_76 [1] : vector<8x8xf32> to vector<8xf32>
    %166 = vector.shape_cast %165 : vector<8xf32> to vector<8x1xf32>
    %167 = vector.broadcast %166 : vector<8x1xf32> to vector<8x8xf32>
    %168 = arith.divf %164, %167 : vector<8x8xf32>
    %169 = vector.extract_strided_slice %136 {offsets = [0, 8], sizes = [8, 8], strides = [1, 1]} : vector<8x32xf32> to vector<8x8xf32>
    %cst_77 = arith.constant dense<0.000000e+00> : vector<8x8xf32>
    %170 = tpu.matmul %168, %169, %cst_77 {dimension_numbers = #tpu.dot_dimension_numbers<[1], [0], [0], [1], [0, 0, 1, 1], [], []>} : vector<8x8xf32>, vector<8x8xf32>, vector<8x8xf32> -> vector<8x8xf32>
    %171 = arith.truncf %170 : vector<8x8xf32> to vector<8x8xbf16>
    %c8_78 = arith.constant 8 : index
    %c0_79 = arith.constant 0 : index
    %172 = vector.load %arg17[%c8_78, %c0_79] : memref<32x32xbf16, #tpu.memory_space<vmem>>, vector<8x32xbf16>
    %cst_80 = arith.constant dense<0.000000e+00> : vector<8x32xf32>
    %173 = tpu.matmul %171, %172, %cst_80 {dimension_numbers = #tpu.dot_dimension_numbers<[1], [0], [0], [1], [0, 0, 1, 1], [], []>} : vector<8x8xbf16>, vector<8x32xbf16>, vector<8x32xf32> -> vector<8x32xf32>
    %174 = arith.addf %156, %173 : vector<8x32xf32>
    %175 = vector.extract_strided_slice %128 {offsets = [0, 16], sizes = [8, 8], strides = [1, 1]} : vector<8x32xf32> to vector<8x8xf32>
    %176 = vector.extract_strided_slice %135 {offsets = [0, 16], sizes = [8, 8], strides = [1, 1]} : vector<8x32xf32> to vector<8x8xf32>
    %cst_81 = arith.constant dense<0.000000e+00> : vector<8x8xf32>
    %177 = tpu.matmul %175, %176, %cst_81 {dimension_numbers = #tpu.dot_dimension_numbers<[1], [1], [0], [0], [0, 0, 1, 0], [], []>} : vector<8x8xf32>, vector<8x8xf32>, vector<8x8xf32> -> vector<8x8xf32>
    %cst_82 = arith.constant dense<0xFF800000> : vector<8xf32>
    %178 = vector.multi_reduction <maximumf>, %177, %cst_82 [1] : vector<8x8xf32> to vector<8xf32>
    %179 = vector.shape_cast %178 : vector<8xf32> to vector<8x1xf32>
    %180 = vector.broadcast %179 : vector<8x1xf32> to vector<8x8xf32>
    %181 = arith.subf %177, %180 : vector<8x8xf32>
    %182 = math.exp %181 : vector<8x8xf32>
    %cst_83 = arith.constant dense<0.000000e+00> : vector<8xf32>
    %183 = vector.multi_reduction <add>, %182, %cst_83 [1] : vector<8x8xf32> to vector<8xf32>
    %184 = vector.shape_cast %183 : vector<8xf32> to vector<8x1xf32>
    %185 = vector.broadcast %184 : vector<8x1xf32> to vector<8x8xf32>
    %186 = arith.divf %182, %185 : vector<8x8xf32>
    %187 = vector.extract_strided_slice %136 {offsets = [0, 16], sizes = [8, 8], strides = [1, 1]} : vector<8x32xf32> to vector<8x8xf32>
    %cst_84 = arith.constant dense<0.000000e+00> : vector<8x8xf32>
    %188 = tpu.matmul %186, %187, %cst_84 {dimension_numbers = #tpu.dot_dimension_numbers<[1], [0], [0], [1], [0, 0, 1, 1], [], []>} : vector<8x8xf32>, vector<8x8xf32>, vector<8x8xf32> -> vector<8x8xf32>
    %189 = arith.truncf %188 : vector<8x8xf32> to vector<8x8xbf16>
    %c16_85 = arith.constant 16 : index
    %c0_86 = arith.constant 0 : index
    %190 = vector.load %arg17[%c16_85, %c0_86] : memref<32x32xbf16, #tpu.memory_space<vmem>>, vector<8x32xbf16>
    %cst_87 = arith.constant dense<0.000000e+00> : vector<8x32xf32>
    %191 = tpu.matmul %189, %190, %cst_87 {dimension_numbers = #tpu.dot_dimension_numbers<[1], [0], [0], [1], [0, 0, 1, 1], [], []>} : vector<8x8xbf16>, vector<8x32xbf16>, vector<8x32xf32> -> vector<8x32xf32>
    %192 = arith.addf %174, %191 : vector<8x32xf32>
    %193 = vector.extract_strided_slice %128 {offsets = [0, 24], sizes = [8, 8], strides = [1, 1]} : vector<8x32xf32> to vector<8x8xf32>
    %194 = vector.extract_strided_slice %135 {offsets = [0, 24], sizes = [8, 8], strides = [1, 1]} : vector<8x32xf32> to vector<8x8xf32>
    %cst_88 = arith.constant dense<0.000000e+00> : vector<8x8xf32>
    %195 = tpu.matmul %193, %194, %cst_88 {dimension_numbers = #tpu.dot_dimension_numbers<[1], [1], [0], [0], [0, 0, 1, 0], [], []>} : vector<8x8xf32>, vector<8x8xf32>, vector<8x8xf32> -> vector<8x8xf32>
    %cst_89 = arith.constant dense<0xFF800000> : vector<8xf32>
    %196 = vector.multi_reduction <maximumf>, %195, %cst_89 [1] : vector<8x8xf32> to vector<8xf32>
    %197 = vector.shape_cast %196 : vector<8xf32> to vector<8x1xf32>
    %198 = vector.broadcast %197 : vector<8x1xf32> to vector<8x8xf32>
    %199 = arith.subf %195, %198 : vector<8x8xf32>
    %200 = math.exp %199 : vector<8x8xf32>
    %cst_90 = arith.constant dense<0.000000e+00> : vector<8xf32>
    %201 = vector.multi_reduction <add>, %200, %cst_90 [1] : vector<8x8xf32> to vector<8xf32>
    %202 = vector.shape_cast %201 : vector<8xf32> to vector<8x1xf32>
    %203 = vector.broadcast %202 : vector<8x1xf32> to vector<8x8xf32>
    %204 = arith.divf %200, %203 : vector<8x8xf32>
    %205 = vector.extract_strided_slice %136 {offsets = [0, 24], sizes = [8, 8], strides = [1, 1]} : vector<8x32xf32> to vector<8x8xf32>
    %cst_91 = arith.constant dense<0.000000e+00> : vector<8x8xf32>
    %206 = tpu.matmul %204, %205, %cst_91 {dimension_numbers = #tpu.dot_dimension_numbers<[1], [0], [0], [1], [0, 0, 1, 1], [], []>} : vector<8x8xf32>, vector<8x8xf32>, vector<8x8xf32> -> vector<8x8xf32>
    %207 = arith.truncf %206 : vector<8x8xf32> to vector<8x8xbf16>
    %c24_92 = arith.constant 24 : index
    %c0_93 = arith.constant 0 : index
    %208 = vector.load %arg17[%c24_92, %c0_93] : memref<32x32xbf16, #tpu.memory_space<vmem>>, vector<8x32xbf16>
    %cst_94 = arith.constant dense<0.000000e+00> : vector<8x32xf32>
    %209 = tpu.matmul %207, %208, %cst_94 {dimension_numbers = #tpu.dot_dimension_numbers<[1], [0], [0], [1], [0, 0, 1, 1], [], []>} : vector<8x8xbf16>, vector<8x32xbf16>, vector<8x32xf32> -> vector<8x32xf32>
    %210 = arith.addf %192, %209 : vector<8x32xf32>
    %211 = arith.addf %210, %120 : vector<8x32xf32>
    %cst_95 = arith.constant dense<0.000000e+00> : vector<8xf32>
    %212 = vector.multi_reduction <add>, %211, %cst_95 [1] : vector<8x32xf32> to vector<8xf32>
    %213 = vector.shape_cast %212 : vector<8xf32> to vector<8x1xf32>
    %cst_96 = arith.constant 3.200000e+01 : f32
    %214 = vector.broadcast %cst_96 : f32 to vector<8x1xf32>
    %215 = arith.divf %213, %214 : vector<8x1xf32>
    %216 = vector.broadcast %215 : vector<8x1xf32> to vector<8x32xf32>
    %217 = arith.subf %211, %216 : vector<8x32xf32>
    %218 = arith.mulf %217, %217 : vector<8x32xf32>
    %cst_97 = arith.constant dense<0.000000e+00> : vector<8xf32>
    %219 = vector.multi_reduction <add>, %218, %cst_97 [1] : vector<8x32xf32> to vector<8xf32>
    %220 = vector.shape_cast %219 : vector<8xf32> to vector<8x1xf32>
    %cst_98 = arith.constant 3.200000e+01 : f32
    %221 = vector.broadcast %cst_98 : f32 to vector<8x1xf32>
    %222 = arith.divf %220, %221 : vector<8x1xf32>
    %223 = vector.broadcast %215 : vector<8x1xf32> to vector<8x32xf32>
    %224 = arith.subf %211, %223 : vector<8x32xf32>
    %cst_99 = arith.constant 9.99999974E-6 : f32
    %225 = vector.broadcast %cst_99 : f32 to vector<8x1xf32>
    %226 = arith.addf %222, %225 : vector<8x1xf32>
    %227 = math.rsqrt %226 : vector<8x1xf32>
    %228 = vector.broadcast %227 : vector<8x1xf32> to vector<8x32xf32>
    %229 = arith.mulf %224, %228 : vector<8x32xf32>
    %c0_100 = arith.constant 0 : index
    %c0_101 = arith.constant 0 : index
    %230 = vector.load %arg19[%c0_100, %c0_101] : memref<1x32xf32, #tpu.memory_space<vmem>>, vector<1x32xf32>
    %231 = vector.broadcast %230 : vector<1x32xf32> to vector<8x32xf32>
    %232 = arith.mulf %229, %231 : vector<8x32xf32>
    %c0_102 = arith.constant 0 : index
    %c0_103 = arith.constant 0 : index
    %233 = vector.load %arg20[%c0_102, %c0_103] : memref<1x32xf32, #tpu.memory_space<vmem>>, vector<1x32xf32>
    %234 = vector.broadcast %233 : vector<1x32xf32> to vector<8x32xf32>
    %235 = arith.addf %232, %234 : vector<8x32xf32>
    %236 = arith.truncf %235 : vector<8x32xf32> to vector<8x32xbf16>
    %c0_104 = arith.constant 0 : index
    %c0_105 = arith.constant 0 : index
    %237 = vector.load %arg21[%c0_104, %c0_105] : memref<32x64xbf16, #tpu.memory_space<vmem>>, vector<32x64xbf16>
    %cst_106 = arith.constant dense<0.000000e+00> : vector<8x64xf32>
    %238 = tpu.matmul %236, %237, %cst_106 {dimension_numbers = #tpu.dot_dimension_numbers<[1], [0], [0], [1], [0, 0, 1, 1], [], []>} : vector<8x32xbf16>, vector<32x64xbf16>, vector<8x64xf32> -> vector<8x64xf32>
    %c0_107 = arith.constant 0 : index
    %c0_108 = arith.constant 0 : index
    %239 = vector.load %arg22[%c0_107, %c0_108] : memref<1x64xf32, #tpu.memory_space<vmem>>, vector<1x64xf32>
    %240 = vector.broadcast %239 : vector<1x64xf32> to vector<8x64xf32>
    %241 = arith.addf %238, %240 : vector<8x64xf32>
    %cst_109 = arith.constant 0.000000e+00 : f32
    %242 = vector.broadcast %cst_109 : f32 to vector<8x64xf32>
    %243 = arith.maximumf %241, %242 : vector<8x64xf32>
    %244 = arith.truncf %243 : vector<8x64xf32> to vector<8x64xbf16>
    %c0_110 = arith.constant 0 : index
    %c0_111 = arith.constant 0 : index
    %245 = vector.load %arg23[%c0_110, %c0_111] : memref<64x32xbf16, #tpu.memory_space<vmem>>, vector<64x32xbf16>
    %cst_112 = arith.constant dense<0.000000e+00> : vector<8x32xf32>
    %246 = tpu.matmul %244, %245, %cst_112 {dimension_numbers = #tpu.dot_dimension_numbers<[1], [0], [0], [1], [0, 0, 1, 1], [], []>} : vector<8x64xbf16>, vector<64x32xbf16>, vector<8x32xf32> -> vector<8x32xf32>
    %c0_113 = arith.constant 0 : index
    %c0_114 = arith.constant 0 : index
    %247 = vector.load %arg24[%c0_113, %c0_114] : memref<1x32xf32, #tpu.memory_space<vmem>>, vector<1x32xf32>
    %248 = vector.broadcast %247 : vector<1x32xf32> to vector<8x32xf32>
    %249 = arith.addf %246, %248 : vector<8x32xf32>
    %250 = arith.addf %249, %235 : vector<8x32xf32>
    %cst_115 = arith.constant dense<0.000000e+00> : vector<8xf32>
    %251 = vector.multi_reduction <add>, %250, %cst_115 [1] : vector<8x32xf32> to vector<8xf32>
    %252 = vector.shape_cast %251 : vector<8xf32> to vector<8x1xf32>
    %cst_116 = arith.constant 3.200000e+01 : f32
    %253 = vector.broadcast %cst_116 : f32 to vector<8x1xf32>
    %254 = arith.divf %252, %253 : vector<8x1xf32>
    %255 = vector.broadcast %254 : vector<8x1xf32> to vector<8x32xf32>
    %256 = arith.subf %250, %255 : vector<8x32xf32>
    %257 = arith.mulf %256, %256 : vector<8x32xf32>
    %cst_117 = arith.constant dense<0.000000e+00> : vector<8xf32>
    %258 = vector.multi_reduction <add>, %257, %cst_117 [1] : vector<8x32xf32> to vector<8xf32>
    %259 = vector.shape_cast %258 : vector<8xf32> to vector<8x1xf32>
    %cst_118 = arith.constant 3.200000e+01 : f32
    %260 = vector.broadcast %cst_118 : f32 to vector<8x1xf32>
    %261 = arith.divf %259, %260 : vector<8x1xf32>
    %262 = vector.broadcast %254 : vector<8x1xf32> to vector<8x32xf32>
    %263 = arith.subf %250, %262 : vector<8x32xf32>
    %cst_119 = arith.constant 9.99999974E-6 : f32
    %264 = vector.broadcast %cst_119 : f32 to vector<8x1xf32>
    %265 = arith.addf %261, %264 : vector<8x1xf32>
    %266 = math.rsqrt %265 : vector<8x1xf32>
    %267 = vector.broadcast %266 : vector<8x1xf32> to vector<8x32xf32>
    %268 = arith.mulf %263, %267 : vector<8x32xf32>
    %c0_120 = arith.constant 0 : index
    %c0_121 = arith.constant 0 : index
    %269 = vector.load %arg25[%c0_120, %c0_121] : memref<1x32xf32, #tpu.memory_space<vmem>>, vector<1x32xf32>
    %270 = vector.broadcast %269 : vector<1x32xf32> to vector<8x32xf32>
    %271 = arith.mulf %268, %270 : vector<8x32xf32>
    %c0_122 = arith.constant 0 : index
    %c0_123 = arith.constant 0 : index
    %272 = vector.load %arg26[%c0_122, %c0_123] : memref<1x32xf32, #tpu.memory_space<vmem>>, vector<1x32xf32>
    %273 = vector.broadcast %272 : vector<1x32xf32> to vector<8x32xf32>
    %274 = arith.addf %271, %273 : vector<8x32xf32>
    %c0_124 = arith.constant 0 : index
    %c0_125 = arith.constant 0 : index
    %c0_126 = arith.constant 0 : index
    %275 = vector.load %arg27[%c0_124, %c0_125, %c0_126] : memref<1x8x32xf32, #tpu.memory_space<vmem>>, vector<1x8x32xf32>
    %276 = vector.shape_cast %275 : vector<1x8x32xf32> to vector<8x32xf32>
    %277 = vector.shape_cast %274 : vector<8x32xf32> to vector<1x8x32xf32>
    tpu.vector_store %arg27[%c0_124, %c0_125, %c0_126], %277 {strides = array<i32>} : memref<1x8x32xf32, #tpu.memory_space<vmem>>, vector<1x8x32xf32>,
    return
  }
  func.func @transform_0(%arg0: i32, %arg1: i32) -> (i32, i32, i32) {
    %c0_i32 = arith.constant 0 : i32
    %c0_i32_0 = arith.constant 0 : i32
    return %arg0, %arg1, %c0_i32 : i32, i32, i32
  }
  func.func @transform_1(%arg0: i32, %arg1: i32) -> (i32, i32, i32) {
    %c0_i32 = arith.constant 0 : i32
    %c0_i32_0 = arith.constant 0 : i32
    %c0_i32_1 = arith.constant 0 : i32
    return %arg0, %c0_i32, %c0_i32_0 : i32, i32, i32
  }
  func.func @transform_2(%arg0: i32, %arg1: i32) -> (i32, i32, i32) {
    %c0_i32 = arith.constant 0 : i32
    %c0_i32_0 = arith.constant 0 : i32
    %c0_i32_1 = arith.constant 0 : i32
    return %arg0, %c0_i32, %c0_i32_0 : i32, i32, i32
  }
  func.func @transform_3(%arg0: i32, %arg1: i32) -> (i32, i32) {
    %c0_i32 = arith.constant 0 : i32
    %c0_i32_0 = arith.constant 0 : i32
    %c0_i32_1 = arith.constant 0 : i32
    return %c0_i32, %c0_i32_0 : i32, i32
  }
  func.func @transform_4(%arg0: i32, %arg1: i32) -> (i32, i32) {
    %c0_i32 = arith.constant 0 : i32
    %c0_i32_0 = arith.constant 0 : i32
    %c0_i32_1 = arith.constant 0 : i32
    return %c0_i32, %c0_i32_0 : i32, i32
  }
  func.func @transform_5(%arg0: i32, %arg1: i32) -> (i32, i32) {
    %c0_i32 = arith.constant 0 : i32
    %c0_i32_0 = arith.constant 0 : i32
    %c0_i32_1 = arith.constant 0 : i32
    return %c0_i32, %c0_i32_0 : i32, i32
  }
  func.func @transform_6(%arg0: i32, %arg1: i32) -> (i32, i32) {
    %c0_i32 = arith.constant 0 : i32
    %c0_i32_0 = arith.constant 0 : i32
    %c0_i32_1 = arith.constant 0 : i32
    return %c0_i32, %c0_i32_0 : i32, i32
  }
  func.func @transform_7(%arg0: i32, %arg1: i32) -> (i32, i32) {
    %c0_i32 = arith.constant 0 : i32
    %c0_i32_0 = arith.constant 0 : i32
    %c0_i32_1 = arith.constant 0 : i32
    return %c0_i32, %c0_i32_0 : i32, i32
  }
  func.func @transform_8(%arg0: i32, %arg1: i32) -> (i32, i32) {
    %c0_i32 = arith.constant 0 : i32
    %c0_i32_0 = arith.constant 0 : i32
    %c0_i32_1 = arith.constant 0 : i32
    return %c0_i32, %c0_i32_0 : i32, i32
  }
  func.func @transform_9(%arg0: i32, %arg1: i32) -> (i32, i32) {
    %c0_i32 = arith.constant 0 : i32
    %c0_i32_0 = arith.constant 0 : i32
    %c0_i32_1 = arith.constant 0 : i32
    return %c0_i32, %c0_i32_0 : i32, i32
  }
  func.func @transform_10(%arg0: i32, %arg1: i32) -> (i32, i32) {
    %c0_i32 = arith.constant 0 : i32
    %c0_i32_0 = arith.constant 0 : i32
    %c0_i32_1 = arith.constant 0 : i32
    return %c0_i32, %c0_i32_0 : i32, i32
  }
  func.func @transform_11(%arg0: i32, %arg1: i32) -> (i32, i32) {
    %c0_i32 = arith.constant 0 : i32
    %c0_i32_0 = arith.constant 0 : i32
    %c0_i32_1 = arith.constant 0 : i32
    return %c0_i32, %c0_i32_0 : i32, i32
  }
  func.func @transform_12(%arg0: i32, %arg1: i32) -> (i32, i32) {
    %c0_i32 = arith.constant 0 : i32
    %c0_i32_0 = arith.constant 0 : i32
    %c0_i32_1 = arith.constant 0 : i32
    return %c0_i32, %c0_i32_0 : i32, i32
  }
  func.func @transform_13(%arg0: i32, %arg1: i32) -> (i32, i32) {
    %c0_i32 = arith.constant 0 : i32
    %c0_i32_0 = arith.constant 0 : i32
    %c0_i32_1 = arith.constant 0 : i32
    return %c0_i32, %c0_i32_0 : i32, i32
  }
  func.func @transform_14(%arg0: i32, %arg1: i32) -> (i32, i32) {
    %c0_i32 = arith.constant 0 : i32
    %c0_i32_0 = arith.constant 0 : i32
    %c0_i32_1 = arith.constant 0 : i32
    return %c0_i32, %c0_i32_0 : i32, i32
  }
  func.func @transform_15(%arg0: i32, %arg1: i32) -> (i32, i32) {
    %c0_i32 = arith.constant 0 : i32
    %c0_i32_0 = arith.constant 0 : i32
    %c0_i32_1 = arith.constant 0 : i32
    return %c0_i32, %c0_i32_0 : i32, i32
  }
  func.func @transform_16(%arg0: i32, %arg1: i32) -> (i32, i32) {
    %c0_i32 = arith.constant 0 : i32
    %c0_i32_0 = arith.constant 0 : i32
    %c0_i32_1 = arith.constant 0 : i32
    return %c0_i32, %c0_i32_0 : i32, i32
  }
  func.func @transform_17(%arg0: i32, %arg1: i32) -> (i32, i32) {
    %c0_i32 = arith.constant 0 : i32
    %c0_i32_0 = arith.constant 0 : i32
    %c0_i32_1 = arith.constant 0 : i32
    return %c0_i32, %c0_i32_0 : i32, i32
  }
  func.func @transform_18(%arg0: i32, %arg1: i32) -> (i32, i32) {
    %c0_i32 = arith.constant 0 : i32
    %c0_i32_0 = arith.constant 0 : i32
    %c0_i32_1 = arith.constant 0 : i32
    return %c0_i32, %c0_i32_0 : i32, i32
  }
  func.func @transform_19(%arg0: i32, %arg1: i32) -> (i32, i32) {
    %c0_i32 = arith.constant 0 : i32
    %c0_i32_0 = arith.constant 0 : i32
    %c0_i32_1 = arith.constant 0 : i32
    return %c0_i32, %c0_i32_0 : i32, i32
  }
  func.func @transform_20(%arg0: i32, %arg1: i32) -> (i32, i32) {
    %c0_i32 = arith.constant 0 : i32
    %c0_i32_0 = arith.constant 0 : i32
    %c0_i32_1 = arith.constant 0 : i32
    return %c0_i32, %c0_i32_0 : i32, i32
  }
  func.func @transform_21(%arg0: i32, %arg1: i32) -> (i32, i32) {
    %c0_i32 = arith.constant 0 : i32
    %c0_i32_0 = arith.constant 0 : i32
    %c0_i32_1 = arith.constant 0 : i32
    return %c0_i32, %c0_i32_0 : i32, i32
  }
  func.func @transform_22(%arg0: i32, %arg1: i32) -> (i32, i32) {
    %c0_i32 = arith.constant 0 : i32
    %c0_i32_0 = arith.constant 0 : i32
    %c0_i32_1 = arith.constant 0 : i32
    return %c0_i32, %c0_i32_0 : i32, i32
  }
  func.func @transform_23(%arg0: i32, %arg1: i32) -> (i32, i32) {
    %c0_i32 = arith.constant 0 : i32
    %c0_i32_0 = arith.constant 0 : i32
    %c0_i32_1 = arith.constant 0 : i32
    return %c0_i32, %c0_i32_0 : i32, i32
  }
  func.func @transform_24(%arg0: i32, %arg1: i32) -> (i32, i32) {
    %c0_i32 = arith.constant 0 : i32
    %c0_i32_0 = arith.constant 0 : i32
    %c0_i32_1 = arith.constant 0 : i32
    return %c0_i32, %c0_i32_0 : i32, i32
  }
  func.func @transform_25(%arg0: i32, %arg1: i32) -> (i32, i32, i32) {
    %c0_i32 = arith.constant 0 : i32
    %c0_i32_0 = arith.constant 0 : i32
    return %arg0, %arg1, %c0_i32 : i32, i32, i32
  }
}

module attributes {stable_mosaic.version = 11 : i64} {
  func.func @_decoder_layer_kernel(%arg0: i32, %arg1: i32, %arg2: memref<1x8x32xf32, #tpu.memory_space<vmem>>, %arg3: memref<1x8x32xf32, #tpu.memory_space<vmem>>, %arg4: memref<1x8x32xf32, #tpu.memory_space<vmem>>, %arg5: memref<32x32xbf16, #tpu.memory_space<vmem>>, %arg6: memref<1x32xf32, #tpu.memory_space<vmem>>, %arg7: memref<32x64xbf16, #tpu.memory_space<vmem>>, %arg8: memref<1x64xf32, #tpu.memory_space<vmem>>, %arg9: memref<32x32xbf16, #tpu.memory_space<vmem>>, %arg10: memref<1x32xf32, #tpu.memory_space<vmem>>, %arg11: memref<1x32xf32, #tpu.memory_space<vmem>>, %arg12: memref<1x32xf32, #tpu.memory_space<vmem>>, %arg13: memref<32x32xbf16, #tpu.memory_space<vmem>>, %arg14: memref<1x32xf32, #tpu.memory_space<vmem>>, %arg15: memref<32x64xbf16, #tpu.memory_space<vmem>>, %arg16: memref<1x64xf32, #tpu.memory_space<vmem>>, %arg17: memref<32x32xbf16, #tpu.memory_space<vmem>>, %arg18: memref<1x32xf32, #tpu.memory_space<vmem>>, %arg19: memref<1x32xf32, #tpu.memory_space<vmem>>, %arg20: memref<1x32xf32, #tpu.memory_space<vmem>>, %arg21: memref<32x64xbf16, #tpu.memory_space<vmem>>, %arg22: memref<1x64xf32, #tpu.memory_space<vmem>>, %arg23: memref<64x32xbf16, #tpu.memory_space<vmem>>, %arg24: memref<1x32xf32, #tpu.memory_space<vmem>>, %arg25: memref<1x32xf32, #tpu.memory_space<vmem>>, %arg26: memref<1x32xf32, #tpu.memory_space<vmem>>, %arg27: memref<1x8x32xf32, #tpu.memory_space<vmem>>) attributes {dimension_semantics = [#tpu.dimension_semantics<parallel>, #tpu.dimension_semantics<parallel>], iteration_bounds = array<i64: 2, 1>, scalar_prefetch = 0 : i64, scratch_operands = 0 : i64, tpu.core_type = #tpu.core_type<tc>, window_params = [{transform_indices = @transform_0, window_bounds = array<i64: 1, 8, 32>}, {transform_indices = @transform_1, window_bounds = array<i64: 1, 8, 32>}, {transform_indices = @transform_2, window_bounds = array<i64: 1, 8, 32>}, {pipeline_mode = #tpu.pipeline_mode<synchronous>, transform_indices = @transform_3, window_bounds = array<i64: 32, 32>}, {pipeline_mode = #tpu.pipeline_mode<synchronous>, transform_indices = @transform_4, window_bounds = array<i64: 1, 32>}, {pipeline_mode = #tpu.pipeline_mode<synchronous>, transform_indices = @transform_5, window_bounds = array<i64: 32, 64>}, {pipeline_mode = #tpu.pipeline_mode<synchronous>, transform_indices = @transform_6, window_bounds = array<i64: 1, 64>}, {pipeline_mode = #tpu.pipeline_mode<synchronous>, transform_indices = @transform_7, window_bounds = array<i64: 32, 32>}, {pipeline_mode = #tpu.pipeline_mode<synchronous>, transform_indices = @transform_8, window_bounds = array<i64: 1, 32>}, {pipeline_mode = #tpu.pipeline_mode<synchronous>, transform_indices = @transform_9, window_bounds = array<i64: 1, 32>}, {pipeline_mode = #tpu.pipeline_mode<synchronous>, transform_indices = @transform_10, window_bounds = array<i64: 1, 32>}, {pipeline_mode = #tpu.pipeline_mode<synchronous>, transform_indices = @transform_11, window_bounds = array<i64: 32, 32>}, {pipeline_mode = #tpu.pipeline_mode<synchronous>, transform_indices = @transform_12, window_bounds = array<i64: 1, 32>}, {pipeline_mode = #tpu.pipeline_mode<synchronous>, transform_indices = @transform_13, window_bounds = array<i64: 32, 64>}, {pipeline_mode = #tpu.pipeline_mode<synchronous>, transform_indices = @transform_14, window_bounds = array<i64: 1, 64>}, {pipeline_mode = #tpu.pipeline_mode<synchronous>, transform_indices = @transform_15, window_bounds = array<i64: 32, 32>}, {pipeline_mode = #tpu.pipeline_mode<synchronous>, transform_indices = @transform_16, window_bounds = array<i64: 1, 32>}, {pipeline_mode = #tpu.pipeline_mode<synchronous>, transform_indices = @transform_17, window_bounds = array<i64: 1, 32>}, {pipeline_mode = #tpu.pipeline_mode<synchronous>, transform_indices = @transform_18, window_bounds = array<i64: 1, 32>}, {pipeline_mode = #tpu.pipeline_mode<synchronous>, transform_indices = @transform_19, window_bounds = array<i64: 32, 64>}, {pipeline_mode = #tpu.pipeline_mode<synchronous>, transform_indices = @transform_20, window_bounds = array<i64: 1, 64>}, {pipeline_mode = #tpu.pipeline_mode<synchronous>, transform_indices = @transform_21, window_bounds = array<i64: 64, 32>}, {pipeline_mode = #tpu.pipeline_mode<synchronous>, transform_indices = @transform_22, window_bounds = array<i64: 1, 32>}, {pipeline_mode = #tpu.pipeline_mode<synchronous>, transform_indices = @transform_23, window_bounds = array<i64: 1, 32>}, {pipeline_mode = #tpu.pipeline_mode<synchronous>, transform_indices = @transform_24, window_bounds = array<i64: 1, 32>}, {transform_indices = @transform_25, window_bounds = array<i64: 1, 8, 32>}]} {
    %c0 = arith.constant 0 : index
    %c0_0 = arith.constant 0 : index
    %c0_1 = arith.constant 0 : index
    %0 = vector.load %arg2[%c0, %c0_0, %c0_1] : memref<1x8x32xf32, #tpu.memory_space<vmem>>, vector<1x8x32xf32>
    %1 = vector.shape_cast %0 : vector<1x8x32xf32> to vector<8x32xf32>
    %c0_2 = arith.constant 0 : index
    %c0_3 = arith.constant 0 : index
    %c0_4 = arith.constant 0 : index
    %2 = vector.load %arg3[%c0_2, %c0_3, %c0_4] : memref<1x8x32xf32, #tpu.memory_space<vmem>>, vector<1x8x32xf32>
    %3 = vector.shape_cast %2 : vector<1x8x32xf32> to vector<8x32xf32>
    %c0_5 = arith.constant 0 : index
    %c0_6 = arith.constant 0 : index
    %c0_7 = arith.constant 0 : index
    %4 = vector.load %arg4[%c0_5, %c0_6, %c0_7] : memref<1x8x32xf32, #tpu.memory_space<vmem>>, vector<1x8x32xf32>
    %5 = vector.shape_cast %4 : vector<1x8x32xf32> to vector<8x32xf32>
    %6 = arith.truncf %1 : vector<8x32xf32> to vector<8x32xbf16>
    %c0_8 = arith.constant 0 : index
    %c0_9 = arith.constant 0 : index
    %7 = vector.load %arg5[%c0_8, %c0_9] : memref<32x32xbf16, #tpu.memory_space<vmem>>, vector<32x32xbf16>
    %cst = arith.constant dense<0.000000e+00> : vector<8x32xf32>
    %8 = tpu.matmul %6, %7, %cst {dimension_numbers = #tpu.dot_dimension_numbers<[1], [0], [0], [1], [0, 0, 1, 1], [], []>} : vector<8x32xbf16>, vector<32x32xbf16>, vector<8x32xf32> -> vector<8x32xf32>
    %c0_10 = arith.constant 0 : index
    %c0_11 = arith.constant 0 : index
    %9 = vector.load %arg6[%c0_10, %c0_11] : memref<1x32xf32, #tpu.memory_space<vmem>>, vector<1x32xf32>
    %10 = vector.broadcast %9 : vector<1x32xf32> to vector<8x32xf32>
    %11 = arith.addf %8, %10 : vector<8x32xf32>
    %cst_12 = arith.constant 0.353553385 : f32
    %12 = vector.broadcast %cst_12 : f32 to vector<8x32xf32>
    %13 = arith.mulf %11, %12 : vector<8x32xf32>
    %14 = arith.truncf %3 : vector<8x32xf32> to vector<8x32xbf16>
    %c0_13 = arith.constant 0 : index
    %c0_14 = arith.constant 0 : index
    %15 = vector.load %arg7[%c0_13, %c0_14] : memref<32x64xbf16, #tpu.memory_space<vmem>>, vector<32x64xbf16>
    %cst_15 = arith.constant dense<0.000000e+00> : vector<8x64xf32>
    %16 = tpu.matmul %14, %15, %cst_15 {dimension_numbers = #tpu.dot_dimension_numbers<[1], [0], [0], [1], [0, 0, 1, 1], [], []>} : vector<8x32xbf16>, vector<32x64xbf16>, vector<8x64xf32> -> vector<8x64xf32>
    %c0_16 = arith.constant 0 : index
    %c0_17 = arith.constant 0 : index
    %17 = vector.load %arg8[%c0_16, %c0_17] : memref<1x64xf32, #tpu.memory_space<vmem>>, vector<1x64xf32>
    %18 = vector.broadcast %17 : vector<1x64xf32> to vector<8x64xf32>
    %19 = arith.addf %16, %18 : vector<8x64xf32>
    %20 = vector.extract_strided_slice %19 {offsets = [0, 0], sizes = [8, 32], strides = [1, 1]} : vector<8x64xf32> to vector<8x32xf32>
    %21 = vector.extract_strided_slice %19 {offsets = [0, 32], sizes = [8, 32], strides = [1, 1]} : vector<8x64xf32> to vector<8x32xf32>
    %c0_18 = arith.constant 0 : index
    %c0_19 = arith.constant 0 : index
    %22 = vector.load %arg10[%c0_18, %c0_19] : memref<1x32xf32, #tpu.memory_space<vmem>>, vector<1x32xf32>
    %23 = vector.extract_strided_slice %13 {offsets = [0, 0], sizes = [8, 8], strides = [1, 1]} : vector<8x32xf32> to vector<8x8xf32>
    %24 = vector.extract_strided_slice %20 {offsets = [0, 0], sizes = [8, 8], strides = [1, 1]} : vector<8x32xf32> to vector<8x8xf32>
    %cst_20 = arith.constant dense<0.000000e+00> : vector<8x8xf32>
    %25 = tpu.matmul %23, %24, %cst_20 {dimension_numbers = #tpu.dot_dimension_numbers<[1], [1], [0], [0], [0, 0, 1, 0], [], []>} : vector<8x8xf32>, vector<8x8xf32>, vector<8x8xf32> -> vector<8x8xf32>
    %cst_21 = arith.constant dense<0xFF800000> : vector<8xf32>
    %26 = vector.multi_reduction <maximumf>, %25, %cst_21 [1] : vector<8x8xf32> to vector<8xf32>
    %27 = vector.shape_cast %26 : vector<8xf32> to vector<8x1xf32>
    %28 = vector.broadcast %27 : vector<8x1xf32> to vector<8x8xf32>
    %29 = arith.subf %25, %28 : vector<8x8xf32>
    %30 = math.exp %29 : vector<8x8xf32>
    %cst_22 = arith.constant dense<0.000000e+00> : vector<8xf32>
    %31 = vector.multi_reduction <add>, %30, %cst_22 [1] : vector<8x8xf32> to vector<8xf32>
    %32 = vector.shape_cast %31 : vector<8xf32> to vector<8x1xf32>
    %33 = vector.broadcast %32 : vector<8x1xf32> to vector<8x8xf32>
    %34 = arith.divf %30, %33 : vector<8x8xf32>
    %35 = vector.extract_strided_slice %21 {offsets = [0, 0], sizes = [8, 8], strides = [1, 1]} : vector<8x32xf32> to vector<8x8xf32>
    %cst_23 = arith.constant dense<0.000000e+00> : vector<8x8xf32>
    %36 = tpu.matmul %34, %35, %cst_23 {dimension_numbers = #tpu.dot_dimension_numbers<[1], [0], [0], [1], [0, 0, 1, 1], [], []>} : vector<8x8xf32>, vector<8x8xf32>, vector<8x8xf32> -> vector<8x8xf32>
    %37 = arith.truncf %36 : vector<8x8xf32> to vector<8x8xbf16>
    %c0_24 = arith.constant 0 : index
    %c0_25 = arith.constant 0 : index
    %38 = vector.load %arg9[%c0_24, %c0_25] : memref<32x32xbf16, #tpu.memory_space<vmem>>, vector<8x32xbf16>
    %cst_26 = arith.constant dense<0.000000e+00> : vector<8x32xf32>
    %39 = tpu.matmul %37, %38, %cst_26 {dimension_numbers = #tpu.dot_dimension_numbers<[1], [0], [0], [1], [0, 0, 1, 1], [], []>} : vector<8x8xbf16>, vector<8x32xbf16>, vector<8x32xf32> -> vector<8x32xf32>
    %40 = vector.broadcast %22 : vector<1x32xf32> to vector<8x32xf32>
    %41 = arith.addf %40, %39 : vector<8x32xf32>
    %42 = vector.extract_strided_slice %13 {offsets = [0, 8], sizes = [8, 8], strides = [1, 1]} : vector<8x32xf32> to vector<8x8xf32>
    %43 = vector.extract_strided_slice %20 {offsets = [0, 8], sizes = [8, 8], strides = [1, 1]} : vector<8x32xf32> to vector<8x8xf32>
    %cst_27 = arith.constant dense<0.000000e+00> : vector<8x8xf32>
    %44 = tpu.matmul %42, %43, %cst_27 {dimension_numbers = #tpu.dot_dimension_numbers<[1], [1], [0], [0], [0, 0, 1, 0], [], []>} : vector<8x8xf32>, vector<8x8xf32>, vector<8x8xf32> -> vector<8x8xf32>
    %cst_28 = arith.constant dense<0xFF800000> : vector<8xf32>
    %45 = vector.multi_reduction <maximumf>, %44, %cst_28 [1] : vector<8x8xf32> to vector<8xf32>
    %46 = vector.shape_cast %45 : vector<8xf32> to vector<8x1xf32>
    %47 = vector.broadcast %46 : vector<8x1xf32> to vector<8x8xf32>
    %48 = arith.subf %44, %47 : vector<8x8xf32>
    %49 = math.exp %48 : vector<8x8xf32>
    %cst_29 = arith.constant dense<0.000000e+00> : vector<8xf32>
    %50 = vector.multi_reduction <add>, %49, %cst_29 [1] : vector<8x8xf32> to vector<8xf32>
    %51 = vector.shape_cast %50 : vector<8xf32> to vector<8x1xf32>
    %52 = vector.broadcast %51 : vector<8x1xf32> to vector<8x8xf32>
    %53 = arith.divf %49, %52 : vector<8x8xf32>
    %54 = vector.extract_strided_slice %21 {offsets = [0, 8], sizes = [8, 8], strides = [1, 1]} : vector<8x32xf32> to vector<8x8xf32>
    %cst_30 = arith.constant dense<0.000000e+00> : vector<8x8xf32>
    %55 = tpu.matmul %53, %54, %cst_30 {dimension_numbers = #tpu.dot_dimension_numbers<[1], [0], [0], [1], [0, 0, 1, 1], [], []>} : vector<8x8xf32>, vector<8x8xf32>, vector<8x8xf32> -> vector<8x8xf32>
    %56 = arith.truncf %55 : vector<8x8xf32> to vector<8x8xbf16>
    %c8 = arith.constant 8 : index
    %c0_31 = arith.constant 0 : index
    %57 = vector.load %arg9[%c8, %c0_31] : memref<32x32xbf16, #tpu.memory_space<vmem>>, vector<8x32xbf16>
    %cst_32 = arith.constant dense<0.000000e+00> : vector<8x32xf32>
    %58 = tpu.matmul %56, %57, %cst_32 {dimension_numbers = #tpu.dot_dimension_numbers<[1], [0], [0], [1], [0, 0, 1, 1], [], []>} : vector<8x8xbf16>, vector<8x32xbf16>, vector<8x32xf32> -> vector<8x32xf32>
    %59 = arith.addf %41, %58 : vector<8x32xf32>
    %60 = vector.extract_strided_slice %13 {offsets = [0, 16], sizes = [8, 8], strides = [1, 1]} : vector<8x32xf32> to vector<8x8xf32>
    %61 = vector.extract_strided_slice %20 {offsets = [0, 16], sizes = [8, 8], strides = [1, 1]} : vector<8x32xf32> to vector<8x8xf32>
    %cst_33 = arith.constant dense<0.000000e+00> : vector<8x8xf32>
    %62 = tpu.matmul %60, %61, %cst_33 {dimension_numbers = #tpu.dot_dimension_numbers<[1], [1], [0], [0], [0, 0, 1, 0], [], []>} : vector<8x8xf32>, vector<8x8xf32>, vector<8x8xf32> -> vector<8x8xf32>
    %cst_34 = arith.constant dense<0xFF800000> : vector<8xf32>
    %63 = vector.multi_reduction <maximumf>, %62, %cst_34 [1] : vector<8x8xf32> to vector<8xf32>
    %64 = vector.shape_cast %63 : vector<8xf32> to vector<8x1xf32>
    %65 = vector.broadcast %64 : vector<8x1xf32> to vector<8x8xf32>
    %66 = arith.subf %62, %65 : vector<8x8xf32>
    %67 = math.exp %66 : vector<8x8xf32>
    %cst_35 = arith.constant dense<0.000000e+00> : vector<8xf32>
    %68 = vector.multi_reduction <add>, %67, %cst_35 [1] : vector<8x8xf32> to vector<8xf32>
    %69 = vector.shape_cast %68 : vector<8xf32> to vector<8x1xf32>
    %70 = vector.broadcast %69 : vector<8x1xf32> to vector<8x8xf32>
    %71 = arith.divf %67, %70 : vector<8x8xf32>
    %72 = vector.extract_strided_slice %21 {offsets = [0, 16], sizes = [8, 8], strides = [1, 1]} : vector<8x32xf32> to vector<8x8xf32>
    %cst_36 = arith.constant dense<0.000000e+00> : vector<8x8xf32>
    %73 = tpu.matmul %71, %72, %cst_36 {dimension_numbers = #tpu.dot_dimension_numbers<[1], [0], [0], [1], [0, 0, 1, 1], [], []>} : vector<8x8xf32>, vector<8x8xf32>, vector<8x8xf32> -> vector<8x8xf32>
    %74 = arith.truncf %73 : vector<8x8xf32> to vector<8x8xbf16>
    %c16 = arith.constant 16 : index
    %c0_37 = arith.constant 0 : index
    %75 = vector.load %arg9[%c16, %c0_37] : memref<32x32xbf16, #tpu.memory_space<vmem>>, vector<8x32xbf16>
    %cst_38 = arith.constant dense<0.000000e+00> : vector<8x32xf32>
    %76 = tpu.matmul %74, %75, %cst_38 {dimension_numbers = #tpu.dot_dimension_numbers<[1], [0], [0], [1], [0, 0, 1, 1], [], []>} : vector<8x8xbf16>, vector<8x32xbf16>, vector<8x32xf32> -> vector<8x32xf32>
    %77 = arith.addf %59, %76 : vector<8x32xf32>
    %78 = vector.extract_strided_slice %13 {offsets = [0, 24], sizes = [8, 8], strides = [1, 1]} : vector<8x32xf32> to vector<8x8xf32>
    %79 = vector.extract_strided_slice %20 {offsets = [0, 24], sizes = [8, 8], strides = [1, 1]} : vector<8x32xf32> to vector<8x8xf32>
    %cst_39 = arith.constant dense<0.000000e+00> : vector<8x8xf32>
    %80 = tpu.matmul %78, %79, %cst_39 {dimension_numbers = #tpu.dot_dimension_numbers<[1], [1], [0], [0], [0, 0, 1, 0], [], []>} : vector<8x8xf32>, vector<8x8xf32>, vector<8x8xf32> -> vector<8x8xf32>
    %cst_40 = arith.constant dense<0xFF800000> : vector<8xf32>
    %81 = vector.multi_reduction <maximumf>, %80, %cst_40 [1] : vector<8x8xf32> to vector<8xf32>
    %82 = vector.shape_cast %81 : vector<8xf32> to vector<8x1xf32>
    %83 = vector.broadcast %82 : vector<8x1xf32> to vector<8x8xf32>
    %84 = arith.subf %80, %83 : vector<8x8xf32>
    %85 = math.exp %84 : vector<8x8xf32>
    %cst_41 = arith.constant dense<0.000000e+00> : vector<8xf32>
    %86 = vector.multi_reduction <add>, %85, %cst_41 [1] : vector<8x8xf32> to vector<8xf32>
    %87 = vector.shape_cast %86 : vector<8xf32> to vector<8x1xf32>
    %88 = vector.broadcast %87 : vector<8x1xf32> to vector<8x8xf32>
    %89 = arith.divf %85, %88 : vector<8x8xf32>
    %90 = vector.extract_strided_slice %21 {offsets = [0, 24], sizes = [8, 8], strides = [1, 1]} : vector<8x32xf32> to vector<8x8xf32>
    %cst_42 = arith.constant dense<0.000000e+00> : vector<8x8xf32>
    %91 = tpu.matmul %89, %90, %cst_42 {dimension_numbers = #tpu.dot_dimension_numbers<[1], [0], [0], [1], [0, 0, 1, 1], [], []>} : vector<8x8xf32>, vector<8x8xf32>, vector<8x8xf32> -> vector<8x8xf32>
    %92 = arith.truncf %91 : vector<8x8xf32> to vector<8x8xbf16>
    %c24 = arith.constant 24 : index
    %c0_43 = arith.constant 0 : index
    %93 = vector.load %arg9[%c24, %c0_43] : memref<32x32xbf16, #tpu.memory_space<vmem>>, vector<8x32xbf16>
    %cst_44 = arith.constant dense<0.000000e+00> : vector<8x32xf32>
    %94 = tpu.matmul %92, %93, %cst_44 {dimension_numbers = #tpu.dot_dimension_numbers<[1], [0], [0], [1], [0, 0, 1, 1], [], []>} : vector<8x8xbf16>, vector<8x32xbf16>, vector<8x32xf32> -> vector<8x32xf32>
    %95 = arith.addf %77, %94 : vector<8x32xf32>
    %96 = arith.addf %95, %1 : vector<8x32xf32>
    %cst_45 = arith.constant dense<0.000000e+00> : vector<8xf32>
    %97 = vector.multi_reduction <add>, %96, %cst_45 [1] : vector<8x32xf32> to vector<8xf32>
    %98 = vector.shape_cast %97 : vector<8xf32> to vector<8x1xf32>
    %cst_46 = arith.constant 3.200000e+01 : f32
    %99 = vector.broadcast %cst_46 : f32 to vector<8x1xf32>
    %100 = arith.divf %98, %99 : vector<8x1xf32>
    %101 = vector.broadcast %100 : vector<8x1xf32> to vector<8x32xf32>
    %102 = arith.subf %96, %101 : vector<8x32xf32>
    %103 = arith.mulf %102, %102 : vector<8x32xf32>
    %cst_47 = arith.constant dense<0.000000e+00> : vector<8xf32>
    %104 = vector.multi_reduction <add>, %103, %cst_47 [1] : vector<8x32xf32> to vector<8xf32>
    %105 = vector.shape_cast %104 : vector<8xf32> to vector<8x1xf32>
    %cst_48 = arith.constant 3.200000e+01 : f32
    %106 = vector.broadcast %cst_48 : f32 to vector<8x1xf32>
    %107 = arith.divf %105, %106 : vector<8x1xf32>
    %108 = vector.broadcast %100 : vector<8x1xf32> to vector<8x32xf32>
    %109 = arith.subf %96, %108 : vector<8x32xf32>
    %cst_49 = arith.constant 9.99999974E-6 : f32
    %110 = vector.broadcast %cst_49 : f32 to vector<8x1xf32>
    %111 = arith.addf %107, %110 : vector<8x1xf32>
    %112 = math.rsqrt %111 : vector<8x1xf32>
    %113 = vector.broadcast %112 : vector<8x1xf32> to vector<8x32xf32>
    %114 = arith.mulf %109, %113 : vector<8x32xf32>
    %c0_50 = arith.constant 0 : index
    %c0_51 = arith.constant 0 : index
    %115 = vector.load %arg11[%c0_50, %c0_51] : memref<1x32xf32, #tpu.memory_space<vmem>>, vector<1x32xf32>
    %116 = vector.broadcast %115 : vector<1x32xf32> to vector<8x32xf32>
    %117 = arith.mulf %114, %116 : vector<8x32xf32>
    %c0_52 = arith.constant 0 : index
    %c0_53 = arith.constant 0 : index
    %118 = vector.load %arg12[%c0_52, %c0_53] : memref<1x32xf32, #tpu.memory_space<vmem>>, vector<1x32xf32>
    %119 = vector.broadcast %118 : vector<1x32xf32> to vector<8x32xf32>
    %120 = arith.addf %117, %119 : vector<8x32xf32>
    %121 = arith.truncf %120 : vector<8x32xf32> to vector<8x32xbf16>
    %c0_54 = arith.constant 0 : index
    %c0_55 = arith.constant 0 : index
    %122 = vector.load %arg13[%c0_54, %c0_55] : memref<32x32xbf16, #tpu.memory_space<vmem>>, vector<32x32xbf16>
    %cst_56 = arith.constant dense<0.000000e+00> : vector<8x32xf32>
    %123 = tpu.matmul %121, %122, %cst_56 {dimension_numbers = #tpu.dot_dimension_numbers<[1], [0], [0], [1], [0, 0, 1, 1], [], []>} : vector<8x32xbf16>, vector<32x32xbf16>, vector<8x32xf32> -> vector<8x32xf32>
    %c0_57 = arith.constant 0 : index
    %c0_58 = arith.constant 0 : index
    %124 = vector.load %arg14[%c0_57, %c0_58] : memref<1x32xf32, #tpu.memory_space<vmem>>, vector<1x32xf32>
    %125 = vector.broadcast %124 : vector<1x32xf32> to vector<8x32xf32>
    %126 = arith.addf %123, %125 : vector<8x32xf32>
    %cst_59 = arith.constant 0.353553385 : f32
    %127 = vector.broadcast %cst_59 : f32 to vector<8x32xf32>
    %128 = arith.mulf %126, %127 : vector<8x32xf32>
    %129 = arith.truncf %5 : vector<8x32xf32> to vector<8x32xbf16>
    %c0_60 = arith.constant 0 : index
    %c0_61 = arith.constant 0 : index
    %130 = vector.load %arg15[%c0_60, %c0_61] : memref<32x64xbf16, #tpu.memory_space<vmem>>, vector<32x64xbf16>
    %cst_62 = arith.constant dense<0.000000e+00> : vector<8x64xf32>
    %131 = tpu.matmul %129, %130, %cst_62 {dimension_numbers = #tpu.dot_dimension_numbers<[1], [0], [0], [1], [0, 0, 1, 1], [], []>} : vector<8x32xbf16>, vector<32x64xbf16>, vector<8x64xf32> -> vector<8x64xf32>
    %c0_63 = arith.constant 0 : index
    %c0_64 = arith.constant 0 : index
    %132 = vector.load %arg16[%c0_63, %c0_64] : memref<1x64xf32, #tpu.memory_space<vmem>>, vector<1x64xf32>
    %133 = vector.broadcast %132 : vector<1x64xf32> to vector<8x64xf32>
    %134 = arith.addf %131, %133 : vector<8x64xf32>
    %135 = vector.extract_strided_slice %134 {offsets = [0, 0], sizes = [8, 32], strides = [1, 1]} : vector<8x64xf32> to vector<8x32xf32>
    %136 = vector.extract_strided_slice %134 {offsets = [0, 32], sizes = [8, 32], strides = [1, 1]} : vector<8x64xf32> to vector<8x32xf32>
    %c0_65 = arith.constant 0 : index
    %c0_66 = arith.constant 0 : index
    %137 = vector.load %arg18[%c0_65, %c0_66] : memref<1x32xf32, #tpu.memory_space<vmem>>, vector<1x32xf32>
    %138 = vector.extract_strided_slice %128 {offsets = [0, 0], sizes = [8, 8], strides = [1, 1]} : vector<8x32xf32> to vector<8x8xf32>
    %139 = vector.extract_strided_slice %135 {offsets = [0, 0], sizes = [8, 8], strides = [1, 1]} : vector<8x32xf32> to vector<8x8xf32>
    %cst_67 = arith.constant dense<0.000000e+00> : vector<8x8xf32>
    %140 = tpu.matmul %138, %139, %cst_67 {dimension_numbers = #tpu.dot_dimension_numbers<[1], [1], [0], [0], [0, 0, 1, 0], [], []>} : vector<8x8xf32>, vector<8x8xf32>, vector<8x8xf32> -> vector<8x8xf32>
    %cst_68 = arith.constant dense<0xFF800000> : vector<8xf32>
    %141 = vector.multi_reduction <maximumf>, %140, %cst_68 [1] : vector<8x8xf32> to vector<8xf32>
    %142 = vector.shape_cast %141 : vector<8xf32> to vector<8x1xf32>
    %143 = vector.broadcast %142 : vector<8x1xf32> to vector<8x8xf32>
    %144 = arith.subf %140, %143 : vector<8x8xf32>
    %145 = math.exp %144 : vector<8x8xf32>
    %cst_69 = arith.constant dense<0.000000e+00> : vector<8xf32>
    %146 = vector.multi_reduction <add>, %145, %cst_69 [1] : vector<8x8xf32> to vector<8xf32>
    %147 = vector.shape_cast %146 : vector<8xf32> to vector<8x1xf32>
    %148 = vector.broadcast %147 : vector<8x1xf32> to vector<8x8xf32>
    %149 = arith.divf %145, %148 : vector<8x8xf32>
    %150 = vector.extract_strided_slice %136 {offsets = [0, 0], sizes = [8, 8], strides = [1, 1]} : vector<8x32xf32> to vector<8x8xf32>
    %cst_70 = arith.constant dense<0.000000e+00> : vector<8x8xf32>
    %151 = tpu.matmul %149, %150, %cst_70 {dimension_numbers = #tpu.dot_dimension_numbers<[1], [0], [0], [1], [0, 0, 1, 1], [], []>} : vector<8x8xf32>, vector<8x8xf32>, vector<8x8xf32> -> vector<8x8xf32>
    %152 = arith.truncf %151 : vector<8x8xf32> to vector<8x8xbf16>
    %c0_71 = arith.constant 0 : index
    %c0_72 = arith.constant 0 : index
    %153 = vector.load %arg17[%c0_71, %c0_72] : memref<32x32xbf16, #tpu.memory_space<vmem>>, vector<8x32xbf16>
    %cst_73 = arith.constant dense<0.000000e+00> : vector<8x32xf32>
    %154 = tpu.matmul %152, %153, %cst_73 {dimension_numbers = #tpu.dot_dimension_numbers<[1], [0], [0], [1], [0, 0, 1, 1], [], []>} : vector<8x8xbf16>, vector<8x32xbf16>, vector<8x32xf32> -> vector<8x32xf32>
    %155 = vector.broadcast %137 : vector<1x32xf32> to vector<8x32xf32>
    %156 = arith.addf %155, %154 : vector<8x32xf32>
    %157 = vector.extract_strided_slice %128 {offsets = [0, 8], sizes = [8, 8], strides = [1, 1]} : vector<8x32xf32> to vector<8x8xf32>
    %158 = vector.extract_strided_slice %135 {offsets = [0, 8], sizes = [8, 8], strides = [1, 1]} : vector<8x32xf32> to vector<8x8xf32>
    %cst_74 = arith.constant dense<0.000000e+00> : vector<8x8xf32>
    %159 = tpu.matmul %157, %158, %cst_74 {dimension_numbers = #tpu.dot_dimension_numbers<[1], [1], [0], [0], [0, 0, 1, 0], [], []>} : vector<8x8xf32>, vector<8x8xf32>, vector<8x8xf32> -> vector<8x8xf32>
    %cst_75 = arith.constant dense<0xFF800000> : vector<8xf32>
    %160 = vector.multi_reduction <maximumf>, %159, %cst_75 [1] : vector<8x8xf32> to vector<8xf32>
    %161 = vector.shape_cast %160 : vector<8xf32> to vector<8x1xf32>
    %162 = vector.broadcast %161 : vector<8x1xf32> to vector<8x8xf32>
    %163 = arith.subf %159, %162 : vector<8x8xf32>
    %164 = math.exp %163 : vector<8x8xf32>
    %cst_76 = arith.constant dense<0.000000e+00> : vector<8xf32>
    %165 = vector.multi_reduction <add>, %164, %cst_76 [1] : vector<8x8xf32> to vector<8xf32>
    %166 = vector.shape_cast %165 : vector<8xf32> to vector<8x1xf32>
    %167 = vector.broadcast %166 : vector<8x1xf32> to vector<8x8xf32>
    %168 = arith.divf %164, %167 : vector<8x8xf32>
    %169 = vector.extract_strided_slice %136 {offsets = [0, 8], sizes = [8, 8], strides = [1, 1]} : vector<8x32xf32> to vector<8x8xf32>
    %cst_77 = arith.constant dense<0.000000e+00> : vector<8x8xf32>
    %170 = tpu.matmul %168, %169, %cst_77 {dimension_numbers = #tpu.dot_dimension_numbers<[1], [0], [0], [1], [0, 0, 1, 1], [], []>} : vector<8x8xf32>, vector<8x8xf32>, vector<8x8xf32> -> vector<8x8xf32>
    %171 = arith.truncf %170 : vector<8x8xf32> to vector<8x8xbf16>
    %c8_78 = arith.constant 8 : index
    %c0_79 = arith.constant 0 : index
    %172 = vector.load %arg17[%c8_78, %c0_79] : memref<32x32xbf16, #tpu.memory_space<vmem>>, vector<8x32xbf16>
    %cst_80 = arith.constant dense<0.000000e+00> : vector<8x32xf32>
    %173 = tpu.matmul %171, %172, %cst_80 {dimension_numbers = #tpu.dot_dimension_numbers<[1], [0], [0], [1], [0, 0, 1, 1], [], []>} : vector<8x8xbf16>, vector<8x32xbf16>, vector<8x32xf32> -> vector<8x32xf32>
    %174 = arith.addf %156, %173 : vector<8x32xf32>
    %175 = vector.extract_strided_slice %128 {offsets = [0, 16], sizes = [8, 8], strides = [1, 1]} : vector<8x32xf32> to vector<8x8xf32>
    %176 = vector.extract_strided_slice %135 {offsets = [0, 16], sizes = [8, 8], strides = [1, 1]} : vector<8x32xf32> to vector<8x8xf32>
    %cst_81 = arith.constant dense<0.000000e+00> : vector<8x8xf32>
    %177 = tpu.matmul %175, %176, %cst_81 {dimension_numbers = #tpu.dot_dimension_numbers<[1], [1], [0], [0], [0, 0, 1, 0], [], []>} : vector<8x8xf32>, vector<8x8xf32>, vector<8x8xf32> -> vector<8x8xf32>
    %cst_82 = arith.constant dense<0xFF800000> : vector<8xf32>
    %178 = vector.multi_reduction <maximumf>, %177, %cst_82 [1] : vector<8x8xf32> to vector<8xf32>
    %179 = vector.shape_cast %178 : vector<8xf32> to vector<8x1xf32>
    %180 = vector.broadcast %179 : vector<8x1xf32> to vector<8x8xf32>
    %181 = arith.subf %177, %180 : vector<8x8xf32>
    %182 = math.exp %181 : vector<8x8xf32>
    %cst_83 = arith.constant dense<0.000000e+00> : vector<8xf32>
    %183 = vector.multi_reduction <add>, %182, %cst_83 [1] : vector<8x8xf32> to vector<8xf32>
    %184 = vector.shape_cast %183 : vector<8xf32> to vector<8x1xf32>
    %185 = vector.broadcast %184 : vector<8x1xf32> to vector<8x8xf32>
    %186 = arith.divf %182, %185 : vector<8x8xf32>
    %187 = vector.extract_strided_slice %136 {offsets = [0, 16], sizes = [8, 8], strides = [1, 1]} : vector<8x32xf32> to vector<8x8xf32>
    %cst_84 = arith.constant dense<0.000000e+00> : vector<8x8xf32>
    %188 = tpu.matmul %186, %187, %cst_84 {dimension_numbers = #tpu.dot_dimension_numbers<[1], [0], [0], [1], [0, 0, 1, 1], [], []>} : vector<8x8xf32>, vector<8x8xf32>, vector<8x8xf32> -> vector<8x8xf32>
    %189 = arith.truncf %188 : vector<8x8xf32> to vector<8x8xbf16>
    %c16_85 = arith.constant 16 : index
    %c0_86 = arith.constant 0 : index
    %190 = vector.load %arg17[%c16_85, %c0_86] : memref<32x32xbf16, #tpu.memory_space<vmem>>, vector<8x32xbf16>
    %cst_87 = arith.constant dense<0.000000e+00> : vector<8x32xf32>
    %191 = tpu.matmul %189, %190, %cst_87 {dimension_numbers = #tpu.dot_dimension_numbers<[1], [0], [0], [1], [0, 0, 1, 1], [], []>} : vector<8x8xbf16>, vector<8x32xbf16>, vector<8x32xf32> -> vector<8x32xf32>
    %192 = arith.addf %174, %191 : vector<8x32xf32>
    %193 = vector.extract_strided_slice %128 {offsets = [0, 24], sizes = [8, 8], strides = [1, 1]} : vector<8x32xf32> to vector<8x8xf32>
    %194 = vector.extract_strided_slice %135 {offsets = [0, 24], sizes = [8, 8], strides = [1, 1]} : vector<8x32xf32> to vector<8x8xf32>
    %cst_88 = arith.constant dense<0.000000e+00> : vector<8x8xf32>
    %195 = tpu.matmul %193, %194, %cst_88 {dimension_numbers = #tpu.dot_dimension_numbers<[1], [1], [0], [0], [0, 0, 1, 0], [], []>} : vector<8x8xf32>, vector<8x8xf32>, vector<8x8xf32> -> vector<8x8xf32>
    %cst_89 = arith.constant dense<0xFF800000> : vector<8xf32>
    %196 = vector.multi_reduction <maximumf>, %195, %cst_89 [1] : vector<8x8xf32> to vector<8xf32>
    %197 = vector.shape_cast %196 : vector<8xf32> to vector<8x1xf32>
    %198 = vector.broadcast %197 : vector<8x1xf32> to vector<8x8xf32>
    %199 = arith.subf %195, %198 : vector<8x8xf32>
    %200 = math.exp %199 : vector<8x8xf32>
    %cst_90 = arith.constant dense<0.000000e+00> : vector<8xf32>
    %201 = vector.multi_reduction <add>, %200, %cst_90 [1] : vector<8x8xf32> to vector<8xf32>
    %202 = vector.shape_cast %201 : vector<8xf32> to vector<8x1xf32>
    %203 = vector.broadcast %202 : vector<8x1xf32> to vector<8x8xf32>
    %204 = arith.divf %200, %203 : vector<8x8xf32>
    %205 = vector.extract_strided_slice %136 {offsets = [0, 24], sizes = [8, 8], strides = [1, 1]} : vector<8x32xf32> to vector<8x8xf32>
    %cst_91 = arith.constant dense<0.000000e+00> : vector<8x8xf32>
    %206 = tpu.matmul %204, %205, %cst_91 {dimension_numbers = #tpu.dot_dimension_numbers<[1], [0], [0], [1], [0, 0, 1, 1], [], []>} : vector<8x8xf32>, vector<8x8xf32>, vector<8x8xf32> -> vector<8x8xf32>
    %207 = arith.truncf %206 : vector<8x8xf32> to vector<8x8xbf16>
    %c24_92 = arith.constant 24 : index
    %c0_93 = arith.constant 0 : index
    %208 = vector.load %arg17[%c24_92, %c0_93] : memref<32x32xbf16, #tpu.memory_space<vmem>>, vector<8x32xbf16>
    %cst_94 = arith.constant dense<0.000000e+00> : vector<8x32xf32>
    %209 = tpu.matmul %207, %208, %cst_94 {dimension_numbers = #tpu.dot_dimension_numbers<[1], [0], [0], [1], [0, 0, 1, 1], [], []>} : vector<8x8xbf16>, vector<8x32xbf16>, vector<8x32xf32> -> vector<8x32xf32>
    %210 = arith.addf %192, %209 : vector<8x32xf32>
    %211 = arith.addf %210, %120 : vector<8x32xf32>
    %cst_95 = arith.constant dense<0.000000e+00> : vector<8xf32>
    %212 = vector.multi_reduction <add>, %211, %cst_95 [1] : vector<8x32xf32> to vector<8xf32>
    %213 = vector.shape_cast %212 : vector<8xf32> to vector<8x1xf32>
    %cst_96 = arith.constant 3.200000e+01 : f32
    %214 = vector.broadcast %cst_96 : f32 to vector<8x1xf32>
    %215 = arith.divf %213, %214 : vector<8x1xf32>
    %216 = vector.broadcast %215 : vector<8x1xf32> to vector<8x32xf32>
    %217 = arith.subf %211, %216 : vector<8x32xf32>
    %218 = arith.mulf %217, %217 : vector<8x32xf32>
    %cst_97 = arith.constant dense<0.000000e+00> : vector<8xf32>
    %219 = vector.multi_reduction <add>, %218, %cst_97 [1] : vector<8x32xf32> to vector<8xf32>
    %220 = vector.shape_cast %219 : vector<8xf32> to vector<8x1xf32>
    %cst_98 = arith.constant 3.200000e+01 : f32
    %221 = vector.broadcast %cst_98 : f32 to vector<8x1xf32>
    %222 = arith.divf %220, %221 : vector<8x1xf32>
    %223 = vector.broadcast %215 : vector<8x1xf32> to vector<8x32xf32>
    %224 = arith.subf %211, %223 : vector<8x32xf32>
    %cst_99 = arith.constant 9.99999974E-6 : f32
    %225 = vector.broadcast %cst_99 : f32 to vector<8x1xf32>
    %226 = arith.addf %222, %225 : vector<8x1xf32>
    %227 = math.rsqrt %226 : vector<8x1xf32>
    %228 = vector.broadcast %227 : vector<8x1xf32> to vector<8x32xf32>
    %229 = arith.mulf %224, %228 : vector<8x32xf32>
    %c0_100 = arith.constant 0 : index
    %c0_101 = arith.constant 0 : index
    %230 = vector.load %arg19[%c0_100, %c0_101] : memref<1x32xf32, #tpu.memory_space<vmem>>, vector<1x32xf32>
    %231 = vector.broadcast %230 : vector<1x32xf32> to vector<8x32xf32>
    %232 = arith.mulf %229, %231 : vector<8x32xf32>
    %c0_102 = arith.constant 0 : index
    %c0_103 = arith.constant 0 : index
    %233 = vector.load %arg20[%c0_102, %c0_103] : memref<1x32xf32, #tpu.memory_space<vmem>>, vector<1x32xf32>
    %234 = vector.broadcast %233 : vector<1x32xf32> to vector<8x32xf32>
    %235 = arith.addf %232, %234 : vector<8x32xf32>
    %236 = arith.truncf %235 : vector<8x32xf32> to vector<8x32xbf16>
    %c0_104 = arith.constant 0 : index
    %c0_105 = arith.constant 0 : index
    %237 = vector.load %arg21[%c0_104, %c0_105] : memref<32x64xbf16, #tpu.memory_space<vmem>>, vector<32x64xbf16>
    %cst_106 = arith.constant dense<0.000000e+00> : vector<8x64xf32>
    %238 = tpu.matmul %236, %237, %cst_106 {dimension_numbers = #tpu.dot_dimension_numbers<[1], [0], [0], [1], [0, 0, 1, 1], [], []>} : vector<8x32xbf16>, vector<32x64xbf16>, vector<8x64xf32> -> vector<8x64xf32>
    %c0_107 = arith.constant 0 : index
    %c0_108 = arith.constant 0 : index
    %239 = vector.load %arg22[%c0_107, %c0_108] : memref<1x64xf32, #tpu.memory_space<vmem>>, vector<1x64xf32>
    %240 = vector.broadcast %239 : vector<1x64xf32> to vector<8x64xf32>
    %241 = arith.addf %238, %240 : vector<8x64xf32>
    %cst_109 = arith.constant 0.000000e+00 : f32
    %242 = vector.broadcast %cst_109 : f32 to vector<8x64xf32>
    %243 = arith.maximumf %241, %242 : vector<8x64xf32>
    %244 = arith.truncf %243 : vector<8x64xf32> to vector<8x64xbf16>
    %c0_110 = arith.constant 0 : index
    %c0_111 = arith.constant 0 : index
    %245 = vector.load %arg23[%c0_110, %c0_111] : memref<64x32xbf16, #tpu.memory_space<vmem>>, vector<64x32xbf16>
    %cst_112 = arith.constant dense<0.000000e+00> : vector<8x32xf32>
    %246 = tpu.matmul %244, %245, %cst_112 {dimension_numbers = #tpu.dot_dimension_numbers<[1], [0], [0], [1], [0, 0, 1, 1], [], []>} : vector<8x64xbf16>, vector<64x32xbf16>, vector<8x32xf32> -> vector<8x32xf32>
    %c0_113 = arith.constant 0 : index
    %c0_114 = arith.constant 0 : index
    %247 = vector.load %arg24[%c0_113, %c0_114] : memref<1x32xf32, #tpu.memory_space<vmem>>, vector<1x32xf32>
    %248 = vector.broadcast %247 : vector<1x32xf32> to vector<8x32xf32>
    %249 = arith.addf %246, %248 : vector<8x32xf32>
    %250 = arith.addf %249, %235 : vector<8x32xf32>
    %cst_115 = arith.constant dense<0.000000e+00> : vector<8xf32>
    %251 = vector.multi_reduction <add>, %250, %cst_115 [1] : vector<8x32xf32> to vector<8xf32>
    %252 = vector.shape_cast %251 : vector<8xf32> to vector<8x1xf32>
    %cst_116 = arith.constant 3.200000e+01 : f32
    %253 = vector.broadcast %cst_116 : f32 to vector<8x1xf32>
    %254 = arith.divf %252, %253 : vector<8x1xf32>
    %255 = vector.broadcast %254 : vector<8x1xf32> to vector<8x32xf32>
    %256 = arith.subf %250, %255 : vector<8x32xf32>
    %257 = arith.mulf %256, %256 : vector<8x32xf32>
    %cst_117 = arith.constant dense<0.000000e+00> : vector<8xf32>
    %258 = vector.multi_reduction <add>, %257, %cst_117 [1] : vector<8x32xf32> to vector<8xf32>
    %259 = vector.shape_cast %258 : vector<8xf32> to vector<8x1xf32>
    %cst_118 = arith.constant 3.200000e+01 : f32
    %260 = vector.broadcast %cst_118 : f32 to vector<8x1xf32>
    %261 = arith.divf %259, %260 : vector<8x1xf32>
    %262 = vector.broadcast %254 : vector<8x1xf32> to vector<8x32xf32>
    %263 = arith.subf %250, %262 : vector<8x32xf32>
    %cst_119 = arith.constant 9.99999974E-6 : f32
    %264 = vector.broadcast %cst_119 : f32 to vector<8x1xf32>
    %265 = arith.addf %261, %264 : vector<8x1xf32>
    %266 = math.rsqrt %265 : vector<8x1xf32>
    %267 = vector.broadcast %266 : vector<8x1xf32> to vector<8x32xf32>
    %268 = arith.mulf %263, %267 : vector<8x32xf32>
    %c0_120 = arith.constant 0 : index
    %c0_121 = arith.constant 0 : index
    %269 = vector.load %arg25[%c0_120, %c0_121] : memref<1x32xf32, #tpu.memory_space<vmem>>, vector<1x32xf32>
    %270 = vector.broadcast %269 : vector<1x32xf32> to vector<8x32xf32>
    %271 = arith.mulf %268, %270 : vector<8x32xf32>
    %c0_122 = arith.constant 0 : index
    %c0_123 = arith.constant 0 : index
    %272 = vector.load %arg26[%c0_122, %c0_123] : memref<1x32xf32, #tpu.memory_space<vmem>>, vector<1x32xf32>
    %273 = vector.broadcast %272 : vector<1x32xf32> to vector<8x32xf32>
    %274 = arith.addf %271, %273 : vector<8x32xf32>
    %c0_124 = arith.constant 0 : index
    %c0_125 = arith.constant 0 : index
    %c0_126 = arith.constant 0 : index
    %275 = vector.load %arg27[%c0_124, %c0_125, %c0_126] : memref<1x8x32xf32, #tpu.memory_space<vmem>>, vector<1x8x32xf32>
    %276 = vector.shape_cast %275 : vector<1x8x32xf32> to vector<8x32xf32>
    %277 = vector.shape_cast %274 : vector<8x32xf32> to vector<1x8x32xf32>
    tpu.vector_store %arg27[%c0_124, %c0_125, %c0_126], %277 {strides = array<i32>} : memref<1x8x32xf32, #tpu.memory_space<vmem>>, vector<1x8x32xf32>,
    return
  }
  func.func @transform_0(%arg0: i32, %arg1: i32) -> (i32, i32, i32) {
    %c0_i32 = arith.constant 0 : i32
    %c0_i32_0 = arith.constant 0 : i32
    return %arg0, %arg1, %c0_i32 : i32, i32, i32
  }
  func.func @transform_1(%arg0: i32, %arg1: i32) -> (i32, i32, i32) {
    %c0_i32 = arith.constant 0 : i32
    %c0_i32_0 = arith.constant 0 : i32
    %c0_i32_1 = arith.constant 0 : i32
    return %arg0, %c0_i32, %c0_i32_0 : i32, i32, i32
  }
  func.func @transform_2(%arg0: i32, %arg1: i32) -> (i32, i32, i32) {
    %c0_i32 = arith.constant 0 : i32
    %c0_i32_0 = arith.constant 0 : i32
    %c0_i32_1 = arith.constant 0 : i32
    return %arg0, %c0_i32, %c0_i32_0 : i32, i32, i32
  }
  func.func @transform_3(%arg0: i32, %arg1: i32) -> (i32, i32) {
    %c0_i32 = arith.constant 0 : i32
    %c0_i32_0 = arith.constant 0 : i32
    %c0_i32_1 = arith.constant 0 : i32
    return %c0_i32, %c0_i32_0 : i32, i32
  }
  func.func @transform_4(%arg0: i32, %arg1: i32) -> (i32, i32) {
    %c0_i32 = arith.constant 0 : i32
    %c0_i32_0 = arith.constant 0 : i32
    %c0_i32_1 = arith.constant 0 : i32
    return %c0_i32, %c0_i32_0 : i32, i32
  }
  func.func @transform_5(%arg0: i32, %arg1: i32) -> (i32, i32) {
    %c0_i32 = arith.constant 0 : i32
    %c0_i32_0 = arith.constant 0 : i32
    %c0_i32_1 = arith.constant 0 : i32
    return %c0_i32, %c0_i32_0 : i32, i32
  }
  func.func @transform_6(%arg0: i32, %arg1: i32) -> (i32, i32) {
    %c0_i32 = arith.constant 0 : i32
    %c0_i32_0 = arith.constant 0 : i32
    %c0_i32_1 = arith.constant 0 : i32
    return %c0_i32, %c0_i32_0 : i32, i32
  }
  func.func @transform_7(%arg0: i32, %arg1: i32) -> (i32, i32) {
    %c0_i32 = arith.constant 0 : i32
    %c0_i32_0 = arith.constant 0 : i32
    %c0_i32_1 = arith.constant 0 : i32
    return %c0_i32, %c0_i32_0 : i32, i32
  }
  func.func @transform_8(%arg0: i32, %arg1: i32) -> (i32, i32) {
    %c0_i32 = arith.constant 0 : i32
    %c0_i32_0 = arith.constant 0 : i32
    %c0_i32_1 = arith.constant 0 : i32
    return %c0_i32, %c0_i32_0 : i32, i32
  }
  func.func @transform_9(%arg0: i32, %arg1: i32) -> (i32, i32) {
    %c0_i32 = arith.constant 0 : i32
    %c0_i32_0 = arith.constant 0 : i32
    %c0_i32_1 = arith.constant 0 : i32
    return %c0_i32, %c0_i32_0 : i32, i32
  }
  func.func @transform_10(%arg0: i32, %arg1: i32) -> (i32, i32) {
    %c0_i32 = arith.constant 0 : i32
    %c0_i32_0 = arith.constant 0 : i32
    %c0_i32_1 = arith.constant 0 : i32
    return %c0_i32, %c0_i32_0 : i32, i32
  }
  func.func @transform_11(%arg0: i32, %arg1: i32) -> (i32, i32) {
    %c0_i32 = arith.constant 0 : i32
    %c0_i32_0 = arith.constant 0 : i32
    %c0_i32_1 = arith.constant 0 : i32
    return %c0_i32, %c0_i32_0 : i32, i32
  }
  func.func @transform_12(%arg0: i32, %arg1: i32) -> (i32, i32) {
    %c0_i32 = arith.constant 0 : i32
    %c0_i32_0 = arith.constant 0 : i32
    %c0_i32_1 = arith.constant 0 : i32
    return %c0_i32, %c0_i32_0 : i32, i32
  }
  func.func @transform_13(%arg0: i32, %arg1: i32) -> (i32, i32) {
    %c0_i32 = arith.constant 0 : i32
    %c0_i32_0 = arith.constant 0 : i32
    %c0_i32_1 = arith.constant 0 : i32
    return %c0_i32, %c0_i32_0 : i32, i32
  }
  func.func @transform_14(%arg0: i32, %arg1: i32) -> (i32, i32) {
    %c0_i32 = arith.constant 0 : i32
    %c0_i32_0 = arith.constant 0 : i32
    %c0_i32_1 = arith.constant 0 : i32
    return %c0_i32, %c0_i32_0 : i32, i32
  }
  func.func @transform_15(%arg0: i32, %arg1: i32) -> (i32, i32) {
    %c0_i32 = arith.constant 0 : i32
    %c0_i32_0 = arith.constant 0 : i32
    %c0_i32_1 = arith.constant 0 : i32
    return %c0_i32, %c0_i32_0 : i32, i32
  }
  func.func @transform_16(%arg0: i32, %arg1: i32) -> (i32, i32) {
    %c0_i32 = arith.constant 0 : i32
    %c0_i32_0 = arith.constant 0 : i32
    %c0_i32_1 = arith.constant 0 : i32
    return %c0_i32, %c0_i32_0 : i32, i32
  }
  func.func @transform_17(%arg0: i32, %arg1: i32) -> (i32, i32) {
    %c0_i32 = arith.constant 0 : i32
    %c0_i32_0 = arith.constant 0 : i32
    %c0_i32_1 = arith.constant 0 : i32
    return %c0_i32, %c0_i32_0 : i32, i32
  }
  func.func @transform_18(%arg0: i32, %arg1: i32) -> (i32, i32) {
    %c0_i32 = arith.constant 0 : i32
    %c0_i32_0 = arith.constant 0 : i32
    %c0_i32_1 = arith.constant 0 : i32
    return %c0_i32, %c0_i32_0 : i32, i32
  }
  func.func @transform_19(%arg0: i32, %arg1: i32) -> (i32, i32) {
    %c0_i32 = arith.constant 0 : i32
    %c0_i32_0 = arith.constant 0 : i32
    %c0_i32_1 = arith.constant 0 : i32
    return %c0_i32, %c0_i32_0 : i32, i32
  }
  func.func @transform_20(%arg0: i32, %arg1: i32) -> (i32, i32) {
    %c0_i32 = arith.constant 0 : i32
    %c0_i32_0 = arith.constant 0 : i32
    %c0_i32_1 = arith.constant 0 : i32
    return %c0_i32, %c0_i32_0 : i32, i32
  }
  func.func @transform_21(%arg0: i32, %arg1: i32) -> (i32, i32) {
    %c0_i32 = arith.constant 0 : i32
    %c0_i32_0 = arith.constant 0 : i32
    %c0_i32_1 = arith.constant 0 : i32
    return %c0_i32, %c0_i32_0 : i32, i32
  }
  func.func @transform_22(%arg0: i32, %arg1: i32) -> (i32, i32) {
    %c0_i32 = arith.constant 0 : i32
    %c0_i32_0 = arith.constant 0 : i32
    %c0_i32_1 = arith.constant 0 : i32
    return %c0_i32, %c0_i32_0 : i32, i32
  }
  func.func @transform_23(%arg0: i32, %arg1: i32) -> (i32, i32) {
    %c0_i32 = arith.constant 0 : i32
    %c0_i32_0 = arith.constant 0 : i32
    %c0_i32_1 = arith.constant 0 : i32
    return %c0_i32, %c0_i32_0 : i32, i32
  }
  func.func @transform_24(%arg0: i32, %arg1: i32) -> (i32, i32) {
    %c0_i32 = arith.constant 0 : i32
    %c0_i32_0 = arith.constant 0 : i32
    %c0_i32_1 = arith.constant 0 : i32
    return %c0_i32, %c0_i32_0 : i32, i32
  }
  func.func @transform_25(%arg0: i32, %arg1: i32) -> (i32, i32, i32) {
    %c0_i32 = arith.constant 0 : i32
    %c0_i32_0 = arith.constant 0 : i32
    return %arg0, %arg1, %c0_i32 : i32, i32, i32
  }
}

</mosaic_0001>

<llo_original>
// kernel: decoder_forward.2
$region0: #{decoder_forward.2}
  #allocation0 [shape = 'u32[]', space=smem, size = 0x4, offset = 0x4, fixed_abs, tag = 'smem constant byte address 0x4 - core index']
  #allocation1 [shape = 'u32[72,128]{1,0:T(1,128)}', space=vmem, size = 0x9000, scoped, tag = 'internal scratch']
  %s0 = inlined_call_operand.vmem [shape: f32[2,8,32], index: 0, kind: input, shape index: {}, may-alias: {0,1}]
  %s1 = inlined_call_operand.vmem [shape: f32[2,8,32], index: 1, kind: input, shape index: {}, may-alias: {0,1}]
  %s2 = inlined_call_operand.vmem [shape: f32[2,8,32], index: 2, kind: input, shape index: {}]
  %s3 = inlined_call_operand.vmem [shape: bf16[32,32], index: 3, kind: input, shape index: {}]
  %s4 = inlined_call_operand.vmem [shape: f32[1,32], index: 4, kind: input, shape index: {}]
  %s5 = inlined_call_operand.vmem [shape: bf16[32,64], index: 5, kind: input, shape index: {}]
  %s6 = inlined_call_operand.vmem [shape: f32[1,64], index: 6, kind: input, shape index: {}]
  %s7 = inlined_call_operand.vmem [shape: bf16[32,32], index: 7, kind: input, shape index: {}]
  %s8 = inlined_call_operand.vmem [shape: f32[1,32], index: 8, kind: input, shape index: {}]
  %s9 = inlined_call_operand.vmem [shape: f32[1,32], index: 9, kind: input, shape index: {}]
  %s10 = inlined_call_operand.vmem [shape: f32[1,32], index: 10, kind: input, shape index: {}]
  %s11 = inlined_call_operand.vmem [shape: bf16[32,32], index: 11, kind: input, shape index: {}]
  %s12 = inlined_call_operand.vmem [shape: f32[1,32], index: 12, kind: input, shape index: {}]
  %s13 = inlined_call_operand.vmem [shape: bf16[32,64], index: 13, kind: input, shape index: {}]
  %s14 = inlined_call_operand.vmem [shape: f32[1,64], index: 14, kind: input, shape index: {}]
  %s15 = inlined_call_operand.vmem [shape: bf16[32,32], index: 15, kind: input, shape index: {}]
  %s16 = inlined_call_operand.vmem [shape: f32[1,32], index: 16, kind: input, shape index: {}]
  %s17 = inlined_call_operand.vmem [shape: f32[1,32], index: 17, kind: input, shape index: {}]
  %s18 = inlined_call_operand.vmem [shape: f32[1,32], index: 18, kind: input, shape index: {}]
  %s19 = inlined_call_operand.vmem [shape: bf16[32,64], index: 19, kind: input, shape index: {}]
  %s20 = inlined_call_operand.vmem [shape: f32[1,64], index: 20, kind: input, shape index: {}]
  %s21 = inlined_call_operand.vmem [shape: bf16[64,32], index: 21, kind: input, shape index: {}]
  %s22 = inlined_call_operand.vmem [shape: f32[1,32], index: 22, kind: input, shape index: {}]
  %s23 = inlined_call_operand.vmem [shape: f32[1,32], index: 23, kind: input, shape index: {}]
  %s24 = inlined_call_operand.vmem [shape: f32[1,32], index: 24, kind: input, shape index: {}]
  %s25 = inlined_call_operand.vmem [shape: f32[2,8,32], index: 25, kind: output, shape index: {}]
  %s26 = sld [smem:[#allocation0]]
  $region133: #{decoder_forward.2} parent=0
    _
  %s28 = ssub.s32 1, %s26
  %s29 = scalar_select 0, %s28, %s26
  loop: start=0, step=1, limit=4
  $region2: #{decoder_forward.2} parent=0 // loop_pre_header
    _
  $region3: #{decoder_forward.2} parent=0 // loop_header
    %s31 = sphi 0, %s35
    %p32 = scmp.ge.s32.totalorder %s31, 4
    %s38 = sphi 0, %s50
    %s39 = sphi 0, %s46
    %s40 = sphi 0, %s38
    %s41 = sphi 0, %s39
    %s42 = sphi 0, %s40
    %s43 = sphi 0, %s41
    %s55 = sphi 0, %s57
    %s58 = sphi 0, %s55
    %s59 = sphi 0, %s58
    %s75 = sphi 0, %s59
    %s81 = sphi 0, %s83
    %s84 = sphi 0, %s81
    %s85 = sphi 0, %s84
    %s101 = sphi 0, %s85
    %s107 = sphi 0, %s109
    %s110 = sphi 0, %s107
    %s111 = sphi 0, %s110
    %s127 = sphi 0, %s111
    %s131 = sphi 0, %s131
    %s133 = sphi 0, %s131
    %s134 = sphi 0, %s133
    %s148 = sphi 0, %s134
    %s152 = sphi 0, %s152
    %s154 = sphi 0, %s152
    %s155 = sphi 0, %s154
    %s169 = sphi 0, %s155
    %s173 = sphi 0, %s173
    %s175 = sphi 0, %s173
    %s176 = sphi 0, %s175
    %s190 = sphi 0, %s176
    %s194 = sphi 0, %s194
    %s196 = sphi 0, %s194
    %s197 = sphi 0, %s196
    %s211 = sphi 0, %s197
    %s215 = sphi 0, %s215
    %s217 = sphi 0, %s215
    %s218 = sphi 0, %s217
    %s232 = sphi 0, %s218
    %s236 = sphi 0, %s236
    %s238 = sphi 0, %s236
    %s239 = sphi 0, %s238
    %s253 = sphi 0, %s239
    %s257 = sphi 0, %s257
    %s259 = sphi 0, %s257
    %s260 = sphi 0, %s259
    %s274 = sphi 0, %s260
    %s278 = sphi 0, %s278
    %s280 = sphi 0, %s278
    %s281 = sphi 0, %s280
    %s295 = sphi 0, %s281
    %s299 = sphi 0, %s299
    %s301 = sphi 0, %s299
    %s302 = sphi 0, %s301
    %s316 = sphi 0, %s302
    %s320 = sphi 0, %s320
    %s322 = sphi 0, %s320
    %s323 = sphi 0, %s322
    %s337 = sphi 0, %s323
    %s341 = sphi 0, %s341
    %s343 = sphi 0, %s341
    %s344 = sphi 0, %s343
    %s358 = sphi 0, %s344
    %s362 = sphi 0, %s362
    %s364 = sphi 0, %s362
    %s365 = sphi 0, %s364
    %s379 = sphi 0, %s365
    %s383 = sphi 0, %s383
    %s385 = sphi 0, %s383
    %s386 = sphi 0, %s385
    %s400 = sphi 0, %s386
    %s404 = sphi 0, %s404
    %s406 = sphi 0, %s404
    %s407 = sphi 0, %s406
    %s421 = sphi 0, %s407
    %s425 = sphi 0, %s425
    %s427 = sphi 0, %s425
    %s428 = sphi 0, %s427
    %s442 = sphi 0, %s428
    %s446 = sphi 0, %s446
    %s448 = sphi 0, %s446
    %s449 = sphi 0, %s448
    %s463 = sphi 0, %s449
    %s467 = sphi 0, %s467
    %s469 = sphi 0, %s467
    %s470 = sphi 0, %s469
    %s484 = sphi 0, %s470
    %s488 = sphi 0, %s488
    %s490 = sphi 0, %s488
    %s491 = sphi 0, %s490
    %s505 = sphi 0, %s491
    %s509 = sphi 0, %s509
    %s511 = sphi 0, %s509
    %s512 = sphi 0, %s511
    %s526 = sphi 0, %s512
    %s530 = sphi 0, %s530
    %s532 = sphi 0, %s530
    %s533 = sphi 0, %s532
    %s547 = sphi 0, %s533
    %s551 = sphi 0, %s551
    %s553 = sphi 0, %s551
    %s554 = sphi 0, %s553
    %s568 = sphi 0, %s554
    %s572 = sphi 0, %s572
    %s574 = sphi 0, %s572
    %s575 = sphi 0, %s574
    %s589 = sphi 0, %s575
    %s597 = sphi 0, %s599
    %s600 = sphi 0, %s597
    %s601 = sphi 0, %s600
    %s617 = sphi 0, %s601
  $region4: #{decoder_forward.2} parent=0 // loop_header_branch
    %34 = sbr.rel (%p32) target = $region8
  $region5: #{decoder_forward.2} parent=0 // loop_body
    %s36 = ssub.s32 %s31, 1
    %s37 = ssub.s32 %s31, 2
    %s44 = sadd.s32 1, %s39
    %p45 = scmp.ge.s32.totalorder %s44, 1
    %s46 = scalar_select %p45, 0, %s44
    %s47 = sadd.s32 1, %s38
    %s48 = scalar_select %p45, %s47, %s38
    %p49 = scmp.ge.s32.totalorder %s48, 2
    %s50 = scalar_select %p49, 0, %s48
    %s51 = ssub.s32 %s38, %s50
    %s52 = ssub.s32 %s39, %s46
    %s53 = sor.u32 %s51, %s52
    %p54 = scmp.eq.s32.totalorder %s53, 0
    %s56 = sadd.s32 %s55, 1
    %s57 = scalar_select %p54, %s55, %s56
    %p60 = pneg %p54
    %p61 = scmp.eq.s32.totalorder %s31, 1
    %p62 = por %p60, %p61
    %p63 = scmp.ne.s32.totalorder %s55, %s58
    %p64 = scmp.eq.s32.totalorder %s31, 0
    %p65 = por %p63, %p64
    %p66 = scmp.ne.s32.totalorder %s55, %s58
    %p67 = scmp.eq.s32.totalorder %s36, 1
    %p68 = por %p66, %p67
    %p69 = scmp.ne.s32.totalorder %s58, %s59
    %p70 = scmp.eq.s32.totalorder %s36, 0
    %p71 = por %p69, %p70
    %p72 = scmp.ne.s32.totalorder %s58, %s59
    %p73 = scmp.eq.s32.totalorder %s37, 1
    %p74 = por %p72, %p73
    %p76 = scmp.ne.s32.totalorder %s59, %s75
    %p77 = scmp.eq.s32.totalorder %s37, 0
    %p78 = por %p76, %p77
    %s79 = ssub.s32 %s38, %s50
    %p80 = scmp.eq.s32.totalorder %s79, 0
    %s82 = sadd.s32 %s81, 1
    %s83 = scalar_select %p80, %s81, %s82
    %p86 = pneg %p80
    %p87 = scmp.eq.s32.totalorder %s31, 1
    %p88 = por %p86, %p87
    %p89 = scmp.ne.s32.totalorder %s81, %s84
    %p90 = scmp.eq.s32.totalorder %s31, 0
    %p91 = por %p89, %p90
    %p92 = scmp.ne.s32.totalorder %s81, %s84
    %p93 = scmp.eq.s32.totalorder %s36, 1
    %p94 = por %p92, %p93
    %p95 = scmp.ne.s32.totalorder %s84, %s85
    %p96 = scmp.eq.s32.totalorder %s36, 0
    %p97 = por %p95, %p96
    %p98 = scmp.ne.s32.totalorder %s84, %s85
    %p99 = scmp.eq.s32.totalorder %s37, 1
    %p100 = por %p98, %p99
    %p102 = scmp.ne.s32.totalorder %s85, %s101
    %p103 = scmp.eq.s32.totalorder %s37, 0
    %p104 = por %p102, %p103
    %s105 = ssub.s32 %s38, %s50
    %p106 = scmp.eq.s32.totalorder %s105, 0
    %s108 = sadd.s32 %s107, 1
    %s109 = scalar_select %p106, %s107, %s108
    %p112 = pneg %p106
    %p113 = scmp.eq.s32.totalorder %s31, 1
    %p114 = por %p112, %p113
    %p115 = scmp.ne.s32.totalorder %s107, %s110
    %p116 = scmp.eq.s32.totalorder %s31, 0
    %p117 = por %p115, %p116
    %p118 = scmp.ne.s32.totalorder %s107, %s110
    %p119 = scmp.eq.s32.totalorder %s36, 1
    %p120 = por %p118, %p119
    %p121 = scmp.ne.s32.totalorder %s110, %s111
    %p122 = scmp.eq.s32.totalorder %s36, 0
    %p123 = por %p121, %p122
    %p124 = scmp.ne.s32.totalorder %s110, %s111
    %p125 = scmp.eq.s32.totalorder %s37, 1
    %p126 = por %p124, %p125
    %p128 = scmp.ne.s32.totalorder %s111, %s127
    %p129 = scmp.eq.s32.totalorder %s37, 0
    %p130 = por %p128, %p129
    %s132 = sadd.s32 %s131, 1
    %p135 = scmp.eq.s32.totalorder %s31, 1
    %p136 = scmp.ne.s32.totalorder %s131, %s133
    %p137 = scmp.eq.s32.totalorder %s31, 0
    %p138 = por %p136, %p137
    %p139 = scmp.ne.s32.totalorder %s131, %s133
    %p140 = scmp.eq.s32.totalorder %s36, 1
    %p141 = por %p139, %p140
    %p142 = scmp.ne.s32.totalorder %s133, %s134
    %p143 = scmp.eq.s32.totalorder %s36, 0
    %p144 = por %p142, %p143
    %p145 = scmp.ne.s32.totalorder %s133, %s134
    %p146 = scmp.eq.s32.totalorder %s37, 1
    %p147 = por %p145, %p146
    %p149 = scmp.ne.s32.totalorder %s134, %s148
    %p150 = scmp.eq.s32.totalorder %s37, 0
    %p151 = por %p149, %p150
    %s153 = sadd.s32 %s152, 1
    %p156 = scmp.eq.s32.totalorder %s31, 1
    %p157 = scmp.ne.s32.totalorder %s152, %s154
    %p158 = scmp.eq.s32.totalorder %s31, 0
    %p159 = por %p157, %p158
    %p160 = scmp.ne.s32.totalorder %s152, %s154
    %p161 = scmp.eq.s32.totalorder %s36, 1
    %p162 = por %p160, %p161
    %p163 = scmp.ne.s32.totalorder %s154, %s155
    %p164 = scmp.eq.s32.totalorder %s36, 0
    %p165 = por %p163, %p164
    %p166 = scmp.ne.s32.totalorder %s154, %s155
    %p167 = scmp.eq.s32.totalorder %s37, 1
    %p168 = por %p166, %p167
    %p170 = scmp.ne.s32.totalorder %s155, %s169
    %p171 = scmp.eq.s32.totalorder %s37, 0
    %p172 = por %p170, %p171
    %s174 = sadd.s32 %s173, 1
    %p177 = scmp.eq.s32.totalorder %s31, 1
    %p178 = scmp.ne.s32.totalorder %s173, %s175
    %p179 = scmp.eq.s32.totalorder %s31, 0
    %p180 = por %p178, %p179
    %p181 = scmp.ne.s32.totalorder %s173, %s175
    %p182 = scmp.eq.s32.totalorder %s36, 1
    %p183 = por %p181, %p182
    %p184 = scmp.ne.s32.totalorder %s175, %s176
    %p185 = scmp.eq.s32.totalorder %s36, 0
    %p186 = por %p184, %p185
    %p187 = scmp.ne.s32.totalorder %s175, %s176
    %p188 = scmp.eq.s32.totalorder %s37, 1
    %p189 = por %p187, %p188
    %p191 = scmp.ne.s32.totalorder %s176, %s190
    %p192 = scmp.eq.s32.totalorder %s37, 0
    %p193 = por %p191, %p192
    %s195 = sadd.s32 %s194, 1
    %p198 = scmp.eq.s32.totalorder %s31, 1
    %p199 = scmp.ne.s32.totalorder %s194, %s196
    %p200 = scmp.eq.s32.totalorder %s31, 0
    %p201 = por %p199, %p200
    %p202 = scmp.ne.s32.totalorder %s194, %s196
    %p203 = scmp.eq.s32.totalorder %s36, 1
    %p204 = por %p202, %p203
    %p205 = scmp.ne.s32.totalorder %s196, %s197
    %p206 = scmp.eq.s32.totalorder %s36, 0
    %p207 = por %p205, %p206
    %p208 = scmp.ne.s32.totalorder %s196, %s197
    %p209 = scmp.eq.s32.totalorder %s37, 1
    %p210 = por %p208, %p209
    %p212 = scmp.ne.s32.totalorder %s197, %s211
    %p213 = scmp.eq.s32.totalorder %s37, 0
    %p214 = por %p212, %p213
    %s216 = sadd.s32 %s215, 1
    %p219 = scmp.eq.s32.totalorder %s31, 1
    %p220 = scmp.ne.s32.totalorder %s215, %s217
    %p221 = scmp.eq.s32.totalorder %s31, 0
    %p222 = por %p220, %p221
    %p223 = scmp.ne.s32.totalorder %s215, %s217
    %p224 = scmp.eq.s32.totalorder %s36, 1
    %p225 = por %p223, %p224
    %p226 = scmp.ne.s32.totalorder %s217, %s218
    %p227 = scmp.eq.s32.totalorder %s36, 0
    %p228 = por %p226, %p227
    %p229 = scmp.ne.s32.totalorder %s217, %s218
    %p230 = scmp.eq.s32.totalorder %s37, 1
    %p231 = por %p229, %p230
    %p233 = scmp.ne.s32.totalorder %s218, %s232
    %p234 = scmp.eq.s32.totalorder %s37, 0
    %p235 = por %p233, %p234
    %s237 = sadd.s32 %s236, 1
    %p240 = scmp.eq.s32.totalorder %s31, 1
    %p241 = scmp.ne.s32.totalorder %s236, %s238
    %p242 = scmp.eq.s32.totalorder %s31, 0
    %p243 = por %p241, %p242
    %p244 = scmp.ne.s32.totalorder %s236, %s238
    %p245 = scmp.eq.s32.totalorder %s36, 1
    %p246 = por %p244, %p245
    %p247 = scmp.ne.s32.totalorder %s238, %s239
    %p248 = scmp.eq.s32.totalorder %s36, 0
    %p249 = por %p247, %p248
    %p250 = scmp.ne.s32.totalorder %s238, %s239
    %p251 = scmp.eq.s32.totalorder %s37, 1
    %p252 = por %p250, %p251
    %p254 = scmp.ne.s32.totalorder %s239, %s253
    %p255 = scmp.eq.s32.totalorder %s37, 0
    %p256 = por %p254, %p255
    %s258 = sadd.s32 %s257, 1
    %p261 = scmp.eq.s32.totalorder %s31, 1
    %p262 = scmp.ne.s32.totalorder %s257, %s259
    %p263 = scmp.eq.s32.totalorder %s31, 0
    %p264 = por %p262, %p263
    %p265 = scmp.ne.s32.totalorder %s257, %s259
    %p266 = scmp.eq.s32.totalorder %s36, 1
    %p267 = por %p265, %p266
    %p268 = scmp.ne.s32.totalorder %s259, %s260
    %p269 = scmp.eq.s32.totalorder %s36, 0
    %p270 = por %p268, %p269
    %p271 = scmp.ne.s32.totalorder %s259, %s260
    %p272 = scmp.eq.s32.totalorder %s37, 1
    %p273 = por %p271, %p272
    %p275 = scmp.ne.s32.totalorder %s260, %s274
    %p276 = scmp.eq.s32.totalorder %s37, 0
    %p277 = por %p275, %p276
    %s279 = sadd.s32 %s278, 1
    %p282 = scmp.eq.s32.totalorder %s31, 1
    %p283 = scmp.ne.s32.totalorder %s278, %s280
    %p284 = scmp.eq.s32.totalorder %s31, 0
    %p285 = por %p283, %p284
    %p286 = scmp.ne.s32.totalorder %s278, %s280
    %p287 = scmp.eq.s32.totalorder %s36, 1
    %p288 = por %p286, %p287
    %p289 = scmp.ne.s32.totalorder %s280, %s281
    %p290 = scmp.eq.s32.totalorder %s36, 0
    %p291 = por %p289, %p290
    %p292 = scmp.ne.s32.totalorder %s280, %s281
    %p293 = scmp.eq.s32.totalorder %s37, 1
    %p294 = por %p292, %p293
    %p296 = scmp.ne.s32.totalorder %s281, %s295
    %p297 = scmp.eq.s32.totalorder %s37, 0
    %p298 = por %p296, %p297
    %s300 = sadd.s32 %s299, 1
    %p303 = scmp.eq.s32.totalorder %s31, 1
    %p304 = scmp.ne.s32.totalorder %s299, %s301
    %p305 = scmp.eq.s32.totalorder %s31, 0
    %p306 = por %p304, %p305
    %p307 = scmp.ne.s32.totalorder %s299, %s301
    %p308 = scmp.eq.s32.totalorder %s36, 1
    %p309 = por %p307, %p308
    %p310 = scmp.ne.s32.totalorder %s301, %s302
    %p311 = scmp.eq.s32.totalorder %s36, 0
    %p312 = por %p310, %p311
    %p313 = scmp.ne.s32.totalorder %s301, %s302
    %p314 = scmp.eq.s32.totalorder %s37, 1
    %p315 = por %p313, %p314
    %p317 = scmp.ne.s32.totalorder %s302, %s316
    %p318 = scmp.eq.s32.totalorder %s37, 0
    %p319 = por %p317, %p318
    %s321 = sadd.s32 %s320, 1
    %p324 = scmp.eq.s32.totalorder %s31, 1
    %p325 = scmp.ne.s32.totalorder %s320, %s322
    %p326 = scmp.eq.s32.totalorder %s31, 0
    %p327 = por %p325, %p326
    %p328 = scmp.ne.s32.totalorder %s320, %s322
    %p329 = scmp.eq.s32.totalorder %s36, 1
    %p330 = por %p328, %p329
    %p331 = scmp.ne.s32.totalorder %s322, %s323
    %p332 = scmp.eq.s32.totalorder %s36, 0
    %p333 = por %p331, %p332
    %p334 = scmp.ne.s32.totalorder %s322, %s323
    %p335 = scmp.eq.s32.totalorder %s37, 1
    %p336 = por %p334, %p335
    %p338 = scmp.ne.s32.totalorder %s323, %s337
    %p339 = scmp.eq.s32.totalorder %s37, 0
    %p340 = por %p338, %p339
    %s342 = sadd.s32 %s341, 1
    %p345 = scmp.eq.s32.totalorder %s31, 1
    %p346 = scmp.ne.s32.totalorder %s341, %s343
    %p347 = scmp.eq.s32.totalorder %s31, 0
    %p348 = por %p346, %p347
    %p349 = scmp.ne.s32.totalorder %s341, %s343
    %p350 = scmp.eq.s32.totalorder %s36, 1
    %p351 = por %p349, %p350
    %p352 = scmp.ne.s32.totalorder %s343, %s344
    %p353 = scmp.eq.s32.totalorder %s36, 0
    %p354 = por %p352, %p353
    %p355 = scmp.ne.s32.totalorder %s343, %s344
    %p356 = scmp.eq.s32.totalorder %s37, 1
    %p357 = por %p355, %p356
    %p359 = scmp.ne.s32.totalorder %s344, %s358
    %p360 = scmp.eq.s32.totalorder %s37, 0
    %p361 = por %p359, %p360
    %s363 = sadd.s32 %s362, 1
    %p366 = scmp.eq.s32.totalorder %s31, 1
    %p367 = scmp.ne.s32.totalorder %s362, %s364
    %p368 = scmp.eq.s32.totalorder %s31, 0
    %p369 = por %p367, %p368
    %p370 = scmp.ne.s32.totalorder %s362, %s364
    %p371 = scmp.eq.s32.totalorder %s36, 1
    %p372 = por %p370, %p371
    %p373 = scmp.ne.s32.totalorder %s364, %s365
    %p374 = scmp.eq.s32.totalorder %s36, 0
    %p375 = por %p373, %p374
    %p376 = scmp.ne.s32.totalorder %s364, %s365
    %p377 = scmp.eq.s32.totalorder %s37, 1
    %p378 = por %p376, %p377
    %p380 = scmp.ne.s32.totalorder %s365, %s379
    %p381 = scmp.eq.s32.totalorder %s37, 0
    %p382 = por %p380, %p381
    %s384 = sadd.s32 %s383, 1
    %p387 = scmp.eq.s32.totalorder %s31, 1
    %p388 = scmp.ne.s32.totalorder %s383, %s385
    %p389 = scmp.eq.s32.totalorder %s31, 0
    %p390 = por %p388, %p389
    %p391 = scmp.ne.s32.totalorder %s383, %s385
    %p392 = scmp.eq.s32.totalorder %s36, 1
    %p393 = por %p391, %p392
    %p394 = scmp.ne.s32.totalorder %s385, %s386
    %p395 = scmp.eq.s32.totalorder %s36, 0
    %p396 = por %p394, %p395
    %p397 = scmp.ne.s32.totalorder %s385, %s386
    %p398 = scmp.eq.s32.totalorder %s37, 1
    %p399 = por %p397, %p398
    %p401 = scmp.ne.s32.totalorder %s386, %s400
    %p402 = scmp.eq.s32.totalorder %s37, 0
    %p403 = por %p401, %p402
    %s405 = sadd.s32 %s404, 1
    %p408 = scmp.eq.s32.totalorder %s31, 1
    %p409 = scmp.ne.s32.totalorder %s404, %s406
    %p410 = scmp.eq.s32.totalorder %s31, 0
    %p411 = por %p409, %p410
    %p412 = scmp.ne.s32.totalorder %s404, %s406
    %p413 = scmp.eq.s32.totalorder %s36, 1
    %p414 = por %p412, %p413
    %p415 = scmp.ne.s32.totalorder %s406, %s407
    %p416 = scmp.eq.s32.totalorder %s36, 0
    %p417 = por %p415, %p416
    %p418 = scmp.ne.s32.totalorder %s406, %s407
    %p419 = scmp.eq.s32.totalorder %s37, 1
    %p420 = por %p418, %p419
    %p422 = scmp.ne.s32.totalorder %s407, %s421
    %p423 = scmp.eq.s32.totalorder %s37, 0
    %p424 = por %p422, %p423
    %s426 = sadd.s32 %s425, 1
    %p429 = scmp.eq.s32.totalorder %s31, 1
    %p430 = scmp.ne.s32.totalorder %s425, %s427
    %p431 = scmp.eq.s32.totalorder %s31, 0
    %p432 = por %p430, %p431
    %p433 = scmp.ne.s32.totalorder %s425, %s427
    %p434 = scmp.eq.s32.totalorder %s36, 1
    %p435 = por %p433, %p434
    %p436 = scmp.ne.s32.totalorder %s427, %s428
    %p437 = scmp.eq.s32.totalorder %s36, 0
    %p438 = por %p436, %p437
    %p439 = scmp.ne.s32.totalorder %s427, %s428
    %p440 = scmp.eq.s32.totalorder %s37, 1
    %p441 = por %p439, %p440
    %p443 = scmp.ne.s32.totalorder %s428, %s442
    %p444 = scmp.eq.s32.totalorder %s37, 0
    %p445 = por %p443, %p444
    %s447 = sadd.s32 %s446, 1
    %p450 = scmp.eq.s32.totalorder %s31, 1
    %p451 = scmp.ne.s32.totalorder %s446, %s448
    %p452 = scmp.eq.s32.totalorder %s31, 0
    %p453 = por %p451, %p452
    %p454 = scmp.ne.s32.totalorder %s446, %s448
    %p455 = scmp.eq.s32.totalorder %s36, 1
    %p456 = por %p454, %p455
    %p457 = scmp.ne.s32.totalorder %s448, %s449
    %p458 = scmp.eq.s32.totalorder %s36, 0
    %p459 = por %p457, %p458
    %p460 = scmp.ne.s32.totalorder %s448, %s449
    %p461 = scmp.eq.s32.totalorder %s37, 1
    %p462 = por %p460, %p461
    %p464 = scmp.ne.s32.totalorder %s449, %s463
    %p465 = scmp.eq.s32.totalorder %s37, 0
    %p466 = por %p464, %p465
    %s468 = sadd.s32 %s467, 1
    %p471 = scmp.eq.s32.totalorder %s31, 1
    %p472 = scmp.ne.s32.totalorder %s467, %s469
    %p473 = scmp.eq.s32.totalorder %s31, 0
    %p474 = por %p472, %p473
    %p475 = scmp.ne.s32.totalorder %s467, %s469
    %p476 = scmp.eq.s32.totalorder %s36, 1
    %p477 = por %p475, %p476
    %p478 = scmp.ne.s32.totalorder %s469, %s470
    %p479 = scmp.eq.s32.totalorder %s36, 0
    %p480 = por %p478, %p479
    %p481 = scmp.ne.s32.totalorder %s469, %s470
    %p482 = scmp.eq.s32.totalorder %s37, 1
    %p483 = por %p481, %p482
    %p485 = scmp.ne.s32.totalorder %s470, %s484
    %p486 = scmp.eq.s32.totalorder %s37, 0
    %p487 = por %p485, %p486
    %s489 = sadd.s32 %s488, 1
    %p492 = scmp.eq.s32.totalorder %s31, 1
    %p493 = scmp.ne.s32.totalorder %s488, %s490
    %p494 = scmp.eq.s32.totalorder %s31, 0
    %p495 = por %p493, %p494
    %p496 = scmp.ne.s32.totalorder %s488, %s490
    %p497 = scmp.eq.s32.totalorder %s36, 1
    %p498 = por %p496, %p497
    %p499 = scmp.ne.s32.totalorder %s490, %s491
    %p500 = scmp.eq.s32.totalorder %s36, 0
    %p501 = por %p499, %p500
    %p502 = scmp.ne.s32.totalorder %s490, %s491
    %p503 = scmp.eq.s32.totalorder %s37, 1
    %p504 = por %p502, %p503
    %p506 = scmp.ne.s32.totalorder %s491, %s505
    %p507 = scmp.eq.s32.totalorder %s37, 0
    %p508 = por %p506, %p507
    %s510 = sadd.s32 %s509, 1
    %p513 = scmp.eq.s32.totalorder %s31, 1
    %p514 = scmp.ne.s32.totalorder %s509, %s511
    %p515 = scmp.eq.s32.totalorder %s31, 0
    %p516 = por %p514, %p515
    %p517 = scmp.ne.s32.totalorder %s509, %s511
    %p518 = scmp.eq.s32.totalorder %s36, 1
    %p519 = por %p517, %p518
    %p520 = scmp.ne.s32.totalorder %s511, %s512
    %p521 = scmp.eq.s32.totalorder %s36, 0
    %p522 = por %p520, %p521
    %p523 = scmp.ne.s32.totalorder %s511, %s512
    %p524 = scmp.eq.s32.totalorder %s37, 1
    %p525 = por %p523, %p524
    %p527 = scmp.ne.s32.totalorder %s512, %s526
    %p528 = scmp.eq.s32.totalorder %s37, 0
    %p529 = por %p527, %p528
    %s531 = sadd.s32 %s530, 1
    %p534 = scmp.eq.s32.totalorder %s31, 1
    %p535 = scmp.ne.s32.totalorder %s530, %s532
    %p536 = scmp.eq.s32.totalorder %s31, 0
    %p537 = por %p535, %p536
    %p538 = scmp.ne.s32.totalorder %s530, %s532
    %p539 = scmp.eq.s32.totalorder %s36, 1
    %p540 = por %p538, %p539
    %p541 = scmp.ne.s32.totalorder %s532, %s533
    %p542 = scmp.eq.s32.totalorder %s36, 0
    %p543 = por %p541, %p542
    %p544 = scmp.ne.s32.totalorder %s532, %s533
    %p545 = scmp.eq.s32.totalorder %s37, 1
    %p546 = por %p544, %p545
    %p548 = scmp.ne.s32.totalorder %s533, %s547
    %p549 = scmp.eq.s32.totalorder %s37, 0
    %p550 = por %p548, %p549
    %s552 = sadd.s32 %s551, 1
    %p555 = scmp.eq.s32.totalorder %s31, 1
    %p556 = scmp.ne.s32.totalorder %s551, %s553
    %p557 = scmp.eq.s32.totalorder %s31, 0
    %p558 = por %p556, %p557
    %p559 = scmp.ne.s32.totalorder %s551, %s553
    %p560 = scmp.eq.s32.totalorder %s36, 1
    %p561 = por %p559, %p560
    %p562 = scmp.ne.s32.totalorder %s553, %s554
    %p563 = scmp.eq.s32.totalorder %s36, 0
    %p564 = por %p562, %p563
    %p565 = scmp.ne.s32.totalorder %s553, %s554
    %p566 = scmp.eq.s32.totalorder %s37, 1
    %p567 = por %p565, %p566
    %p569 = scmp.ne.s32.totalorder %s554, %s568
    %p570 = scmp.eq.s32.totalorder %s37, 0
    %p571 = por %p569, %p570
    %s573 = sadd.s32 %s572, 1
    %p576 = scmp.eq.s32.totalorder %s31, 1
    %p577 = scmp.ne.s32.totalorder %s572, %s574
    %p578 = scmp.eq.s32.totalorder %s31, 0
    %p579 = por %p577, %p578
    %p580 = scmp.ne.s32.totalorder %s572, %s574
    %p581 = scmp.eq.s32.totalorder %s36, 1
    %p582 = por %p580, %p581
    %p583 = scmp.ne.s32.totalorder %s574, %s575
    %p584 = scmp.eq.s32.totalorder %s36, 0
    %p585 = por %p583, %p584
    %p586 = scmp.ne.s32.totalorder %s574, %s575
    %p587 = scmp.eq.s32.totalorder %s37, 1
    %p588 = por %p586, %p587
    %p590 = scmp.ne.s32.totalorder %s575, %s589
    %p591 = scmp.eq.s32.totalorder %s37, 0
    %p592 = por %p590, %p591
    %s593 = ssub.s32 %s38, %s50
    %s594 = ssub.s32 %s39, %s46
    %s595 = sor.u32 %s593, %s594
    %p596 = scmp.eq.s32.totalorder %s595, 0
    %s598 = sadd.s32 %s597, 1
    %s599 = scalar_select %p596, %s597, %s598
    %p602 = pneg %p596
    %p603 = scmp.eq.s32.totalorder %s31, 1
    %p604 = por %p602, %p603
    %p605 = scmp.ne.s32.totalorder %s597, %s600
    %p606 = scmp.eq.s32.totalorder %s31, 0
    %p607 = por %p605, %p606
    %p608 = scmp.ne.s32.totalorder %s597, %s600
    %p609 = scmp.eq.s32.totalorder %s36, 1
    %p610 = por %p608, %p609
    %p611 = scmp.ne.s32.totalorder %s600, %s601
    %p612 = scmp.eq.s32.totalorder %s36, 0
    %p613 = por %p611, %p612
    %p614 = scmp.ne.s32.totalorder %s600, %s601
    %p615 = scmp.eq.s32.totalorder %s37, 1
    %p616 = por %p614, %p615
    %p618 = scmp.ne.s32.totalorder %s601, %s617
    %p619 = scmp.eq.s32.totalorder %s37, 0
    %p620 = por %p618, %p619
    %p621 = scmp.le.s32.totalorder 1, %s31
    %p622 = scmp.lt.s32.totalorder %s31, 3
    %p623 = pnand %p621, %p622
    %p624 = pneg %p623
    // Predicated region
    $region9: #{decoder_forward.2} parent=5 // pred_check
      _
    $region10: #{decoder_forward.2} parent=5 // pred_check_branch
      %626 = sbr.rel (%p623) target = $region12
    $region11: #{decoder_forward.2} parent=5 // pred_region
      %s627 = ssub.s32 %s31, 1
      // Predicated region
      $region13: #{decoder_forward.2} parent=11 // pred_check
        %p628 = pneg %p144
      $region14: #{decoder_forward.2} parent=11 // pred_check_branch
        %630 = sbr.rel (%p628) target = $region16
      $region15: #{decoder_forward.2} parent=11 // pred_region
        _
      $region16: #{decoder_forward.2} parent=11 // pred_fallthru
        _
      // Predicated region
      $region17: #{decoder_forward.2} parent=11 // pred_check
        %p631 = pneg %p165
      $region18: #{decoder_forward.2} parent=11 // pred_check_branch
        %633 = sbr.rel (%p631) target = $region20
      $region19: #{decoder_forward.2} parent=11 // pred_region
        _
      $region20: #{decoder_forward.2} parent=11 // pred_fallthru
        _
      // Predicated region
      $region21: #{decoder_forward.2} parent=11 // pred_check
        %p634 = pneg %p186
      $region22: #{decoder_forward.2} parent=11 // pred_check_branch
        %636 = sbr.rel (%p634) target = $region24
      $region23: #{decoder_forward.2} parent=11 // pred_region
        _
      $region24: #{decoder_forward.2} parent=11 // pred_fallthru
        _
      // Predicated region
      $region25: #{decoder_forward.2} parent=11 // pred_check
        %p637 = pneg %p207
      $region26: #{decoder_forward.2} parent=11 // pred_check_branch
        %639 = sbr.rel (%p637) target = $region28
      $region27: #{decoder_forward.2} parent=11 // pred_region
        _
      $region28: #{decoder_forward.2} parent=11 // pred_fallthru
        _
      // Predicated region
      $region29: #{decoder_forward.2} parent=11 // pred_check
        %p640 = pneg %p228
      $region30: #{decoder_forward.2} parent=11 // pred_check_branch
        %642 = sbr.rel (%p640) target = $region32
      $region31: #{decoder_forward.2} parent=11 // pred_region
        _
      $region32: #{decoder_forward.2} parent=11 // pred_fallthru
        _
      // Predicated region
      $region33: #{decoder_forward.2} parent=11 // pred_check
        %p643 = pneg %p249
      $region34: #{decoder_forward.2} parent=11 // pred_check_branch
        %645 = sbr.rel (%p643) target = $region36
      $region35: #{decoder_forward.2} parent=11 // pred_region
        _
      $region36: #{decoder_forward.2} parent=11 // pred_fallthru
        _
      // Predicated region
      $region37: #{decoder_forward.2} parent=11 // pred_check
        %p646 = pneg %p270
      $region38: #{decoder_forward.2} parent=11 // pred_check_branch
        %648 = sbr.rel (%p646) target = $region40
      $region39: #{decoder_forward.2} parent=11 // pred_region
        _
      $region40: #{decoder_forward.2} parent=11 // pred_fallthru
        _
      // Predicated region
      $region41: #{decoder_forward.2} parent=11 // pred_check
        %p649 = pneg %p291
      $region42: #{decoder_forward.2} parent=11 // pred_check_branch
        %651 = sbr.rel (%p649) target = $region44
      $region43: #{decoder_forward.2} parent=11 // pred_region
        _
      $region44: #{decoder_forward.2} parent=11 // pred_fallthru
        _
      // Predicated region
      $region45: #{decoder_forward.2} parent=11 // pred_check
        %p652 = pneg %p312
      $region46: #{decoder_forward.2} parent=11 // pred_check_branch
        %654 = sbr.rel (%p652) target = $region48
      $region47: #{decoder_forward.2} parent=11 // pred_region
        _
      $region48: #{decoder_forward.2} parent=11 // pred_fallthru
        _
      // Predicated region
      $region49: #{decoder_forward.2} parent=11 // pred_check
        %p655 = pneg %p333
      $region50: #{decoder_forward.2} parent=11 // pred_check_branch
        %657 = sbr.rel (%p655) target = $region52
      $region51: #{decoder_forward.2} parent=11 // pred_region
        _
      $region52: #{decoder_forward.2} parent=11 // pred_fallthru
        _
      // Predicated region
      $region53: #{decoder_forward.2} parent=11 // pred_check
        %p658 = pneg %p354
      $region54: #{decoder_forward.2} parent=11 // pred_check_branch
        %660 = sbr.rel (%p658) target = $region56
      $region55: #{decoder_forward.2} parent=11 // pred_region
        _
      $region56: #{decoder_forward.2} parent=11 // pred_fallthru
        _
      // Predicated region
      $region57: #{decoder_forward.2} parent=11 // pred_check
        %p661 = pneg %p375
      $region58: #{decoder_forward.2} parent=11 // pred_check_branch
        %663 = sbr.rel (%p661) target = $region60
      $region59: #{decoder_forward.2} parent=11 // pred_region
        _
      $region60: #{decoder_forward.2} parent=11 // pred_fallthru
        _
      // Predicated region
      $region61: #{decoder_forward.2} parent=11 // pred_check
        %p664 = pneg %p396
      $region62: #{decoder_forward.2} parent=11 // pred_check_branch
        %666 = sbr.rel (%p664) target = $region64
      $region63: #{decoder_forward.2} parent=11 // pred_region
        _
      $region64: #{decoder_forward.2} parent=11 // pred_fallthru
        _
      // Predicated region
      $region65: #{decoder_forward.2} parent=11 // pred_check
        %p667 = pneg %p417
      $region66: #{decoder_forward.2} parent=11 // pred_check_branch
        %669 = sbr.rel (%p667) target = $region68
      $region67: #{decoder_forward.2} parent=11 // pred_region
        _
      $region68: #{decoder_forward.2} parent=11 // pred_fallthru
        _
      // Predicated region
      $region69: #{decoder_forward.2} parent=11 // pred_check
        %p670 = pneg %p438
      $region70: #{decoder_forward.2} parent=11 // pred_check_branch
        %672 = sbr.rel (%p670) target = $region72
      $region71: #{decoder_forward.2} parent=11 // pred_region
        _
      $region72: #{decoder_forward.2} parent=11 // pred_fallthru
        _
      // Predicated region
      $region73: #{decoder_forward.2} parent=11 // pred_check
        %p673 = pneg %p459
      $region74: #{decoder_forward.2} parent=11 // pred_check_branch
        %675 = sbr.rel (%p673) target = $region76
      $region75: #{decoder_forward.2} parent=11 // pred_region
        _
      $region76: #{decoder_forward.2} parent=11 // pred_fallthru
        _
      // Predicated region
      $region77: #{decoder_forward.2} parent=11 // pred_check
        %p676 = pneg %p480
      $region78: #{decoder_forward.2} parent=11 // pred_check_branch
        %678 = sbr.rel (%p676) target = $region80
      $region79: #{decoder_forward.2} parent=11 // pred_region
        _
      $region80: #{decoder_forward.2} parent=11 // pred_fallthru
        _
      // Predicated region
      $region81: #{decoder_forward.2} parent=11 // pred_check
        %p679 = pneg %p501
      $region82: #{decoder_forward.2} parent=11 // pred_check_branch
        %681 = sbr.rel (%p679) target = $region84
      $region83: #{decoder_forward.2} parent=11 // pred_region
        _
      $region84: #{decoder_forward.2} parent=11 // pred_fallthru
        _
      // Predicated region
      $region85: #{decoder_forward.2} parent=11 // pred_check
        %p682 = pneg %p522
      $region86: #{decoder_forward.2} parent=11 // pred_check_branch
        %684 = sbr.rel (%p682) target = $region88
      $region87: #{decoder_forward.2} parent=11 // pred_region
        _
      $region88: #{decoder_forward.2} parent=11 // pred_fallthru
        _
      // Predicated region
      $region89: #{decoder_forward.2} parent=11 // pred_check
        %p685 = pneg %p543
      $region90: #{decoder_forward.2} parent=11 // pred_check_branch
        %687 = sbr.rel (%p685) target = $region92
      $region91: #{decoder_forward.2} parent=11 // pred_region
        _
      $region92: #{decoder_forward.2} parent=11 // pred_fallthru
        _
      // Predicated region
      $region93: #{decoder_forward.2} parent=11 // pred_check
        %p688 = pneg %p564
      $region94: #{decoder_forward.2} parent=11 // pred_check_branch
        %690 = sbr.rel (%p688) target = $region96
      $region95: #{decoder_forward.2} parent=11 // pred_region
        _
      $region96: #{decoder_forward.2} parent=11 // pred_fallthru
        _
      // Predicated region
      $region97: #{decoder_forward.2} parent=11 // pred_check
        %p691 = pneg %p585
      $region98: #{decoder_forward.2} parent=11 // pred_check_branch
        %693 = sbr.rel (%p691) target = $region100
      $region99: #{decoder_forward.2} parent=11 // pred_region
        _
      $region100: #{decoder_forward.2} parent=11 // pred_fallthru
        _
    $region12: #{decoder_forward.2} parent=5 // pred_fallthru
      _
    %p694 = scmp.lt.s32.totalorder %s31, 2
    // Predicated region
    $region101: #{decoder_forward.2} parent=5 // pred_check
      %p695 = pneg %p694
    $region102: #{decoder_forward.2} parent=5 // pred_check_branch
      %697 = sbr.rel (%p695) target = $region104
    $region103: #{decoder_forward.2} parent=5 // pred_region
      // Predicated region
      $region105: #{decoder_forward.2} parent=103 // pred_check
        %p698 = pneg %p65
      $region106: #{decoder_forward.2} parent=103 // pred_check_branch
        %700 = sbr.rel (%p698) target = $region108
      $region107: #{decoder_forward.2} parent=103 // pred_region
        %p701 = scmp.lt.s32.totalorder %s38, 1
        %s702 = scalar_select %p701, %s38, 1
        %p703 = scmp.lt.s32.totalorder %s39, 0
        %s704 = scalar_select %p703, %s39, 0
        %s705 = sadd.s32 %s704, %s702
        %s706 = smul.addr %s705, 8
        %s707 = scalar_lea.vmem %s0, %s706
      $region108: #{decoder_forward.2} parent=103 // pred_fallthru
        _
      // Predicated region
      $region109: #{decoder_forward.2} parent=103 // pred_check
        %p708 = pneg %p91
      $region110: #{decoder_forward.2} parent=103 // pred_check_branch
        %710 = sbr.rel (%p708) target = $region112
      $region111: #{decoder_forward.2} parent=103 // pred_region
        %p711 = scmp.lt.s32.totalorder %s38, 1
        %s712 = scalar_select %p711, %s38, 1
        %s713 = smul.addr %s712, 8
        %s714 = scalar_lea.vmem %s1, %s713
      $region112: #{decoder_forward.2} parent=103 // pred_fallthru
        _
      // Predicated region
      $region113: #{decoder_forward.2} parent=103 // pred_check
        %p715 = pneg %p117
      $region114: #{decoder_forward.2} parent=103 // pred_check_branch
        %717 = sbr.rel (%p715) target = $region116
      $region115: #{decoder_forward.2} parent=103 // pred_region
        %p718 = scmp.lt.s32.totalorder %s38, 1
        %s719 = scalar_select %p718, %s38, 1
        %s720 = smul.addr %s719, 8
        %s721 = scalar_lea.vmem %s2, %s720
      $region116: #{decoder_forward.2} parent=103 // pred_fallthru
        _
    $region104: #{decoder_forward.2} parent=5 // pred_fallthru
      _
    %p722 = scmp.le.s32.totalorder 1, %s31
    %p723 = scmp.lt.s32.totalorder %s31, 3
    %p724 = pnand %p722, %p723
    %p725 = pneg %p724
    // Predicated region
    $region117: #{decoder_forward.2} parent=5 // pred_check
      _
    $region118: #{decoder_forward.2} parent=5 // pred_check_branch
      %727 = sbr.rel (%p724) target = $region120
    $region119: #{decoder_forward.2} parent=5 // pred_region
      %s728 = ssub.s32 %s31, 1
      %p729 = scmp.lt.s32.totalorder %s40, 1
      %s730 = scalar_select %p729, %s40, 1
      %p731 = scmp.lt.s32.totalorder %s41, 0
      %s732 = scalar_select %p731, %s41, 0
      %s733 = sadd.s32 %s732, %s730
      %s734 = smul.addr %s733, 8
      %s735 = scalar_lea.vmem %s0, %s734
      %p736 = pneg %p71
      %p737 = pneg %p68
      %p738 = scmp.lt.s32.totalorder %s40, 1
      %s739 = scalar_select %p738, %s40, 1
      %s740 = smul.addr %s739, 8
      %s741 = scalar_lea.vmem %s1, %s740
      %p742 = pneg %p97
      %p743 = pneg %p94
      %p744 = scmp.lt.s32.totalorder %s40, 1
      %s745 = scalar_select %p744, %s40, 1
      %s746 = smul.addr %s745, 8
      %s747 = scalar_lea.vmem %s2, %s746
      %p748 = pneg %p123
      %p749 = pneg %p120
      %p750 = pneg %p144
      %p751 = pneg %p141
      %p752 = pneg %p165
      %p753 = pneg %p162
      %p754 = pneg %p186
      %p755 = pneg %p183
      %p756 = pneg %p207
      %p757 = pneg %p204
      %p758 = pneg %p228
      %p759 = pneg %p225
      %p760 = pneg %p249
      %p761 = pneg %p246
      %p762 = pneg %p270
      %p763 = pneg %p267
      %p764 = pneg %p291
      %p765 = pneg %p288
      %p766 = pneg %p312
      %p767 = pneg %p309
      %p768 = pneg %p333
      %p769 = pneg %p330
      %p770 = pneg %p354
      %p771 = pneg %p351
      %p772 = pneg %p375
      %p773 = pneg %p372
      %p774 = pneg %p396
      %p775 = pneg %p393
      %p776 = pneg %p417
      %p777 = pneg %p414
      %p778 = pneg %p438
      %p779 = pneg %p435
      %p780 = pneg %p459
      %p781 = pneg %p456
      %p782 = pneg %p480
      %p783 = pneg %p477
      %p784 = pneg %p501
      %p785 = pneg %p498
      %p786 = pneg %p522
      %p787 = pneg %p519
      %p788 = pneg %p543
      %p789 = pneg %p540
      %p790 = pneg %p564
      %p791 = pneg %p561
      %p792 = pneg %p585
      %p793 = pneg %p582
      %p794 = pneg %p613
      %p795 = pneg %p610
      %p796 = scmp.lt.s32.totalorder %s40, 1
      %s797 = scalar_select %p796, %s40, 1
      %p798 = scmp.lt.s32.totalorder %s41, 0
      %s799 = scalar_select %p798, %s41, 0
      %s800 = sadd.s32 %s799, %s797
      %s801 = smul.addr %s800, 8
      %s802 = scalar_lea.vmem %s25, %s801
      %p803 = scmp.lt.s32.totalorder %s40, 1
      %s804 = scalar_select %p803, %s40, 1
      %p805 = scmp.lt.s32.totalorder %s41, 0
      %s806 = scalar_select %p805, %s41, 0
      %s807 = sadd.s32 %s806, %s804
      %s808 = smul.addr %s807, 8
      %s809 = scalar_lea.vmem %s0, %s808
      %p810 = scmp.lt.s32.totalorder %s40, 1
      %s811 = scalar_select %p810, %s40, 1
      %s812 = smul.addr %s811, 8
      %s813 = scalar_lea.vmem %s1, %s812
      %p814 = scmp.lt.s32.totalorder %s40, 1
      %s815 = scalar_select %p814, %s40, 1
      %s816 = smul.addr %s815, 8
      %s817 = scalar_lea.vmem %s2, %s816
      %p818 = scmp.lt.s32.totalorder %s40, 1
      %s819 = scalar_select %p818, %s40, 1
      %p820 = scmp.lt.s32.totalorder %s41, 0
      %s821 = scalar_select %p820, %s41, 0
      %s822 = sadd.s32 %s821, %s819
      %s823 = smul.addr %s822, 8
      %s824 = scalar_lea.vmem %s25, %s823
      %v826 = vld [vmem:[%s809] sm:$0xff]
      %v827 = vld [vmem:[%s813] sm:$0xff]
      %v828 = vld [vmem:[%s817] sm:$0xff]
      %v829 = vpack.c.bf16 %v826, %v826
      %v830 = vld [vmem:[%s3] sm:$0xf]
      %v831 = vld [vmem:[%s3 + $0x4] sm:$0xf]
      %v832 = vld [vmem:[%s3 + $0x8] sm:$0xf]
      %v833 = vld [vmem:[%s3 + $0xc] sm:$0xf]
      %v834 = vld [vmem:[%s4] sm:$0x1]
      %v836 = vperm.slane %v834, 0
      %v842 = vunpack.c.l.b16 %v830
      %v843 = vunpack.c.l.b16 %v831
      %v844 = vunpack.c.l.b16 %v832
      %v845 = vunpack.c.l.b16 %v833
      %v846 = vpack.c.b16 %v843, %v842
      %v847 = vpack.c.b16 %v845, %v844
      %vm850 = vcmask 261120
      %v852 = vsel %vm850, %v829, 0
      %854 = vmatpush.bf16.msra.mxu0 0
      %855 = vmatpush.bf16.msra.mxu0 0
      %856 = vmatpush.bf16.msra.mxu0 0
      %857 = vmatpush.bf16.msra.mxu0 0
      %858 = vmatpush.bf16.msra.mxu0 0
      %859 = vmatpush.bf16.msra.mxu0 0
      %860 = vmatpush.bf16.msra.mxu0 %v847
      %861 = vmatpush.bf16.msra.mxu0 %v846
      %862 = vmatmul.bf16.gmra.mxu0 %v852
      %v863 = vpop.f32.mrf.mxu0
      %v864 = vadd.f32 %v836, %v863
      %v865 = vpop.f32.mrf.mxu0
      %866 = vdwg.mxu0
      %v867 = vmul.f32 %v864, 0.35355338
      %v868 = vpack.c.bf16 %v827, %v827
      %v869 = vld [vmem:[%s5] sm:$0xf]
      %v870 = vld [vmem:[%s5 + $0x4] sm:$0xf]
      %v871 = vld [vmem:[%s5 + $0x8] sm:$0xf]
      %v872 = vld [vmem:[%s5 + $0xc] sm:$0xf]
      %v873 = vld [vmem:[%s6] sm:$0x1]
      %v875 = vperm.slane %v873, 0
      %v881 = vunpack.c.l.b16 %v869
      %v882 = vunpack.c.l.b16 %v870
      %v883 = vunpack.c.l.b16 %v871
      %v884 = vunpack.c.l.b16 %v872
      %v885 = vpack.c.b16 %v882, %v881
      %v886 = vpack.c.b16 %v884, %v883
      %v890 = vsel %vm850, %v868, 0
      %892 = vmatpush.bf16.msra.mxu0 0
      %893 = vmatpush.bf16.msra.mxu0 0
      %894 = vmatpush.bf16.msra.mxu0 0
      %895 = vmatpush.bf16.msra.mxu0 0
      %896 = vmatpush.bf16.msra.mxu0 0
      %897 = vmatpush.bf16.msra.mxu0 0
      %898 = vmatpush.bf16.msra.mxu0 %v886
      %899 = vmatpush.bf16.msra.mxu0 %v885
      %900 = vmatmul.bf16.gmra.mxu0 %v890
      %v901 = vpop.f32.mrf.mxu0
      %v902 = vadd.f32 %v875, %v901
      %v903 = vpop.f32.mrf.mxu0
      %904 = vdwg.mxu0
      %v905 = vld [vmem:[%s8] sm:$0x1]
      %vm906 = vcmask 64512
      %v908 = vsel %vm906, %v867, 0
      %v911 = vsel %vm906, %v902, 0
      %913 = vmatpush.xpose.msra.mxu0 0.0
      %914 = vmatpush.xpose.msra.mxu0 0.0
      %915 = vmatpush.xpose.msra.mxu0 0.0
      %916 = vmatpush.xpose.msra.mxu0 0.0
      %917 = vmatpush.xpose.msra.mxu0 0.0
      %918 = vmatpush.xpose.msra.mxu0 0.0
      %919 = vmatpush.xpose.msra.mxu0 0.0
      %920 = vmatpush.xpose.msra.mxu0 0.0
      %921 = vmatpush.xpose.msra.mxu0 0.0
      %922 = vmatpush.xpose.msra.mxu0 0.0
      %923 = vmatpush.xpose.msra.mxu0 0.0
      %924 = vmatpush.xpose.msra.mxu0 0.0
      %925 = vmatpush.xpose.msra.mxu0 0.0
      %926 = vmatpush.xpose.msra.mxu0 0.0
      %927 = vmatpush.xpose.msra.mxu0 0.0
      %928 = vmatpush.xpose.msra.mxu0 %v911
      %929 = vmatmul.f32.gmra.mxu0 %v908
      %v930 = vpop.f32.mrf.mxu0
      %v931 = vadd.f32 0.0, %v930
      %932 = vdwg.mxu0
      %v933 = vsel %vm906, %v931, -inf
      %934 = vmax.xlane.f32.xlu0 %v933
      %v935 = vpop.xlane.xlu0 %934
      %v936 = vsub.f32 %v931, %v935
      %v937 = vmul.f32 %v936, 1.442695
      %v938 = vpow.pop %v937
      %v939 = vsel %vm906, %v938, 0.0
      %940 = vadd.xlane.f32.xlu0 %v939
      %v941 = vpop.xlane.xlu0 %940
      %v942 = vrcp.pop %v941
      %v943 = vmul.f32 %v941, %v942
      %v944 = vsub.f32 1.0, %v943
      %v945 = vmul.f32 %v942, %v944
      %v946 = vadd.f32 %v942, %v945
      %vm947 = vweird.f32 %v941
      %vm948 = vweird.f32 %v942
      %vm949 = vmor %vm947, %vm948
      %v950 = vsel %vm949, %v942, %v946
      %v951 = vand.u32 2147483647, %v941
      %vm952 = vcmp.eq.f32.partialorder %v951, 8.507059e+37
      %v953 = vand.u32 %v941, 2147483648
      %v954 = vor.u32 1.1754944e-38, %v953
      %v955 = vsel %vm952, %v954, %v950
      %v956 = vmul.f32 %v938, %v955
      %957 = vrot.lane.b32.xlu0 %v902, 96
      %v958 = vpop.permute.xlu0 %957
      %v961 = vsel %vm906, %v956, 0
      %963 = vmatpush.msra.mxu0 0.0
      %964 = vmatpush.msra.mxu0 0.0
      %965 = vmatpush.msra.mxu0 0.0
      %966 = vmatpush.msra.mxu0 0.0
      %967 = vmatpush.msra.mxu0 0.0
      %968 = vmatpush.msra.mxu0 0.0
      %969 = vmatpush.msra.mxu0 0.0
      %970 = vmatpush.msra.mxu0 0.0
      %971 = vmatpush.msra.mxu0 0.0
      %972 = vmatpush.msra.mxu0 0.0
      %973 = vmatpush.msra.mxu0 0.0
      %974 = vmatpush.msra.mxu0 0.0
      %975 = vmatpush.msra.mxu0 0.0
      %976 = vmatpush.msra.mxu0 0.0
      %977 = vmatpush.msra.mxu0 0.0
      %978 = vmatpush.msra.mxu0 %v958
      %979 = vmatmul.f32.gmra.mxu0 %v961
      %v980 = vpop.f32.mrf.mxu0
      %v981 = vadd.f32 0.0, %v980
      %982 = vdwg.mxu0
      %v983 = vpack.c.bf16 %v981, %v981
      %v984 = vld [vmem:[%s7] sm:$0xf]
      %v986 = vsel %vm906, %v983, 0
      %vm988 = vcmask 1043456
      %v990 = vsel %vm988, %v984, 0
      %992 = vmatpush.bf16.msra.mxu0 0
      %993 = vmatpush.bf16.msra.mxu0 0
      %994 = vmatpush.bf16.msra.mxu0 0
      %995 = vmatpush.bf16.msra.mxu0 0
      %996 = vmatpush.bf16.msra.mxu0 0
      %997 = vmatpush.bf16.msra.mxu0 0
      %998 = vmatpush.bf16.msra.mxu0 0
      %999 = vmatpush.bf16.msra.mxu0 %v990
      %1000 = vmatmul.bf16.gmra.mxu0 %v986
      %v1001 = vpop.f32.mrf.mxu0
      %v1002 = vadd.f32 0.0, %v1001
      %v1003 = vpop.f32.mrf.mxu0
      %1004 = vdwg.mxu0
      %v1006 = vperm.slane %v905, 0
      %v1008 = vadd.f32 %v1006, %v1002
      %1009 = vrot.lane.b32.xlu0 %v867, 120
      %v1010 = vpop.permute.xlu0 %1009
      %1011 = vrot.lane.b32.xlu0 %v902, 120
      %v1012 = vpop.permute.xlu0 %1011
      %v1013 = vsel %vm906, %v1010, 0
      %v1015 = vsel %vm906, %v1012, 0
      %1017 = vmatpush.xpose.msra.mxu0 0.0
      %1018 = vmatpush.xpose.msra.mxu0 0.0
      %1019 = vmatpush.xpose.msra.mxu0 0.0
      %1020 = vmatpush.xpose.msra.mxu0 0.0
      %1021 = vmatpush.xpose.msra.mxu0 0.0
      %1022 = vmatpush.xpose.msra.mxu0 0.0
      %1023 = vmatpush.xpose.msra.mxu0 0.0
      %1024 = vmatpush.xpose.msra.mxu0 0.0
      %1025 = vmatpush.xpose.msra.mxu0 0.0
      %1026 = vmatpush.xpose.msra.mxu0 0.0
      %1027 = vmatpush.xpose.msra.mxu0 0.0
      %1028 = vmatpush.xpose.msra.mxu0 0.0
      %1029 = vmatpush.xpose.msra.mxu0 0.0
      %1030 = vmatpush.xpose.msra.mxu0 0.0
      %1031 = vmatpush.xpose.msra.mxu0 0.0
      %1032 = vmatpush.xpose.msra.mxu0 %v1015
      %1033 = vmatmul.f32.gmra.mxu0 %v1013
      %v1034 = vpop.f32.mrf.mxu0
      %v1035 = vadd.f32 0.0, %v1034
      %1036 = vdwg.mxu0
      %v1037 = vsel %vm906, %v1035, -inf
      %1038 = vmax.xlane.f32.xlu0 %v1037
      %v1039 = vpop.xlane.xlu0 %1038
      %v1040 = vsub.f32 %v1035, %v1039
      %v1041 = vmul.f32 %v1040, 1.442695
      %v1042 = vpow.pop %v1041
      %v1043 = vsel %vm906, %v1042, 0.0
      %1044 = vadd.xlane.f32.xlu0 %v1043
      %v1045 = vpop.xlane.xlu0 %1044
      %v1046 = vrcp.pop %v1045
      %v1047 = vmul.f32 %v1045, %v1046
      %v1048 = vsub.f32 1.0, %v1047
      %v1049 = vmul.f32 %v1046, %v1048
      %v1050 = vadd.f32 %v1046, %v1049
      %vm1051 = vweird.f32 %v1045
      %vm1052 = vweird.f32 %v1046
      %vm1053 = vmor %vm1051, %vm1052
      %v1054 = vsel %vm1053, %v1046, %v1050
      %v1055 = vand.u32 2147483647, %v1045
      %vm1056 = vcmp.eq.f32.partialorder %v1055, 8.507059e+37
      %v1057 = vand.u32 %v1045, 2147483648
      %v1058 = vor.u32 1.1754944e-38, %v1057
      %v1059 = vsel %vm1056, %v1058, %v1054
      %v1060 = vmul.f32 %v1042, %v1059
      %1061 = vrot.lane.b32.xlu0 %v902, 88
      %v1062 = vpop.permute.xlu0 %1061
      %v1065 = vsel %vm906, %v1060, 0
      %1067 = vmatpush.msra.mxu0 0.0
      %1068 = vmatpush.msra.mxu0 0.0
      %1069 = vmatpush.msra.mxu0 0.0
      %1070 = vmatpush.msra.mxu0 0.0
      %1071 = vmatpush.msra.mxu0 0.0
      %1072 = vmatpush.msra.mxu0 0.0
      %1073 = vmatpush.msra.mxu0 0.0
      %1074 = vmatpush.msra.mxu0 0.0
      %1075 = vmatpush.msra.mxu0 0.0
      %1076 = vmatpush.msra.mxu0 0.0
      %1077 = vmatpush.msra.mxu0 0.0
      %1078 = vmatpush.msra.mxu0 0.0
      %1079 = vmatpush.msra.mxu0 0.0
      %1080 = vmatpush.msra.mxu0 0.0
      %1081 = vmatpush.msra.mxu0 0.0
      %1082 = vmatpush.msra.mxu0 %v1062
      %1083 = vmatmul.f32.gmra.mxu0 %v1065
      %v1084 = vpop.f32.mrf.mxu0
      %v1085 = vadd.f32 0.0, %v1084
      %1086 = vdwg.mxu0
      %v1087 = vpack.c.bf16 %v1085, %v1085
      %v1088 = vld [vmem:[%s7 + $0x4] sm:$0xf]
      %v1090 = vsel %vm906, %v1087, 0
      %v1093 = vsel %vm988, %v1088, 0
      %1095 = vmatpush.bf16.msra.mxu0 0
      %1096 = vmatpush.bf16.msra.mxu0 0
      %1097 = vmatpush.bf16.msra.mxu0 0
      %1098 = vmatpush.bf16.msra.mxu0 0
      %1099 = vmatpush.bf16.msra.mxu0 0
      %1100 = vmatpush.bf16.msra.mxu0 0
      %1101 = vmatpush.bf16.msra.mxu0 0
      %1102 = vmatpush.bf16.msra.mxu0 %v1093
      %1103 = vmatmul.bf16.gmra.mxu0 %v1090
      %v1104 = vpop.f32.mrf.mxu0
      %v1105 = vadd.f32 0.0, %v1104
      %v1106 = vpop.f32.mrf.mxu0
      %1107 = vdwg.mxu0
      %v1108 = vadd.f32 %v1008, %v1105
      %1109 = vrot.lane.b32.xlu0 %v867, 112
      %v1110 = vpop.permute.xlu0 %1109
      %1111 = vrot.lane.b32.xlu0 %v902, 112
      %v1112 = vpop.permute.xlu0 %1111
      %v1113 = vsel %vm906, %v1110, 0
      %v1115 = vsel %vm906, %v1112, 0
      %1117 = vmatpush.xpose.msra.mxu0 0.0
      %1118 = vmatpush.xpose.msra.mxu0 0.0
      %1119 = vmatpush.xpose.msra.mxu0 0.0
      %1120 = vmatpush.xpose.msra.mxu0 0.0
      %1121 = vmatpush.xpose.msra.mxu0 0.0
      %1122 = vmatpush.xpose.msra.mxu0 0.0
      %1123 = vmatpush.xpose.msra.mxu0 0.0
      %1124 = vmatpush.xpose.msra.mxu0 0.0
      %1125 = vmatpush.xpose.msra.mxu0 0.0
      %1126 = vmatpush.xpose.msra.mxu0 0.0
      %1127 = vmatpush.xpose.msra.mxu0 0.0
      %1128 = vmatpush.xpose.msra.mxu0 0.0
      %1129 = vmatpush.xpose.msra.mxu0 0.0
      %1130 = vmatpush.xpose.msra.mxu0 0.0
      %1131 = vmatpush.xpose.msra.mxu0 0.0
      %1132 = vmatpush.xpose.msra.mxu0 %v1115
      %1133 = vmatmul.f32.gmra.mxu0 %v1113
      %v1134 = vpop.f32.mrf.mxu0
      %v1135 = vadd.f32 0.0, %v1134
      %1136 = vdwg.mxu0
      %v1137 = vsel %vm906, %v1135, -inf
      %1138 = vmax.xlane.f32.xlu0 %v1137
      %v1139 = vpop.xlane.xlu0 %1138
      %v1140 = vsub.f32 %v1135, %v1139
      %v1141 = vmul.f32 %v1140, 1.442695
      %v1142 = vpow.pop %v1141
      %v1143 = vsel %vm906, %v1142, 0.0
      %1144 = vadd.xlane.f32.xlu0 %v1143
      %v1145 = vpop.xlane.xlu0 %1144
      %v1146 = vrcp.pop %v1145
      %v1147 = vmul.f32 %v1145, %v1146
      %v1148 = vsub.f32 1.0, %v1147
      %v1149 = vmul.f32 %v1146, %v1148
      %v1150 = vadd.f32 %v1146, %v1149
      %vm1151 = vweird.f32 %v1145
      %vm1152 = vweird.f32 %v1146
      %vm1153 = vmor %vm1151, %vm1152
      %v1154 = vsel %vm1153, %v1146, %v1150
      %v1155 = vand.u32 2147483647, %v1145
      %vm1156 = vcmp.eq.f32.partialorder %v1155, 8.507059e+37
      %v1157 = vand.u32 %v1145, 2147483648
      %v1158 = vor.u32 1.1754944e-38, %v1157
      %v1159 = vsel %vm1156, %v1158, %v1154
      %v1160 = vmul.f32 %v1142, %v1159
      %1161 = vrot.lane.b32.xlu0 %v902, 80
      %v1162 = vpop.permute.xlu0 %1161
      %v1165 = vsel %vm906, %v1160, 0
      %1167 = vmatpush.msra.mxu0 0.0
      %1168 = vmatpush.msra.mxu0 0.0
      %1169 = vmatpush.msra.mxu0 0.0
      %1170 = vmatpush.msra.mxu0 0.0
      %1171 = vmatpush.msra.mxu0 0.0
      %1172 = vmatpush.msra.mxu0 0.0
      %1173 = vmatpush.msra.mxu0 0.0
      %1174 = vmatpush.msra.mxu0 0.0
      %1175 = vmatpush.msra.mxu0 0.0
      %1176 = vmatpush.msra.mxu0 0.0
      %1177 = vmatpush.msra.mxu0 0.0
      %1178 = vmatpush.msra.mxu0 0.0
      %1179 = vmatpush.msra.mxu0 0.0
      %1180 = vmatpush.msra.mxu0 0.0
      %1181 = vmatpush.msra.mxu0 0.0
      %1182 = vmatpush.msra.mxu0 %v1162
      %1183 = vmatmul.f32.gmra.mxu0 %v1165
      %v1184 = vpop.f32.mrf.mxu0
      %v1185 = vadd.f32 0.0, %v1184
      %1186 = vdwg.mxu0
      %v1187 = vpack.c.bf16 %v1185, %v1185
      %v1188 = vld [vmem:[%s7 + $0x8] sm:$0xf]
      %v1190 = vsel %vm906, %v1187, 0
      %v1193 = vsel %vm988, %v1188, 0
      %1195 = vmatpush.bf16.msra.mxu0 0
      %1196 = vmatpush.bf16.msra.mxu0 0
      %1197 = vmatpush.bf16.msra.mxu0 0
      %1198 = vmatpush.bf16.msra.mxu0 0
      %1199 = vmatpush.bf16.msra.mxu0 0
      %1200 = vmatpush.bf16.msra.mxu0 0
      %1201 = vmatpush.bf16.msra.mxu0 0
      %1202 = vmatpush.bf16.msra.mxu0 %v1193
      %1203 = vmatmul.bf16.gmra.mxu0 %v1190
      %v1204 = vpop.f32.mrf.mxu0
      %v1205 = vadd.f32 0.0, %v1204
      %v1206 = vpop.f32.mrf.mxu0
      %1207 = vdwg.mxu0
      %v1208 = vadd.f32 %v1108, %v1205
      %1209 = vrot.lane.b32.xlu0 %v867, 104
      %v1210 = vpop.permute.xlu0 %1209
      %1211 = vrot.lane.b32.xlu0 %v902, 104
      %v1212 = vpop.permute.xlu0 %1211
      %v1213 = vsel %vm906, %v1210, 0
      %v1215 = vsel %vm906, %v1212, 0
      %1217 = vmatpush.xpose.msra.mxu0 0.0
      %1218 = vmatpush.xpose.msra.mxu0 0.0
      %1219 = vmatpush.xpose.msra.mxu0 0.0
      %1220 = vmatpush.xpose.msra.mxu0 0.0
      %1221 = vmatpush.xpose.msra.mxu0 0.0
      %1222 = vmatpush.xpose.msra.mxu0 0.0
      %1223 = vmatpush.xpose.msra.mxu0 0.0
      %1224 = vmatpush.xpose.msra.mxu0 0.0
      %1225 = vmatpush.xpose.msra.mxu0 0.0
      %1226 = vmatpush.xpose.msra.mxu0 0.0
      %1227 = vmatpush.xpose.msra.mxu0 0.0
      %1228 = vmatpush.xpose.msra.mxu0 0.0
      %1229 = vmatpush.xpose.msra.mxu0 0.0
      %1230 = vmatpush.xpose.msra.mxu0 0.0
      %1231 = vmatpush.xpose.msra.mxu0 0.0
      %1232 = vmatpush.xpose.msra.mxu0 %v1215
      %1233 = vmatmul.f32.gmra.mxu0 %v1213
      %v1234 = vpop.f32.mrf.mxu0
      %v1235 = vadd.f32 0.0, %v1234
      %1236 = vdwg.mxu0
      %v1237 = vsel %vm906, %v1235, -inf
      %1238 = vmax.xlane.f32.xlu0 %v1237
      %v1239 = vpop.xlane.xlu0 %1238
      %v1240 = vsub.f32 %v1235, %v1239
      %v1241 = vmul.f32 %v1240, 1.442695
      %v1242 = vpow.pop %v1241
      %v1243 = vsel %vm906, %v1242, 0.0
      %1244 = vadd.xlane.f32.xlu0 %v1243
      %v1245 = vpop.xlane.xlu0 %1244
      %v1246 = vrcp.pop %v1245
      %v1247 = vmul.f32 %v1245, %v1246
      %v1248 = vsub.f32 1.0, %v1247
      %v1249 = vmul.f32 %v1246, %v1248
      %v1250 = vadd.f32 %v1246, %v1249
      %vm1251 = vweird.f32 %v1245
      %vm1252 = vweird.f32 %v1246
      %vm1253 = vmor %vm1251, %vm1252
      %v1254 = vsel %vm1253, %v1246, %v1250
      %v1255 = vand.u32 2147483647, %v1245
      %vm1256 = vcmp.eq.f32.partialorder %v1255, 8.507059e+37
      %v1257 = vand.u32 %v1245, 2147483648
      %v1258 = vor.u32 1.1754944e-38, %v1257
      %v1259 = vsel %vm1256, %v1258, %v1254
      %v1260 = vmul.f32 %v1242, %v1259
      %1261 = vrot.lane.b32.xlu0 %v902, 72
      %v1262 = vpop.permute.xlu0 %1261
      %v1265 = vsel %vm906, %v1260, 0
      %1267 = vmatpush.msra.mxu0 0.0
      %1268 = vmatpush.msra.mxu0 0.0
      %1269 = vmatpush.msra.mxu0 0.0
      %1270 = vmatpush.msra.mxu0 0.0
      %1271 = vmatpush.msra.mxu0 0.0
      %1272 = vmatpush.msra.mxu0 0.0
      %1273 = vmatpush.msra.mxu0 0.0
      %1274 = vmatpush.msra.mxu0 0.0
      %1275 = vmatpush.msra.mxu0 0.0
      %1276 = vmatpush.msra.mxu0 0.0
      %1277 = vmatpush.msra.mxu0 0.0
      %1278 = vmatpush.msra.mxu0 0.0
      %1279 = vmatpush.msra.mxu0 0.0
      %1280 = vmatpush.msra.mxu0 0.0
      %1281 = vmatpush.msra.mxu0 0.0
      %1282 = vmatpush.msra.mxu0 %v1262
      %1283 = vmatmul.f32.gmra.mxu0 %v1265
      %v1284 = vpop.f32.mrf.mxu0
      %v1285 = vadd.f32 0.0, %v1284
      %1286 = vdwg.mxu0
      %v1287 = vpack.c.bf16 %v1285, %v1285
      %v1288 = vld [vmem:[%s7 + $0xc] sm:$0xf]
      %v1290 = vsel %vm906, %v1287, 0
      %v1293 = vsel %vm988, %v1288, 0
      %1295 = vmatpush.bf16.msra.mxu0 0
      %1296 = vmatpush.bf16.msra.mxu0 0
      %1297 = vmatpush.bf16.msra.mxu0 0
      %1298 = vmatpush.bf16.msra.mxu0 0
      %1299 = vmatpush.bf16.msra.mxu0 0
      %1300 = vmatpush.bf16.msra.mxu0 0
      %1301 = vmatpush.bf16.msra.mxu0 0
      %1302 = vmatpush.bf16.msra.mxu0 %v1293
      %1303 = vmatmul.bf16.gmra.mxu0 %v1290
      %v1304 = vpop.f32.mrf.mxu0
      %v1305 = vadd.f32 0.0, %v1304
      %v1306 = vpop.f32.mrf.mxu0
      %1307 = vdwg.mxu0
      %v1308 = vadd.f32 %v1208, %v1305
      %v1309 = vadd.f32 %v1308, %v826
      %v1310 = vsel %vm850, %v1309, 0.0
      %1311 = vadd.xlane.f32.xlu0 %v1310
      %v1312 = vpop.xlane.xlu0 %1311
      %v1313 = vrcp.pop 32.0
      %v1314 = vmul.f32 32.0, %v1313
      %v1315 = vsub.f32 1.0, %v1314
      %v1316 = vmul.f32 %v1313, %v1315
      %v1317 = vadd.f32 %v1313, %v1316
      %vm1318 = vweird.f32 %v1313
      %v1319 = vsel %vm1318, %v1313, %v1317
      %v1320 = vmul.f32 %v1312, %v1319
      %v1321 = vsub.f32 %v1309, %v1320
      %v1322 = vmul.f32 %v1321, %v1321
      %v1323 = vsel %vm850, %v1322, 0.0
      %1324 = vadd.xlane.f32.xlu0 %v1323
      %v1325 = vpop.xlane.xlu0 %1324
      %v1326 = vmul.f32 %v1325, %v1319
      %v1327 = vadd.f32 %v1326, 1e-05
      %v1328 = vrsqrt.pop %v1327
      %v1329 = vmul.f32 %v1328, %v1327
      %v1330 = vmul.f32 %v1329, %v1328
      %v1331 = vmul.f32 0.5, %v1330
      %v1332 = vsub.f32 1.5, %v1331
      %v1333 = vmul.f32 %v1328, %v1332
      %vm1334 = vweird.f32 %v1327
      %vm1335 = vweird.f32 %v1328
      %vm1336 = vmor %vm1334, %vm1335
      %v1337 = vsel %vm1336, %v1328, %v1333
      %v1338 = vmul.f32 %v1321, %v1337
      %v1339 = vld [vmem:[%s9] sm:$0x1]
      %v1341 = vperm.slane %v1339, 0
      %v1343 = vmul.f32 %v1338, %v1341
      %v1344 = vld [vmem:[%s10] sm:$0x1]
      %v1346 = vperm.slane %v1344, 0
      %v1348 = vadd.f32 %v1343, %v1346
      %v1349 = vpack.c.bf16 %v1348, %v1348
      %v1350 = vld [vmem:[%s11] sm:$0xf]
      %v1351 = vld [vmem:[%s11 + $0x4] sm:$0xf]
      %v1352 = vld [vmem:[%s11 + $0x8] sm:$0xf]
      %v1353 = vld [vmem:[%s11 + $0xc] sm:$0xf]
      %v1354 = vld [vmem:[%s12] sm:$0x1]
      %v1356 = vperm.slane %v1354, 0
      %v1362 = vunpack.c.l.b16 %v1350
      %v1363 = vunpack.c.l.b16 %v1351
      %v1364 = vunpack.c.l.b16 %v1352
      %v1365 = vunpack.c.l.b16 %v1353
      %v1366 = vpack.c.b16 %v1363, %v1362
      %v1367 = vpack.c.b16 %v1365, %v1364
      %v1371 = vsel %vm850, %v1349, 0
      %1373 = vmatpush.bf16.msra.mxu0 0
      %1374 = vmatpush.bf16.msra.mxu0 0
      %1375 = vmatpush.bf16.msra.mxu0 0
      %1376 = vmatpush.bf16.msra.mxu0 0
      %1377 = vmatpush.bf16.msra.mxu0 0
      %1378 = vmatpush.bf16.msra.mxu0 0
      %1379 = vmatpush.bf16.msra.mxu0 %v1367
      %1380 = vmatpush.bf16.msra.mxu0 %v1366
      %1381 = vmatmul.bf16.gmra.mxu0 %v1371
      %v1382 = vpop.f32.mrf.mxu0
      %v1383 = vadd.f32 %v1356, %v1382
      %v1384 = vpop.f32.mrf.mxu0
      %1385 = vdwg.mxu0
      %v1386 = vmul.f32 %v1383, 0.35355338
      %v1387 = vpack.c.bf16 %v828, %v828
      %v1388 = vld [vmem:[%s13] sm:$0xf]
      %v1389 = vld [vmem:[%s13 + $0x4] sm:$0xf]
      %v1390 = vld [vmem:[%s13 + $0x8] sm:$0xf]
      %v1391 = vld [vmem:[%s13 + $0xc] sm:$0xf]
      %v1392 = vld [vmem:[%s14] sm:$0x1]
      %v1394 = vperm.slane %v1392, 0
      %v1400 = vunpack.c.l.b16 %v1388
      %v1401 = vunpack.c.l.b16 %v1389
      %v1402 = vunpack.c.l.b16 %v1390
      %v1403 = vunpack.c.l.b16 %v1391
      %v1404 = vpack.c.b16 %v1401, %v1400
      %v1405 = vpack.c.b16 %v1403, %v1402
      %v1409 = vsel %vm850, %v1387, 0
      %1411 = vmatpush.bf16.msra.mxu0 0
      %1412 = vmatpush.bf16.msra.mxu0 0
      %1413 = vmatpush.bf16.msra.mxu0 0
      %1414 = vmatpush.bf16.msra.mxu0 0
      %1415 = vmatpush.bf16.msra.mxu0 0
      %1416 = vmatpush.bf16.msra.mxu0 0
      %1417 = vmatpush.bf16.msra.mxu0 %v1405
      %1418 = vmatpush.bf16.msra.mxu0 %v1404
      %1419 = vmatmul.bf16.gmra.mxu0 %v1409
      %v1420 = vpop.f32.mrf.mxu0
      %v1421 = vadd.f32 %v1394, %v1420
      %v1422 = vpop.f32.mrf.mxu0
      %1423 = vdwg.mxu0
      %v1424 = vld [vmem:[%s16] sm:$0x1]
      %v1426 = vsel %vm906, %v1386, 0
      %v1429 = vsel %vm906, %v1421, 0
      %1431 = vmatpush.xpose.msra.mxu0 0.0
      %1432 = vmatpush.xpose.msra.mxu0 0.0
      %1433 = vmatpush.xpose.msra.mxu0 0.0
      %1434 = vmatpush.xpose.msra.mxu0 0.0
      %1435 = vmatpush.xpose.msra.mxu0 0.0
      %1436 = vmatpush.xpose.msra.mxu0 0.0
      %1437 = vmatpush.xpose.msra.mxu0 0.0
      %1438 = vmatpush.xpose.msra.mxu0 0.0
      %1439 = vmatpush.xpose.msra.mxu0 0.0
      %1440 = vmatpush.xpose.msra.mxu0 0.0
      %1441 = vmatpush.xpose.msra.mxu0 0.0
      %1442 = vmatpush.xpose.msra.mxu0 0.0
      %1443 = vmatpush.xpose.msra.mxu0 0.0
      %1444 = vmatpush.xpose.msra.mxu0 0.0
      %1445 = vmatpush.xpose.msra.mxu0 0.0
      %1446 = vmatpush.xpose.msra.mxu0 %v1429
      %1447 = vmatmul.f32.gmra.mxu0 %v1426
      %v1448 = vpop.f32.mrf.mxu0
      %v1449 = vadd.f32 0.0, %v1448
      %1450 = vdwg.mxu0
      %v1451 = vsel %vm906, %v1449, -inf
      %1452 = vmax.xlane.f32.xlu0 %v1451
      %v1453 = vpop.xlane.xlu0 %1452
      %v1454 = vsub.f32 %v1449, %v1453
      %v1455 = vmul.f32 %v1454, 1.442695
      %v1456 = vpow.pop %v1455
      %v1457 = vsel %vm906, %v1456, 0.0
      %1458 = vadd.xlane.f32.xlu0 %v1457
      %v1459 = vpop.xlane.xlu0 %1458
      %v1460 = vrcp.pop %v1459
      %v1461 = vmul.f32 %v1459, %v1460
      %v1462 = vsub.f32 1.0, %v1461
      %v1463 = vmul.f32 %v1460, %v1462
      %v1464 = vadd.f32 %v1460, %v1463
      %vm1465 = vweird.f32 %v1459
      %vm1466 = vweird.f32 %v1460
      %vm1467 = vmor %vm1465, %vm1466
      %v1468 = vsel %vm1467, %v1460, %v1464
      %v1469 = vand.u32 2147483647, %v1459
      %vm1470 = vcmp.eq.f32.partialorder %v1469, 8.507059e+37
      %v1471 = vand.u32 %v1459, 2147483648
      %v1472 = vor.u32 1.1754944e-38, %v1471
      %v1473 = vsel %vm1470, %v1472, %v1468
      %v1474 = vmul.f32 %v1456, %v1473
      %1475 = vrot.lane.b32.xlu0 %v1421, 96
      %v1476 = vpop.permute.xlu0 %1475
      %v1479 = vsel %vm906, %v1474, 0
      %1481 = vmatpush.msra.mxu0 0.0
      %1482 = vmatpush.msra.mxu0 0.0
      %1483 = vmatpush.msra.mxu0 0.0
      %1484 = vmatpush.msra.mxu0 0.0
      %1485 = vmatpush.msra.mxu0 0.0
      %1486 = vmatpush.msra.mxu0 0.0
      %1487 = vmatpush.msra.mxu0 0.0
      %1488 = vmatpush.msra.mxu0 0.0
      %1489 = vmatpush.msra.mxu0 0.0
      %1490 = vmatpush.msra.mxu0 0.0
      %1491 = vmatpush.msra.mxu0 0.0
      %1492 = vmatpush.msra.mxu0 0.0
      %1493 = vmatpush.msra.mxu0 0.0
      %1494 = vmatpush.msra.mxu0 0.0
      %1495 = vmatpush.msra.mxu0 0.0
      %1496 = vmatpush.msra.mxu0 %v1476
      %1497 = vmatmul.f32.gmra.mxu0 %v1479
      %v1498 = vpop.f32.mrf.mxu0
      %v1499 = vadd.f32 0.0, %v1498
      %1500 = vdwg.mxu0
      %v1501 = vpack.c.bf16 %v1499, %v1499
      %v1502 = vld [vmem:[%s15] sm:$0xf]
      %v1504 = vsel %vm906, %v1501, 0
      %v1507 = vsel %vm988, %v1502, 0
      %1509 = vmatpush.bf16.msra.mxu0 0
      %1510 = vmatpush.bf16.msra.mxu0 0
      %1511 = vmatpush.bf16.msra.mxu0 0
      %1512 = vmatpush.bf16.msra.mxu0 0
      %1513 = vmatpush.bf16.msra.mxu0 0
      %1514 = vmatpush.bf16.msra.mxu0 0
      %1515 = vmatpush.bf16.msra.mxu0 0
      %1516 = vmatpush.bf16.msra.mxu0 %v1507
      %1517 = vmatmul.bf16.gmra.mxu0 %v1504
      %v1518 = vpop.f32.mrf.mxu0
      %v1519 = vadd.f32 0.0, %v1518
      %v1520 = vpop.f32.mrf.mxu0
      %1521 = vdwg.mxu0
      %v1523 = vperm.slane %v1424, 0
      %v1525 = vadd.f32 %v1523, %v1519
      %1526 = vrot.lane.b32.xlu0 %v1386, 120
      %v1527 = vpop.permute.xlu0 %1526
      %1528 = vrot.lane.b32.xlu0 %v1421, 120
      %v1529 = vpop.permute.xlu0 %1528
      %v1530 = vsel %vm906, %v1527, 0
      %v1532 = vsel %vm906, %v1529, 0
      %1534 = vmatpush.xpose.msra.mxu0 0.0
      %1535 = vmatpush.xpose.msra.mxu0 0.0
      %1536 = vmatpush.xpose.msra.mxu0 0.0
      %1537 = vmatpush.xpose.msra.mxu0 0.0
      %1538 = vmatpush.xpose.msra.mxu0 0.0
      %1539 = vmatpush.xpose.msra.mxu0 0.0
      %1540 = vmatpush.xpose.msra.mxu0 0.0
      %1541 = vmatpush.xpose.msra.mxu0 0.0
      %1542 = vmatpush.xpose.msra.mxu0 0.0
      %1543 = vmatpush.xpose.msra.mxu0 0.0
      %1544 = vmatpush.xpose.msra.mxu0 0.0
      %1545 = vmatpush.xpose.msra.mxu0 0.0
      %1546 = vmatpush.xpose.msra.mxu0 0.0
      %1547 = vmatpush.xpose.msra.mxu0 0.0
      %1548 = vmatpush.xpose.msra.mxu0 0.0
      %1549 = vmatpush.xpose.msra.mxu0 %v1532
      %1550 = vmatmul.f32.gmra.mxu0 %v1530
      %v1551 = vpop.f32.mrf.mxu0
      %v1552 = vadd.f32 0.0, %v1551
      %1553 = vdwg.mxu0
      %v1554 = vsel %vm906, %v1552, -inf
      %1555 = vmax.xlane.f32.xlu0 %v1554
      %v1556 = vpop.xlane.xlu0 %1555
      %v1557 = vsub.f32 %v1552, %v1556
      %v1558 = vmul.f32 %v1557, 1.442695
      %v1559 = vpow.pop %v1558
      %v1560 = vsel %vm906, %v1559, 0.0
      %1561 = vadd.xlane.f32.xlu0 %v1560
      %v1562 = vpop.xlane.xlu0 %1561
      %v1563 = vrcp.pop %v1562
      %v1564 = vmul.f32 %v1562, %v1563
      %v1565 = vsub.f32 1.0, %v1564
      %v1566 = vmul.f32 %v1563, %v1565
      %v1567 = vadd.f32 %v1563, %v1566
      %vm1568 = vweird.f32 %v1562
      %vm1569 = vweird.f32 %v1563
      %vm1570 = vmor %vm1568, %vm1569
      %v1571 = vsel %vm1570, %v1563, %v1567
      %v1572 = vand.u32 2147483647, %v1562
      %vm1573 = vcmp.eq.f32.partialorder %v1572, 8.507059e+37
      %v1574 = vand.u32 %v1562, 2147483648
      %v1575 = vor.u32 1.1754944e-38, %v1574
      %v1576 = vsel %vm1573, %v1575, %v1571
      %v1577 = vmul.f32 %v1559, %v1576
      %1578 = vrot.lane.b32.xlu0 %v1421, 88
      %v1579 = vpop.permute.xlu0 %1578
      %v1582 = vsel %vm906, %v1577, 0
      %1584 = vmatpush.msra.mxu0 0.0
      %1585 = vmatpush.msra.mxu0 0.0
      %1586 = vmatpush.msra.mxu0 0.0
      %1587 = vmatpush.msra.mxu0 0.0
      %1588 = vmatpush.msra.mxu0 0.0
      %1589 = vmatpush.msra.mxu0 0.0
      %1590 = vmatpush.msra.mxu0 0.0
      %1591 = vmatpush.msra.mxu0 0.0
      %1592 = vmatpush.msra.mxu0 0.0
      %1593 = vmatpush.msra.mxu0 0.0
      %1594 = vmatpush.msra.mxu0 0.0
      %1595 = vmatpush.msra.mxu0 0.0
      %1596 = vmatpush.msra.mxu0 0.0
      %1597 = vmatpush.msra.mxu0 0.0
      %1598 = vmatpush.msra.mxu0 0.0
      %1599 = vmatpush.msra.mxu0 %v1579
      %1600 = vmatmul.f32.gmra.mxu0 %v1582
      %v1601 = vpop.f32.mrf.mxu0
      %v1602 = vadd.f32 0.0, %v1601
      %1603 = vdwg.mxu0
      %v1604 = vpack.c.bf16 %v1602, %v1602
      %v1605 = vld [vmem:[%s15 + $0x4] sm:$0xf]
      %v1607 = vsel %vm906, %v1604, 0
      %v1610 = vsel %vm988, %v1605, 0
      %1612 = vmatpush.bf16.msra.mxu0 0
      %1613 = vmatpush.bf16.msra.mxu0 0
      %1614 = vmatpush.bf16.msra.mxu0 0
      %1615 = vmatpush.bf16.msra.mxu0 0
      %1616 = vmatpush.bf16.msra.mxu0 0
      %1617 = vmatpush.bf16.msra.mxu0 0
      %1618 = vmatpush.bf16.msra.mxu0 0
      %1619 = vmatpush.bf16.msra.mxu0 %v1610
      %1620 = vmatmul.bf16.gmra.mxu0 %v1607
      %v1621 = vpop.f32.mrf.mxu0
      %v1622 = vadd.f32 0.0, %v1621
      %v1623 = vpop.f32.mrf.mxu0
      %1624 = vdwg.mxu0
      %v1625 = vadd.f32 %v1525, %v1622
      %1626 = vrot.lane.b32.xlu0 %v1386, 112
      %v1627 = vpop.permute.xlu0 %1626
      %1628 = vrot.lane.b32.xlu0 %v1421, 112
      %v1629 = vpop.permute.xlu0 %1628
      %v1630 = vsel %vm906, %v1627, 0
      %v1632 = vsel %vm906, %v1629, 0
      %1634 = vmatpush.xpose.msra.mxu0 0.0
      %1635 = vmatpush.xpose.msra.mxu0 0.0
      %1636 = vmatpush.xpose.msra.mxu0 0.0
      %1637 = vmatpush.xpose.msra.mxu0 0.0
      %1638 = vmatpush.xpose.msra.mxu0 0.0
      %1639 = vmatpush.xpose.msra.mxu0 0.0
      %1640 = vmatpush.xpose.msra.mxu0 0.0
      %1641 = vmatpush.xpose.msra.mxu0 0.0
      %1642 = vmatpush.xpose.msra.mxu0 0.0
      %1643 = vmatpush.xpose.msra.mxu0 0.0
      %1644 = vmatpush.xpose.msra.mxu0 0.0
      %1645 = vmatpush.xpose.msra.mxu0 0.0
      %1646 = vmatpush.xpose.msra.mxu0 0.0
      %1647 = vmatpush.xpose.msra.mxu0 0.0
      %1648 = vmatpush.xpose.msra.mxu0 0.0
      %1649 = vmatpush.xpose.msra.mxu0 %v1632
      %1650 = vmatmul.f32.gmra.mxu0 %v1630
      %v1651 = vpop.f32.mrf.mxu0
      %v1652 = vadd.f32 0.0, %v1651
      %1653 = vdwg.mxu0
      %v1654 = vsel %vm906, %v1652, -inf
      %1655 = vmax.xlane.f32.xlu0 %v1654
      %v1656 = vpop.xlane.xlu0 %1655
      %v1657 = vsub.f32 %v1652, %v1656
      %v1658 = vmul.f32 %v1657, 1.442695
      %v1659 = vpow.pop %v1658
      %v1660 = vsel %vm906, %v1659, 0.0
      %1661 = vadd.xlane.f32.xlu0 %v1660
      %v1662 = vpop.xlane.xlu0 %1661
      %v1663 = vrcp.pop %v1662
      %v1664 = vmul.f32 %v1662, %v1663
      %v1665 = vsub.f32 1.0, %v1664
      %v1666 = vmul.f32 %v1663, %v1665
      %v1667 = vadd.f32 %v1663, %v1666
      %vm1668 = vweird.f32 %v1662
      %vm1669 = vweird.f32 %v1663
      %vm1670 = vmor %vm1668, %vm1669
      %v1671 = vsel %vm1670, %v1663, %v1667
      %v1672 = vand.u32 2147483647, %v1662
      %vm1673 = vcmp.eq.f32.partialorder %v1672, 8.507059e+37
      %v1674 = vand.u32 %v1662, 2147483648
      %v1675 = vor.u32 1.1754944e-38, %v1674
      %v1676 = vsel %vm1673, %v1675, %v1671
      %v1677 = vmul.f32 %v1659, %v1676
      %1678 = vrot.lane.b32.xlu0 %v1421, 80
      %v1679 = vpop.permute.xlu0 %1678
      %v1682 = vsel %vm906, %v1677, 0
      %1684 = vmatpush.msra.mxu0 0.0
      %1685 = vmatpush.msra.mxu0 0.0
      %1686 = vmatpush.msra.mxu0 0.0
      %1687 = vmatpush.msra.mxu0 0.0
      %1688 = vmatpush.msra.mxu0 0.0
      %1689 = vmatpush.msra.mxu0 0.0
      %1690 = vmatpush.msra.mxu0 0.0
      %1691 = vmatpush.msra.mxu0 0.0
      %1692 = vmatpush.msra.mxu0 0.0
      %1693 = vmatpush.msra.mxu0 0.0
      %1694 = vmatpush.msra.mxu0 0.0
      %1695 = vmatpush.msra.mxu0 0.0
      %1696 = vmatpush.msra.mxu0 0.0
      %1697 = vmatpush.msra.mxu0 0.0
      %1698 = vmatpush.msra.mxu0 0.0
      %1699 = vmatpush.msra.mxu0 %v1679
      %1700 = vmatmul.f32.gmra.mxu0 %v1682
      %v1701 = vpop.f32.mrf.mxu0
      %v1702 = vadd.f32 0.0, %v1701
      %1703 = vdwg.mxu0
      %v1704 = vpack.c.bf16 %v1702, %v1702
      %v1705 = vld [vmem:[%s15 + $0x8] sm:$0xf]
      %v1707 = vsel %vm906, %v1704, 0
      %v1710 = vsel %vm988, %v1705, 0
      %1712 = vmatpush.bf16.msra.mxu0 0
      %1713 = vmatpush.bf16.msra.mxu0 0
      %1714 = vmatpush.bf16.msra.mxu0 0
      %1715 = vmatpush.bf16.msra.mxu0 0
      %1716 = vmatpush.bf16.msra.mxu0 0
      %1717 = vmatpush.bf16.msra.mxu0 0
      %1718 = vmatpush.bf16.msra.mxu0 0
      %1719 = vmatpush.bf16.msra.mxu0 %v1710
      %1720 = vmatmul.bf16.gmra.mxu0 %v1707
      %v1721 = vpop.f32.mrf.mxu0
      %v1722 = vadd.f32 0.0, %v1721
      %v1723 = vpop.f32.mrf.mxu0
      %1724 = vdwg.mxu0
      %v1725 = vadd.f32 %v1625, %v1722
      %1726 = vrot.lane.b32.xlu0 %v1386, 104
      %v1727 = vpop.permute.xlu0 %1726
      %1728 = vrot.lane.b32.xlu0 %v1421, 104
      %v1729 = vpop.permute.xlu0 %1728
      %v1730 = vsel %vm906, %v1727, 0
      %v1732 = vsel %vm906, %v1729, 0
      %1734 = vmatpush.xpose.msra.mxu0 0.0
      %1735 = vmatpush.xpose.msra.mxu0 0.0
      %1736 = vmatpush.xpose.msra.mxu0 0.0
      %1737 = vmatpush.xpose.msra.mxu0 0.0
      %1738 = vmatpush.xpose.msra.mxu0 0.0
      %1739 = vmatpush.xpose.msra.mxu0 0.0
      %1740 = vmatpush.xpose.msra.mxu0 0.0
      %1741 = vmatpush.xpose.msra.mxu0 0.0
      %1742 = vmatpush.xpose.msra.mxu0 0.0
      %1743 = vmatpush.xpose.msra.mxu0 0.0
      %1744 = vmatpush.xpose.msra.mxu0 0.0
      %1745 = vmatpush.xpose.msra.mxu0 0.0
      %1746 = vmatpush.xpose.msra.mxu0 0.0
      %1747 = vmatpush.xpose.msra.mxu0 0.0
      %1748 = vmatpush.xpose.msra.mxu0 0.0
      %1749 = vmatpush.xpose.msra.mxu0 %v1732
      %1750 = vmatmul.f32.gmra.mxu0 %v1730
      %v1751 = vpop.f32.mrf.mxu0
      %v1752 = vadd.f32 0.0, %v1751
      %1753 = vdwg.mxu0
      %v1754 = vsel %vm906, %v1752, -inf
      %1755 = vmax.xlane.f32.xlu0 %v1754
      %v1756 = vpop.xlane.xlu0 %1755
      %v1757 = vsub.f32 %v1752, %v1756
      %v1758 = vmul.f32 %v1757, 1.442695
      %v1759 = vpow.pop %v1758
      %v1760 = vsel %vm906, %v1759, 0.0
      %1761 = vadd.xlane.f32.xlu0 %v1760
      %v1762 = vpop.xlane.xlu0 %1761
      %v1763 = vrcp.pop %v1762
      %v1764 = vmul.f32 %v1762, %v1763
      %v1765 = vsub.f32 1.0, %v1764
      %v1766 = vmul.f32 %v1763, %v1765
      %v1767 = vadd.f32 %v1763, %v1766
      %vm1768 = vweird.f32 %v1762
      %vm1769 = vweird.f32 %v1763
      %vm1770 = vmor %vm1768, %vm1769
      %v1771 = vsel %vm1770, %v1763, %v1767
      %v1772 = vand.u32 2147483647, %v1762
      %vm1773 = vcmp.eq.f32.partialorder %v1772, 8.507059e+37
      %v1774 = vand.u32 %v1762, 2147483648
      %v1775 = vor.u32 1.1754944e-38, %v1774
      %v1776 = vsel %vm1773, %v1775, %v1771
      %v1777 = vmul.f32 %v1759, %v1776
      %1778 = vrot.lane.b32.xlu0 %v1421, 72
      %v1779 = vpop.permute.xlu0 %1778
      %v1782 = vsel %vm906, %v1777, 0
      %1784 = vmatpush.msra.mxu0 0.0
      %1785 = vmatpush.msra.mxu0 0.0
      %1786 = vmatpush.msra.mxu0 0.0
      %1787 = vmatpush.msra.mxu0 0.0
      %1788 = vmatpush.msra.mxu0 0.0
      %1789 = vmatpush.msra.mxu0 0.0
      %1790 = vmatpush.msra.mxu0 0.0
      %1791 = vmatpush.msra.mxu0 0.0
      %1792 = vmatpush.msra.mxu0 0.0
      %1793 = vmatpush.msra.mxu0 0.0
      %1794 = vmatpush.msra.mxu0 0.0
      %1795 = vmatpush.msra.mxu0 0.0
      %1796 = vmatpush.msra.mxu0 0.0
      %1797 = vmatpush.msra.mxu0 0.0
      %1798 = vmatpush.msra.mxu0 0.0
      %1799 = vmatpush.msra.mxu0 %v1779
      %1800 = vmatmul.f32.gmra.mxu0 %v1782
      %v1801 = vpop.f32.mrf.mxu0
      %v1802 = vadd.f32 0.0, %v1801
      %1803 = vdwg.mxu0
      %v1804 = vpack.c.bf16 %v1802, %v1802
      %v1805 = vld [vmem:[%s15 + $0xc] sm:$0xf]
      %v1807 = vsel %vm906, %v1804, 0
      %v1810 = vsel %vm988, %v1805, 0
      %1812 = vmatpush.bf16.msra.mxu0 0
      %1813 = vmatpush.bf16.msra.mxu0 0
      %1814 = vmatpush.bf16.msra.mxu0 0
      %1815 = vmatpush.bf16.msra.mxu0 0
      %1816 = vmatpush.bf16.msra.mxu0 0
      %1817 = vmatpush.bf16.msra.mxu0 0
      %1818 = vmatpush.bf16.msra.mxu0 0
      %1819 = vmatpush.bf16.msra.mxu0 %v1810
      %1820 = vmatmul.bf16.gmra.mxu0 %v1807
      %v1821 = vpop.f32.mrf.mxu0
      %v1822 = vadd.f32 0.0, %v1821
      %v1823 = vpop.f32.mrf.mxu0
      %1824 = vdwg.mxu0
      %v1825 = vadd.f32 %v1725, %v1822
      %v1826 = vadd.f32 %v1825, %v1348
      %v1827 = vsel %vm850, %v1826, 0.0
      %1828 = vadd.xlane.f32.xlu0 %v1827
      %v1829 = vpop.xlane.xlu0 %1828
      %v1830 = vmul.f32 %v1829, %v1319
      %v1831 = vsub.f32 %v1826, %v1830
      %v1832 = vmul.f32 %v1831, %v1831
      %v1833 = vsel %vm850, %v1832, 0.0
      %1834 = vadd.xlane.f32.xlu0 %v1833
      %v1835 = vpop.xlane.xlu0 %1834
      %v1836 = vmul.f32 %v1835, %v1319
      %v1837 = vadd.f32 %v1836, 1e-05
      %v1838 = vrsqrt.pop %v1837
      %v1839 = vmul.f32 %v1838, %v1837
      %v1840 = vmul.f32 %v1839, %v1838
      %v1841 = vmul.f32 0.5, %v1840
      %v1842 = vsub.f32 1.5, %v1841
      %v1843 = vmul.f32 %v1838, %v1842
      %vm1844 = vweird.f32 %v1837
      %vm1845 = vweird.f32 %v1838
      %vm1846 = vmor %vm1844, %vm1845
      %v1847 = vsel %vm1846, %v1838, %v1843
      %v1848 = vmul.f32 %v1831, %v1847
      %v1849 = vld [vmem:[%s17] sm:$0x1]
      %v1851 = vperm.slane %v1849, 0
      %v1853 = vmul.f32 %v1848, %v1851
      %v1854 = vld [vmem:[%s18] sm:$0x1]
      %v1856 = vperm.slane %v1854, 0
      %v1858 = vadd.f32 %v1853, %v1856
      %v1859 = vpack.c.bf16 %v1858, %v1858
      %v1860 = vld [vmem:[%s19] sm:$0xf]
      %v1861 = vld [vmem:[%s19 + $0x4] sm:$0xf]
      %v1862 = vld [vmem:[%s19 + $0x8] sm:$0xf]
      %v1863 = vld [vmem:[%s19 + $0xc] sm:$0xf]
      %v1864 = vld [vmem:[%s20] sm:$0x1]
      %v1866 = vperm.slane %v1864, 0
      %v1872 = vunpack.c.l.b16 %v1860
      %v1873 = vunpack.c.l.b16 %v1861
      %v1874 = vunpack.c.l.b16 %v1862
      %v1875 = vunpack.c.l.b16 %v1863
      %v1876 = vpack.c.b16 %v1873, %v1872
      %v1877 = vpack.c.b16 %v1875, %v1874
      %v1881 = vsel %vm850, %v1859, 0
      %1883 = vmatpush.bf16.msra.mxu0 0
      %1884 = vmatpush.bf16.msra.mxu0 0
      %1885 = vmatpush.bf16.msra.mxu0 0
      %1886 = vmatpush.bf16.msra.mxu0 0
      %1887 = vmatpush.bf16.msra.mxu0 0
      %1888 = vmatpush.bf16.msra.mxu0 0
      %1889 = vmatpush.bf16.msra.mxu0 %v1877
      %1890 = vmatpush.bf16.msra.mxu0 %v1876
      %1891 = vmatmul.bf16.gmra.mxu0 %v1881
      %v1892 = vpop.f32.mrf.mxu0
      %v1893 = vadd.f32 %v1866, %v1892
      %v1894 = vpop.f32.mrf.mxu0
      %1895 = vdwg.mxu0
      %v1896 = vmax.f32 %v1893, 0.0
      %v1897 = vpack.c.bf16 %v1896, %v1896
      %v1898 = vld [vmem:[%s21] sm:$0xf]
      %v1899 = vld [vmem:[%s21 + $0x4] sm:$0xf]
      %v1900 = vld [vmem:[%s21 + $0x8] sm:$0xf]
      %v1901 = vld [vmem:[%s21 + $0xc] sm:$0xf]
      %v1902 = vld [vmem:[%s21 + $0x10] sm:$0xf]
      %v1903 = vld [vmem:[%s21 + $0x14] sm:$0xf]
      %v1904 = vld [vmem:[%s21 + $0x18] sm:$0xf]
      %v1905 = vld [vmem:[%s21 + $0x1c] sm:$0xf]
      %v1906 = vld [vmem:[%s22] sm:$0x1]
      %v1908 = vperm.slane %v1906, 0
      %v1918 = vunpack.c.l.b16 %v1898
      %v1919 = vunpack.c.l.b16 %v1899
      %v1920 = vunpack.c.l.b16 %v1900
      %v1921 = vunpack.c.l.b16 %v1901
      %v1922 = vunpack.c.l.b16 %v1902
      %v1923 = vunpack.c.l.b16 %v1903
      %v1924 = vunpack.c.l.b16 %v1904
      %v1925 = vunpack.c.l.b16 %v1905
      %v1926 = vpack.c.b16 %v1919, %v1918
      %v1927 = vpack.c.b16 %v1921, %v1920
      %v1928 = vpack.c.b16 %v1923, %v1922
      %v1929 = vpack.c.b16 %v1925, %v1924
      %vm1934 = vcmask 523264
      %v1936 = vsel %vm1934, %v1897, 0
      %1938 = vmatpush.bf16.msra.mxu0 0
      %1939 = vmatpush.bf16.msra.mxu0 0
      %1940 = vmatpush.bf16.msra.mxu0 0
      %1941 = vmatpush.bf16.msra.mxu0 0
      %1942 = vmatpush.bf16.msra.mxu0 %v1929
      %1943 = vmatpush.bf16.msra.mxu0 %v1928
      %1944 = vmatpush.bf16.msra.mxu0 %v1927
      %1945 = vmatpush.bf16.msra.mxu0 %v1926
      %1946 = vmatmul.bf16.gmra.mxu0 %v1936
      %v1947 = vpop.f32.mrf.mxu0
      %v1948 = vadd.f32 %v1908, %v1947
      %v1949 = vpop.f32.mrf.mxu0
      %1950 = vdwg.mxu0
      %v1951 = vadd.f32 %v1948, %v1858
      %v1952 = vsel %vm850, %v1951, 0.0
      %1953 = vadd.xlane.f32.xlu0 %v1952
      %v1954 = vpop.xlane.xlu0 %1953
      %v1955 = vmul.f32 %v1954, %v1319
      %v1956 = vsub.f32 %v1951, %v1955
      %v1957 = vmul.f32 %v1956, %v1956
      %v1958 = vsel %vm850, %v1957, 0.0
      %1959 = vadd.xlane.f32.xlu0 %v1958
      %v1960 = vpop.xlane.xlu0 %1959
      %v1961 = vmul.f32 %v1960, %v1319
      %v1962 = vadd.f32 %v1961, 1e-05
      %v1963 = vrsqrt.pop %v1962
      %v1964 = vmul.f32 %v1963, %v1962
      %v1965 = vmul.f32 %v1964, %v1963
      %v1966 = vmul.f32 0.5, %v1965
      %v1967 = vsub.f32 1.5, %v1966
      %v1968 = vmul.f32 %v1963, %v1967
      %vm1969 = vweird.f32 %v1962
      %vm1970 = vweird.f32 %v1963
      %vm1971 = vmor %vm1969, %vm1970
      %v1972 = vsel %vm1971, %v1963, %v1968
      %v1973 = vmul.f32 %v1956, %v1972
      %v1974 = vld [vmem:[%s23] sm:$0x1]
      %v1976 = vperm.slane %v1974, 0
      %v1978 = vmul.f32 %v1973, %v1976
      %v1979 = vld [vmem:[%s24] sm:$0x1]
      %v1981 = vperm.slane %v1979, 0
      %v1983 = vadd.f32 %v1978, %v1981
      %1984 = vst.msk [vmem:[%s824] sm:$0xff] %vm850, %v1983
      %p1985 = scmp.lt.s32.totalorder %s40, 1
      %s1986 = scalar_select %p1985, %s40, 1
      %p1987 = scmp.lt.s32.totalorder %s41, 0
      %s1988 = scalar_select %p1987, %s41, 0
      %s1989 = sadd.s32 %s1988, %s1986
      %s1990 = smul.addr %s1989, 8
      %s1991 = scalar_lea.vmem %s25, %s1990
      // Predicated region
      $region121: #{decoder_forward.2} parent=119 // pred_check
        %p1992 = pneg %p610
      $region122: #{decoder_forward.2} parent=119 // pred_check_branch
        %1994 = sbr.rel (%p1992) target = $region124
      $region123: #{decoder_forward.2} parent=119 // pred_region
        _
      $region124: #{decoder_forward.2} parent=119 // pred_fallthru
        _
    $region120: #{decoder_forward.2} parent=5 // pred_fallthru
      _
    %p1995 = scmp.le.s32.totalorder 2, %s31
    // Predicated region
    $region125: #{decoder_forward.2} parent=5 // pred_check
      %p1996 = pneg %p1995
    $region126: #{decoder_forward.2} parent=5 // pred_check_branch
      %1998 = sbr.rel (%p1996) target = $region128
    $region127: #{decoder_forward.2} parent=5 // pred_region
      %s1999 = ssub.s32 %s31, 2
      // Predicated region
      $region129: #{decoder_forward.2} parent=127 // pred_check
        %p2000 = pneg %p616
      $region130: #{decoder_forward.2} parent=127 // pred_check_branch
        %2002 = sbr.rel (%p2000) target = $region132
      $region131: #{decoder_forward.2} parent=127 // pred_region
        %p2003 = scmp.lt.s32.totalorder %s42, 1
        %s2004 = scalar_select %p2003, %s42, 1
        %p2005 = scmp.lt.s32.totalorder %s43, 0
        %s2006 = scalar_select %p2005, %s43, 0
        %s2007 = sadd.s32 %s2006, %s2004
        %s2008 = smul.addr %s2007, 8
        %s2009 = scalar_lea.vmem %s25, %s2008
      $region132: #{decoder_forward.2} parent=127 // pred_fallthru
        _
    $region128: #{decoder_forward.2} parent=5 // pred_fallthru
      _
  $region6: #{decoder_forward.2} parent=0 // loop_footer
    %s35 = sadd.s32 1, %s31
  $region7: #{decoder_forward.2} parent=0 // loop_footer_branch
    %30 = sbr.rel target = $region3
  $region8: #{decoder_forward.2} parent=0 // loop_exit
    _

// kernel: decoder_forward.3
$region0: #{decoder_forward.3}
  #allocation0 [shape = 'u32[]', space=smem, size = 0x4, offset = 0x4, fixed_abs, tag = 'smem constant byte address 0x4 - core index']
  #allocation1 [shape = 'u32[72,128]{1,0:T(1,128)}', space=vmem, size = 0x9000, scoped, tag = 'internal scratch']
  %s0 = inlined_call_operand.vmem [shape: f32[2,8,32], index: 0, kind: input, shape index: {}, may-alias: {0,1}]
  %s1 = inlined_call_operand.vmem [shape: f32[2,8,32], index: 1, kind: input, shape index: {}, may-alias: {0,1}]
  %s2 = inlined_call_operand.vmem [shape: f32[2,8,32], index: 2, kind: input, shape index: {}]
  %s3 = inlined_call_operand.vmem [shape: bf16[32,32], index: 3, kind: input, shape index: {}]
  %s4 = inlined_call_operand.vmem [shape: f32[1,32], index: 4, kind: input, shape index: {}]
  %s5 = inlined_call_operand.vmem [shape: bf16[32,64], index: 5, kind: input, shape index: {}]
  %s6 = inlined_call_operand.vmem [shape: f32[1,64], index: 6, kind: input, shape index: {}]
  %s7 = inlined_call_operand.vmem [shape: bf16[32,32], index: 7, kind: input, shape index: {}]
  %s8 = inlined_call_operand.vmem [shape: f32[1,32], index: 8, kind: input, shape index: {}]
  %s9 = inlined_call_operand.vmem [shape: f32[1,32], index: 9, kind: input, shape index: {}]
  %s10 = inlined_call_operand.vmem [shape: f32[1,32], index: 10, kind: input, shape index: {}]
  %s11 = inlined_call_operand.vmem [shape: bf16[32,32], index: 11, kind: input, shape index: {}]
  %s12 = inlined_call_operand.vmem [shape: f32[1,32], index: 12, kind: input, shape index: {}]
  %s13 = inlined_call_operand.vmem [shape: bf16[32,64], index: 13, kind: input, shape index: {}]
  %s14 = inlined_call_operand.vmem [shape: f32[1,64], index: 14, kind: input, shape index: {}]
  %s15 = inlined_call_operand.vmem [shape: bf16[32,32], index: 15, kind: input, shape index: {}]
  %s16 = inlined_call_operand.vmem [shape: f32[1,32], index: 16, kind: input, shape index: {}]
  %s17 = inlined_call_operand.hbm [shape: f32[1,32], index: 17, kind: input, shape index: {}]
  %s18 = inlined_call_operand.hbm [shape: f32[1,32], index: 18, kind: input, shape index: {}]
  %s19 = inlined_call_operand.vmem [shape: bf16[32,64], index: 19, kind: input, shape index: {}]
  %s20 = inlined_call_operand.hbm [shape: f32[1,64], index: 20, kind: input, shape index: {}]
  %s21 = inlined_call_operand.vmem [shape: bf16[64,32], index: 21, kind: input, shape index: {}]
  %s22 = inlined_call_operand.hbm [shape: f32[1,32], index: 22, kind: input, shape index: {}]
  %s23 = inlined_call_operand.hbm [shape: f32[1,32], index: 23, kind: input, shape index: {}]
  %s24 = inlined_call_operand.hbm [shape: f32[1,32], index: 24, kind: input, shape index: {}]
  %s25 = inlined_call_operand.hbm [shape: f32[2,8,32], index: 25, kind: output, shape index: {}]
  %s26 = sld [smem:[#allocation0]]
  $region157: #{decoder_forward.3} parent=0
    _
  %s28 = ssub.s32 1, %s26
  %s29 = scalar_select 0, %s28, %s26
  $region1: #{decoder_forward.3} parent=0
    #allocation2 [shape = 'u8[512]{0}', space=vmem, size = 0x400, scoped, tag = 'input window, operand 17, single buffered']
    #allocation3 [shape = 's32[2]{0}', space=sflag, size = 0x8, scoped, tag = 'scoped memory for decoder_forward.3']
    #allocation4 [shape = 's32[2]{0}', space=sflag, size = 0x8, scoped, tag = 'scoped memory for decoder_forward.3']
    #allocation5 [shape = 'u8[512]{0}', space=vmem, size = 0x400, scoped, tag = 'input window, operand 18, single buffered']
    #allocation6 [shape = 's32[1]{0}', space=sflag, size = 0x4, scoped, tag = 'scoped memory for decoder_forward.3']
    #allocation7 [shape = 'u8[512]{0}', space=vmem, size = 0x400, scoped, tag = 'input window, operand 20, single buffered']
    #allocation8 [shape = 'u8[512]{0}', space=vmem, size = 0x400, scoped, tag = 'input window, operand 22, single buffered']
    #allocation9 [shape = 's32[1]{0}', space=sflag, size = 0x4, scoped, tag = 'scoped memory for decoder_forward.3']
    #allocation10 [shape = 'u8[512]{0}', space=vmem, size = 0x400, scoped, tag = 'input window, operand 23, single buffered']
    #allocation11 [shape = 'u8[512]{0}', space=vmem, size = 0x400, scoped, tag = 'input window, operand 24, single buffered']
    #allocation12 [shape = 's32[1]{0}', space=sflag, size = 0x4, scoped, tag = 'scoped memory for decoder_forward.3']
    #allocation13 [shape = 'u8[8192]{0}', space=vmem, size = 0x2000, scoped, tag = 'output window, operand 0']
    %30 = vsyncpa [#allocation3], 0
    %31 = vsyncpa [#allocation6], 0
    %32 = vsyncpa [#allocation9], 0
    %33 = vsyncpa [#allocation12], 0
    %34 = vsyncpa [#allocation4], 0
    %s35 = scalar_lea.sflag [#allocation4], 1
    %36 = vsyncpa %s35, 0
    loop: start=0, step=1, limit=4
    $region2: #{decoder_forward.3} parent=1 // loop_pre_header
      _
    $region3: #{decoder_forward.3} parent=1 // loop_header
      %s38 = sphi 0, %s42
      %p39 = scmp.ge.s32.totalorder %s38, 4
      %s45 = sphi 0, %s57
      %s46 = sphi 0, %s53
      %s47 = sphi 0, %s45
      %s48 = sphi 0, %s46
      %s49 = sphi 0, %s47
      %s50 = sphi 0, %s48
      %s62 = sphi 0, %s64
      %s65 = sphi 0, %s62
      %s66 = sphi 0, %s65
      %s82 = sphi 0, %s66
      %s88 = sphi 0, %s90
      %s91 = sphi 0, %s88
      %s92 = sphi 0, %s91
      %s108 = sphi 0, %s92
      %s114 = sphi 0, %s116
      %s117 = sphi 0, %s114
      %s118 = sphi 0, %s117
      %s134 = sphi 0, %s118
      %s138 = sphi 0, %s138
      %s140 = sphi 0, %s138
      %s141 = sphi 0, %s140
      %s155 = sphi 0, %s141
      %s159 = sphi 0, %s159
      %s161 = sphi 0, %s159
      %s162 = sphi 0, %s161
      %s176 = sphi 0, %s162
      %s180 = sphi 0, %s180
      %s182 = sphi 0, %s180
      %s183 = sphi 0, %s182
      %s197 = sphi 0, %s183
      %s201 = sphi 0, %s201
      %s203 = sphi 0, %s201
      %s204 = sphi 0, %s203
      %s218 = sphi 0, %s204
      %s222 = sphi 0, %s222
      %s224 = sphi 0, %s222
      %s225 = sphi 0, %s224
      %s239 = sphi 0, %s225
      %s243 = sphi 0, %s243
      %s245 = sphi 0, %s243
      %s246 = sphi 0, %s245
      %s260 = sphi 0, %s246
      %s264 = sphi 0, %s264
      %s266 = sphi 0, %s264
      %s267 = sphi 0, %s266
      %s281 = sphi 0, %s267
      %s285 = sphi 0, %s285
      %s287 = sphi 0, %s285
      %s288 = sphi 0, %s287
      %s302 = sphi 0, %s288
      %s306 = sphi 0, %s306
      %s308 = sphi 0, %s306
      %s309 = sphi 0, %s308
      %s323 = sphi 0, %s309
      %s327 = sphi 0, %s327
      %s329 = sphi 0, %s327
      %s330 = sphi 0, %s329
      %s344 = sphi 0, %s330
      %s348 = sphi 0, %s348
      %s350 = sphi 0, %s348
      %s351 = sphi 0, %s350
      %s365 = sphi 0, %s351
      %s369 = sphi 0, %s369
      %s371 = sphi 0, %s369
      %s372 = sphi 0, %s371
      %s386 = sphi 0, %s372
      %s390 = sphi 0, %s390
      %s392 = sphi 0, %s390
      %s393 = sphi 0, %s392
      %s407 = sphi 0, %s393
      %s411 = sphi 0, %s411
      %s413 = sphi 0, %s411
      %s414 = sphi 0, %s413
      %s428 = sphi 0, %s414
      %s432 = sphi 0, %s432
      %s434 = sphi 0, %s432
      %s435 = sphi 0, %s434
      %s449 = sphi 0, %s435
      %s453 = sphi 0, %s453
      %s455 = sphi 0, %s453
      %s456 = sphi 0, %s455
      %s470 = sphi 0, %s456
      %s474 = sphi 0, %s474
      %s476 = sphi 0, %s474
      %s477 = sphi 0, %s476
      %s491 = sphi 0, %s477
      %s495 = sphi 0, %s495
      %s497 = sphi 0, %s495
      %s498 = sphi 0, %s497
      %s512 = sphi 0, %s498
      %s516 = sphi 0, %s516
      %s518 = sphi 0, %s516
      %s519 = sphi 0, %s518
      %s533 = sphi 0, %s519
      %s537 = sphi 0, %s537
      %s539 = sphi 0, %s537
      %s540 = sphi 0, %s539
      %s554 = sphi 0, %s540
      %s558 = sphi 0, %s558
      %s560 = sphi 0, %s558
      %s561 = sphi 0, %s560
      %s575 = sphi 0, %s561
      %s579 = sphi 0, %s579
      %s581 = sphi 0, %s579
      %s582 = sphi 0, %s581
      %s596 = sphi 0, %s582
      %s604 = sphi 0, %s606
      %s607 = sphi 0, %s604
      %s608 = sphi 0, %s607
      %s624 = sphi 0, %s608
    $region4: #{decoder_forward.3} parent=1 // loop_header_branch
      %41 = sbr.rel (%p39) target = $region8
    $region5: #{decoder_forward.3} parent=1 // loop_body
      %s43 = ssub.s32 %s38, 1
      %s44 = ssub.s32 %s38, 2
      %s51 = sadd.s32 1, %s46
      %p52 = scmp.ge.s32.totalorder %s51, 1
      %s53 = scalar_select %p52, 0, %s51
      %s54 = sadd.s32 1, %s45
      %s55 = scalar_select %p52, %s54, %s45
      %p56 = scmp.ge.s32.totalorder %s55, 2
      %s57 = scalar_select %p56, 0, %s55
      %s58 = ssub.s32 %s45, %s57
      %s59 = ssub.s32 %s46, %s53
      %s60 = sor.u32 %s58, %s59
      %p61 = scmp.eq.s32.totalorder %s60, 0
      %s63 = sadd.s32 %s62, 1
      %s64 = scalar_select %p61, %s62, %s63
      %p67 = pneg %p61
      %p68 = scmp.eq.s32.totalorder %s38, 1
      %p69 = por %p67, %p68
      %p70 = scmp.ne.s32.totalorder %s62, %s65
      %p71 = scmp.eq.s32.totalorder %s38, 0
      %p72 = por %p70, %p71
      %p73 = scmp.ne.s32.totalorder %s62, %s65
      %p74 = scmp.eq.s32.totalorder %s43, 1
      %p75 = por %p73, %p74
      %p76 = scmp.ne.s32.totalorder %s65, %s66
      %p77 = scmp.eq.s32.totalorder %s43, 0
      %p78 = por %p76, %p77
      %p79 = scmp.ne.s32.totalorder %s65, %s66
      %p80 = scmp.eq.s32.totalorder %s44, 1
      %p81 = por %p79, %p80
      %p83 = scmp.ne.s32.totalorder %s66, %s82
      %p84 = scmp.eq.s32.totalorder %s44, 0
      %p85 = por %p83, %p84
      %s86 = ssub.s32 %s45, %s57
      %p87 = scmp.eq.s32.totalorder %s86, 0
      %s89 = sadd.s32 %s88, 1
      %s90 = scalar_select %p87, %s88, %s89
      %p93 = pneg %p87
      %p94 = scmp.eq.s32.totalorder %s38, 1
      %p95 = por %p93, %p94
      %p96 = scmp.ne.s32.totalorder %s88, %s91
      %p97 = scmp.eq.s32.totalorder %s38, 0
      %p98 = por %p96, %p97
      %p99 = scmp.ne.s32.totalorder %s88, %s91
      %p100 = scmp.eq.s32.totalorder %s43, 1
      %p101 = por %p99, %p100
      %p102 = scmp.ne.s32.totalorder %s91, %s92
      %p103 = scmp.eq.s32.totalorder %s43, 0
      %p104 = por %p102, %p103
      %p105 = scmp.ne.s32.totalorder %s91, %s92
      %p106 = scmp.eq.s32.totalorder %s44, 1
      %p107 = por %p105, %p106
      %p109 = scmp.ne.s32.totalorder %s92, %s108
      %p110 = scmp.eq.s32.totalorder %s44, 0
      %p111 = por %p109, %p110
      %s112 = ssub.s32 %s45, %s57
      %p113 = scmp.eq.s32.totalorder %s112, 0
      %s115 = sadd.s32 %s114, 1
      %s116 = scalar_select %p113, %s114, %s115
      %p119 = pneg %p113
      %p120 = scmp.eq.s32.totalorder %s38, 1
      %p121 = por %p119, %p120
      %p122 = scmp.ne.s32.totalorder %s114, %s117
      %p123 = scmp.eq.s32.totalorder %s38, 0
      %p124 = por %p122, %p123
      %p125 = scmp.ne.s32.totalorder %s114, %s117
      %p126 = scmp.eq.s32.totalorder %s43, 1
      %p127 = por %p125, %p126
      %p128 = scmp.ne.s32.totalorder %s117, %s118
      %p129 = scmp.eq.s32.totalorder %s43, 0
      %p130 = por %p128, %p129
      %p131 = scmp.ne.s32.totalorder %s117, %s118
      %p132 = scmp.eq.s32.totalorder %s44, 1
      %p133 = por %p131, %p132
      %p135 = scmp.ne.s32.totalorder %s118, %s134
      %p136 = scmp.eq.s32.totalorder %s44, 0
      %p137 = por %p135, %p136
      %s139 = sadd.s32 %s138, 1
      %p142 = scmp.eq.s32.totalorder %s38, 1
      %p143 = scmp.ne.s32.totalorder %s138, %s140
      %p144 = scmp.eq.s32.totalorder %s38, 0
      %p145 = por %p143, %p144
      %p146 = scmp.ne.s32.totalorder %s138, %s140
      %p147 = scmp.eq.s32.totalorder %s43, 1
      %p148 = por %p146, %p147
      %p149 = scmp.ne.s32.totalorder %s140, %s141
      %p150 = scmp.eq.s32.totalorder %s43, 0
      %p151 = por %p149, %p150
      %p152 = scmp.ne.s32.totalorder %s140, %s141
      %p153 = scmp.eq.s32.totalorder %s44, 1
      %p154 = por %p152, %p153
      %p156 = scmp.ne.s32.totalorder %s141, %s155
      %p157 = scmp.eq.s32.totalorder %s44, 0
      %p158 = por %p156, %p157
      %s160 = sadd.s32 %s159, 1
      %p163 = scmp.eq.s32.totalorder %s38, 1
      %p164 = scmp.ne.s32.totalorder %s159, %s161
      %p165 = scmp.eq.s32.totalorder %s38, 0
      %p166 = por %p164, %p165
      %p167 = scmp.ne.s32.totalorder %s159, %s161
      %p168 = scmp.eq.s32.totalorder %s43, 1
      %p169 = por %p167, %p168
      %p170 = scmp.ne.s32.totalorder %s161, %s162
      %p171 = scmp.eq.s32.totalorder %s43, 0
      %p172 = por %p170, %p171
      %p173 = scmp.ne.s32.totalorder %s161, %s162
      %p174 = scmp.eq.s32.totalorder %s44, 1
      %p175 = por %p173, %p174
      %p177 = scmp.ne.s32.totalorder %s162, %s176
      %p178 = scmp.eq.s32.totalorder %s44, 0
      %p179 = por %p177, %p178
      %s181 = sadd.s32 %s180, 1
      %p184 = scmp.eq.s32.totalorder %s38, 1
      %p185 = scmp.ne.s32.totalorder %s180, %s182
      %p186 = scmp.eq.s32.totalorder %s38, 0
      %p187 = por %p185, %p186
      %p188 = scmp.ne.s32.totalorder %s180, %s182
      %p189 = scmp.eq.s32.totalorder %s43, 1
      %p190 = por %p188, %p189
      %p191 = scmp.ne.s32.totalorder %s182, %s183
      %p192 = scmp.eq.s32.totalorder %s43, 0
      %p193 = por %p191, %p192
      %p194 = scmp.ne.s32.totalorder %s182, %s183
      %p195 = scmp.eq.s32.totalorder %s44, 1
      %p196 = por %p194, %p195
      %p198 = scmp.ne.s32.totalorder %s183, %s197
      %p199 = scmp.eq.s32.totalorder %s44, 0
      %p200 = por %p198, %p199
      %s202 = sadd.s32 %s201, 1
      %p205 = scmp.eq.s32.totalorder %s38, 1
      %p206 = scmp.ne.s32.totalorder %s201, %s203
      %p207 = scmp.eq.s32.totalorder %s38, 0
      %p208 = por %p206, %p207
      %p209 = scmp.ne.s32.totalorder %s201, %s203
      %p210 = scmp.eq.s32.totalorder %s43, 1
      %p211 = por %p209, %p210
      %p212 = scmp.ne.s32.totalorder %s203, %s204
      %p213 = scmp.eq.s32.totalorder %s43, 0
      %p214 = por %p212, %p213
      %p215 = scmp.ne.s32.totalorder %s203, %s204
      %p216 = scmp.eq.s32.totalorder %s44, 1
      %p217 = por %p215, %p216
      %p219 = scmp.ne.s32.totalorder %s204, %s218
      %p220 = scmp.eq.s32.totalorder %s44, 0
      %p221 = por %p219, %p220
      %s223 = sadd.s32 %s222, 1
      %p226 = scmp.eq.s32.totalorder %s38, 1
      %p227 = scmp.ne.s32.totalorder %s222, %s224
      %p228 = scmp.eq.s32.totalorder %s38, 0
      %p229 = por %p227, %p228
      %p230 = scmp.ne.s32.totalorder %s222, %s224
      %p231 = scmp.eq.s32.totalorder %s43, 1
      %p232 = por %p230, %p231
      %p233 = scmp.ne.s32.totalorder %s224, %s225
      %p234 = scmp.eq.s32.totalorder %s43, 0
      %p235 = por %p233, %p234
      %p236 = scmp.ne.s32.totalorder %s224, %s225
      %p237 = scmp.eq.s32.totalorder %s44, 1
      %p238 = por %p236, %p237
      %p240 = scmp.ne.s32.totalorder %s225, %s239
      %p241 = scmp.eq.s32.totalorder %s44, 0
      %p242 = por %p240, %p241
      %s244 = sadd.s32 %s243, 1
      %p247 = scmp.eq.s32.totalorder %s38, 1
      %p248 = scmp.ne.s32.totalorder %s243, %s245
      %p249 = scmp.eq.s32.totalorder %s38, 0
      %p250 = por %p248, %p249
      %p251 = scmp.ne.s32.totalorder %s243, %s245
      %p252 = scmp.eq.s32.totalorder %s43, 1
      %p253 = por %p251, %p252
      %p254 = scmp.ne.s32.totalorder %s245, %s246
      %p255 = scmp.eq.s32.totalorder %s43, 0
      %p256 = por %p254, %p255
      %p257 = scmp.ne.s32.totalorder %s245, %s246
      %p258 = scmp.eq.s32.totalorder %s44, 1
      %p259 = por %p257, %p258
      %p261 = scmp.ne.s32.totalorder %s246, %s260
      %p262 = scmp.eq.s32.totalorder %s44, 0
      %p263 = por %p261, %p262
      %s265 = sadd.s32 %s264, 1
      %p268 = scmp.eq.s32.totalorder %s38, 1
      %p269 = scmp.ne.s32.totalorder %s264, %s266
      %p270 = scmp.eq.s32.totalorder %s38, 0
      %p271 = por %p269, %p270
      %p272 = scmp.ne.s32.totalorder %s264, %s266
      %p273 = scmp.eq.s32.totalorder %s43, 1
      %p274 = por %p272, %p273
      %p275 = scmp.ne.s32.totalorder %s266, %s267
      %p276 = scmp.eq.s32.totalorder %s43, 0
      %p277 = por %p275, %p276
      %p278 = scmp.ne.s32.totalorder %s266, %s267
      %p279 = scmp.eq.s32.totalorder %s44, 1
      %p280 = por %p278, %p279
      %p282 = scmp.ne.s32.totalorder %s267, %s281
      %p283 = scmp.eq.s32.totalorder %s44, 0
      %p284 = por %p282, %p283
      %s286 = sadd.s32 %s285, 1
      %p289 = scmp.eq.s32.totalorder %s38, 1
      %p290 = scmp.ne.s32.totalorder %s285, %s287
      %p291 = scmp.eq.s32.totalorder %s38, 0
      %p292 = por %p290, %p291
      %p293 = scmp.ne.s32.totalorder %s285, %s287
      %p294 = scmp.eq.s32.totalorder %s43, 1
      %p295 = por %p293, %p294
      %p296 = scmp.ne.s32.totalorder %s287, %s288
      %p297 = scmp.eq.s32.totalorder %s43, 0
      %p298 = por %p296, %p297
      %p299 = scmp.ne.s32.totalorder %s287, %s288
      %p300 = scmp.eq.s32.totalorder %s44, 1
      %p301 = por %p299, %p300
      %p303 = scmp.ne.s32.totalorder %s288, %s302
      %p304 = scmp.eq.s32.totalorder %s44, 0
      %p305 = por %p303, %p304
      %s307 = sadd.s32 %s306, 1
      %p310 = scmp.eq.s32.totalorder %s38, 1
      %p311 = scmp.ne.s32.totalorder %s306, %s308
      %p312 = scmp.eq.s32.totalorder %s38, 0
      %p313 = por %p311, %p312
      %p314 = scmp.ne.s32.totalorder %s306, %s308
      %p315 = scmp.eq.s32.totalorder %s43, 1
      %p316 = por %p314, %p315
      %p317 = scmp.ne.s32.totalorder %s308, %s309
      %p318 = scmp.eq.s32.totalorder %s43, 0
      %p319 = por %p317, %p318
      %p320 = scmp.ne.s32.totalorder %s308, %s309
      %p321 = scmp.eq.s32.totalorder %s44, 1
      %p322 = por %p320, %p321
      %p324 = scmp.ne.s32.totalorder %s309, %s323
      %p325 = scmp.eq.s32.totalorder %s44, 0
      %p326 = por %p324, %p325
      %s328 = sadd.s32 %s327, 1
      %p331 = scmp.eq.s32.totalorder %s38, 1
      %p332 = scmp.ne.s32.totalorder %s327, %s329
      %p333 = scmp.eq.s32.totalorder %s38, 0
      %p334 = por %p332, %p333
      %p335 = scmp.ne.s32.totalorder %s327, %s329
      %p336 = scmp.eq.s32.totalorder %s43, 1
      %p337 = por %p335, %p336
      %p338 = scmp.ne.s32.totalorder %s329, %s330
      %p339 = scmp.eq.s32.totalorder %s43, 0
      %p340 = por %p338, %p339
      %p341 = scmp.ne.s32.totalorder %s329, %s330
      %p342 = scmp.eq.s32.totalorder %s44, 1
      %p343 = por %p341, %p342
      %p345 = scmp.ne.s32.totalorder %s330, %s344
      %p346 = scmp.eq.s32.totalorder %s44, 0
      %p347 = por %p345, %p346
      %s349 = sadd.s32 %s348, 1
      %p352 = scmp.eq.s32.totalorder %s38, 1
      %p353 = scmp.ne.s32.totalorder %s348, %s350
      %p354 = scmp.eq.s32.totalorder %s38, 0
      %p355 = por %p353, %p354
      %p356 = scmp.ne.s32.totalorder %s348, %s350
      %p357 = scmp.eq.s32.totalorder %s43, 1
      %p358 = por %p356, %p357
      %p359 = scmp.ne.s32.totalorder %s350, %s351
      %p360 = scmp.eq.s32.totalorder %s43, 0
      %p361 = por %p359, %p360
      %p362 = scmp.ne.s32.totalorder %s350, %s351
      %p363 = scmp.eq.s32.totalorder %s44, 1
      %p364 = por %p362, %p363
      %p366 = scmp.ne.s32.totalorder %s351, %s365
      %p367 = scmp.eq.s32.totalorder %s44, 0
      %p368 = por %p366, %p367
      %s370 = sadd.s32 %s369, 1
      %p373 = scmp.eq.s32.totalorder %s38, 1
      %p374 = scmp.ne.s32.totalorder %s369, %s371
      %p375 = scmp.eq.s32.totalorder %s38, 0
      %p376 = por %p374, %p375
      %p377 = scmp.ne.s32.totalorder %s369, %s371
      %p378 = scmp.eq.s32.totalorder %s43, 1
      %p379 = por %p377, %p378
      %p380 = scmp.ne.s32.totalorder %s371, %s372
      %p381 = scmp.eq.s32.totalorder %s43, 0
      %p382 = por %p380, %p381
      %p383 = scmp.ne.s32.totalorder %s371, %s372
      %p384 = scmp.eq.s32.totalorder %s44, 1
      %p385 = por %p383, %p384
      %p387 = scmp.ne.s32.totalorder %s372, %s386
      %p388 = scmp.eq.s32.totalorder %s44, 0
      %p389 = por %p387, %p388
      %s391 = sadd.s32 %s390, 1
      %p394 = scmp.eq.s32.totalorder %s38, 1
      %p395 = scmp.ne.s32.totalorder %s390, %s392
      %p396 = scmp.eq.s32.totalorder %s38, 0
      %p397 = por %p395, %p396
      %p398 = scmp.ne.s32.totalorder %s390, %s392
      %p399 = scmp.eq.s32.totalorder %s43, 1
      %p400 = por %p398, %p399
      %p401 = scmp.ne.s32.totalorder %s392, %s393
      %p402 = scmp.eq.s32.totalorder %s43, 0
      %p403 = por %p401, %p402
      %p404 = scmp.ne.s32.totalorder %s392, %s393
      %p405 = scmp.eq.s32.totalorder %s44, 1
      %p406 = por %p404, %p405
      %p408 = scmp.ne.s32.totalorder %s393, %s407
      %p409 = scmp.eq.s32.totalorder %s44, 0
      %p410 = por %p408, %p409
      %s412 = sadd.s32 %s411, 1
      %p415 = scmp.eq.s32.totalorder %s38, 1
      %p416 = scmp.ne.s32.totalorder %s411, %s413
      %p417 = scmp.eq.s32.totalorder %s38, 0
      %p418 = por %p416, %p417
      %p419 = scmp.ne.s32.totalorder %s411, %s413
      %p420 = scmp.eq.s32.totalorder %s43, 1
      %p421 = por %p419, %p420
      %p422 = scmp.ne.s32.totalorder %s413, %s414
      %p423 = scmp.eq.s32.totalorder %s43, 0
      %p424 = por %p422, %p423
      %p425 = scmp.ne.s32.totalorder %s413, %s414
      %p426 = scmp.eq.s32.totalorder %s44, 1
      %p427 = por %p425, %p426
      %p429 = scmp.ne.s32.totalorder %s414, %s428
      %p430 = scmp.eq.s32.totalorder %s44, 0
      %p431 = por %p429, %p430
      %s433 = sadd.s32 %s432, 1
      %p436 = scmp.eq.s32.totalorder %s38, 1
      %p437 = scmp.ne.s32.totalorder %s432, %s434
      %p438 = scmp.eq.s32.totalorder %s38, 0
      %p439 = por %p437, %p438
      %p440 = scmp.ne.s32.totalorder %s432, %s434
      %p441 = scmp.eq.s32.totalorder %s43, 1
      %p442 = por %p440, %p441
      %p443 = scmp.ne.s32.totalorder %s434, %s435
      %p444 = scmp.eq.s32.totalorder %s43, 0
      %p445 = por %p443, %p444
      %p446 = scmp.ne.s32.totalorder %s434, %s435
      %p447 = scmp.eq.s32.totalorder %s44, 1
      %p448 = por %p446, %p447
      %p450 = scmp.ne.s32.totalorder %s435, %s449
      %p451 = scmp.eq.s32.totalorder %s44, 0
      %p452 = por %p450, %p451
      %s454 = sadd.s32 %s453, 1
      %p457 = scmp.eq.s32.totalorder %s38, 1
      %p458 = scmp.ne.s32.totalorder %s453, %s455
      %p459 = scmp.eq.s32.totalorder %s38, 0
      %p460 = por %p458, %p459
      %p461 = scmp.ne.s32.totalorder %s453, %s455
      %p462 = scmp.eq.s32.totalorder %s43, 1
      %p463 = por %p461, %p462
      %p464 = scmp.ne.s32.totalorder %s455, %s456
      %p465 = scmp.eq.s32.totalorder %s43, 0
      %p466 = por %p464, %p465
      %p467 = scmp.ne.s32.totalorder %s455, %s456
      %p468 = scmp.eq.s32.totalorder %s44, 1
      %p469 = por %p467, %p468
      %p471 = scmp.ne.s32.totalorder %s456, %s470
      %p472 = scmp.eq.s32.totalorder %s44, 0
      %p473 = por %p471, %p472
      %s475 = sadd.s32 %s474, 1
      %p478 = scmp.eq.s32.totalorder %s38, 1
      %p479 = scmp.ne.s32.totalorder %s474, %s476
      %p480 = scmp.eq.s32.totalorder %s38, 0
      %p481 = por %p479, %p480
      %p482 = scmp.ne.s32.totalorder %s474, %s476
      %p483 = scmp.eq.s32.totalorder %s43, 1
      %p484 = por %p482, %p483
      %p485 = scmp.ne.s32.totalorder %s476, %s477
      %p486 = scmp.eq.s32.totalorder %s43, 0
      %p487 = por %p485, %p486
      %p488 = scmp.ne.s32.totalorder %s476, %s477
      %p489 = scmp.eq.s32.totalorder %s44, 1
      %p490 = por %p488, %p489
      %p492 = scmp.ne.s32.totalorder %s477, %s491
      %p493 = scmp.eq.s32.totalorder %s44, 0
      %p494 = por %p492, %p493
      %s496 = sadd.s32 %s495, 1
      %p499 = scmp.eq.s32.totalorder %s38, 1
      %p500 = scmp.ne.s32.totalorder %s495, %s497
      %p501 = scmp.eq.s32.totalorder %s38, 0
      %p502 = por %p500, %p501
      %p503 = scmp.ne.s32.totalorder %s495, %s497
      %p504 = scmp.eq.s32.totalorder %s43, 1
      %p505 = por %p503, %p504
      %p506 = scmp.ne.s32.totalorder %s497, %s498
      %p507 = scmp.eq.s32.totalorder %s43, 0
      %p508 = por %p506, %p507
      %p509 = scmp.ne.s32.totalorder %s497, %s498
      %p510 = scmp.eq.s32.totalorder %s44, 1
      %p511 = por %p509, %p510
      %p513 = scmp.ne.s32.totalorder %s498, %s512
      %p514 = scmp.eq.s32.totalorder %s44, 0
      %p515 = por %p513, %p514
      %s517 = sadd.s32 %s516, 1
      %p520 = scmp.eq.s32.totalorder %s38, 1
      %p521 = scmp.ne.s32.totalorder %s516, %s518
      %p522 = scmp.eq.s32.totalorder %s38, 0
      %p523 = por %p521, %p522
      %p524 = scmp.ne.s32.totalorder %s516, %s518
      %p525 = scmp.eq.s32.totalorder %s43, 1
      %p526 = por %p524, %p525
      %p527 = scmp.ne.s32.totalorder %s518, %s519
      %p528 = scmp.eq.s32.totalorder %s43, 0
      %p529 = por %p527, %p528
      %p530 = scmp.ne.s32.totalorder %s518, %s519
      %p531 = scmp.eq.s32.totalorder %s44, 1
      %p532 = por %p530, %p531
      %p534 = scmp.ne.s32.totalorder %s519, %s533
      %p535 = scmp.eq.s32.totalorder %s44, 0
      %p536 = por %p534, %p535
      %s538 = sadd.s32 %s537, 1
      %p541 = scmp.eq.s32.totalorder %s38, 1
      %p542 = scmp.ne.s32.totalorder %s537, %s539
      %p543 = scmp.eq.s32.totalorder %s38, 0
      %p544 = por %p542, %p543
      %p545 = scmp.ne.s32.totalorder %s537, %s539
      %p546 = scmp.eq.s32.totalorder %s43, 1
      %p547 = por %p545, %p546
      %p548 = scmp.ne.s32.totalorder %s539, %s540
      %p549 = scmp.eq.s32.totalorder %s43, 0
      %p550 = por %p548, %p549
      %p551 = scmp.ne.s32.totalorder %s539, %s540
      %p552 = scmp.eq.s32.totalorder %s44, 1
      %p553 = por %p551, %p552
      %p555 = scmp.ne.s32.totalorder %s540, %s554
      %p556 = scmp.eq.s32.totalorder %s44, 0
      %p557 = por %p555, %p556
      %s559 = sadd.s32 %s558, 1
      %p562 = scmp.eq.s32.totalorder %s38, 1
      %p563 = scmp.ne.s32.totalorder %s558, %s560
      %p564 = scmp.eq.s32.totalorder %s38, 0
      %p565 = por %p563, %p564
      %p566 = scmp.ne.s32.totalorder %s558, %s560
      %p567 = scmp.eq.s32.totalorder %s43, 1
      %p568 = por %p566, %p567
      %p569 = scmp.ne.s32.totalorder %s560, %s561
      %p570 = scmp.eq.s32.totalorder %s43, 0
      %p571 = por %p569, %p570
      %p572 = scmp.ne.s32.totalorder %s560, %s561
      %p573 = scmp.eq.s32.totalorder %s44, 1
      %p574 = por %p572, %p573
      %p576 = scmp.ne.s32.totalorder %s561, %s575
      %p577 = scmp.eq.s32.totalorder %s44, 0
      %p578 = por %p576, %p577
      %s580 = sadd.s32 %s579, 1
      %p583 = scmp.eq.s32.totalorder %s38, 1
      %p584 = scmp.ne.s32.totalorder %s579, %s581
      %p585 = scmp.eq.s32.totalorder %s38, 0
      %p586 = por %p584, %p585
      %p587 = scmp.ne.s32.totalorder %s579, %s581
      %p588 = scmp.eq.s32.totalorder %s43, 1
      %p589 = por %p587, %p588
      %p590 = scmp.ne.s32.totalorder %s581, %s582
      %p591 = scmp.eq.s32.totalorder %s43, 0
      %p592 = por %p590, %p591
      %p593 = scmp.ne.s32.totalorder %s581, %s582
      %p594 = scmp.eq.s32.totalorder %s44, 1
      %p595 = por %p593, %p594
      %p597 = scmp.ne.s32.totalorder %s582, %s596
      %p598 = scmp.eq.s32.totalorder %s44, 0
      %p599 = por %p597, %p598
      %s600 = ssub.s32 %s45, %s57
      %s601 = ssub.s32 %s46, %s53
      %s602 = sor.u32 %s600, %s601
      %p603 = scmp.eq.s32.totalorder %s602, 0
      %s605 = sadd.s32 %s604, 1
      %s606 = scalar_select %p603, %s604, %s605
      %p609 = pneg %p603
      %p610 = scmp.eq.s32.totalorder %s38, 1
      %p611 = por %p609, %p610
      %p612 = scmp.ne.s32.totalorder %s604, %s607
      %p613 = scmp.eq.s32.totalorder %s38, 0
      %p614 = por %p612, %p613
      %p615 = scmp.ne.s32.totalorder %s604, %s607
      %p616 = scmp.eq.s32.totalorder %s43, 1
      %p617 = por %p615, %p616
      %p618 = scmp.ne.s32.totalorder %s607, %s608
      %p619 = scmp.eq.s32.totalorder %s43, 0
      %p620 = por %p618, %p619
      %p621 = scmp.ne.s32.totalorder %s607, %s608
      %p622 = scmp.eq.s32.totalorder %s44, 1
      %p623 = por %p621, %p622
      %p625 = scmp.ne.s32.totalorder %s608, %s624
      %p626 = scmp.eq.s32.totalorder %s44, 0
      %p627 = por %p625, %p626
      %p628 = scmp.le.s32.totalorder 1, %s38
      %p629 = scmp.lt.s32.totalorder %s38, 3
      %p630 = pnand %p628, %p629
      %p631 = pneg %p630
      // Predicated region
      $region9: #{decoder_forward.3} parent=5 // pred_check
        _
      $region10: #{decoder_forward.3} parent=5 // pred_check_branch
        %633 = sbr.rel (%p630) target = $region12
      $region11: #{decoder_forward.3} parent=5 // pred_region
        %s634 = ssub.s32 %s38, 1
        // Predicated region
        $region13: #{decoder_forward.3} parent=11 // pred_check
          %p635 = pneg %p151
        $region14: #{decoder_forward.3} parent=11 // pred_check_branch
          %637 = sbr.rel (%p635) target = $region16
        $region15: #{decoder_forward.3} parent=11 // pred_region
          _
        $region16: #{decoder_forward.3} parent=11 // pred_fallthru
          _
        // Predicated region
        $region17: #{decoder_forward.3} parent=11 // pred_check
          %p638 = pneg %p172
        $region18: #{decoder_forward.3} parent=11 // pred_check_branch
          %640 = sbr.rel (%p638) target = $region20
        $region19: #{decoder_forward.3} parent=11 // pred_region
          _
        $region20: #{decoder_forward.3} parent=11 // pred_fallthru
          _
        // Predicated region
        $region21: #{decoder_forward.3} parent=11 // pred_check
          %p641 = pneg %p193
        $region22: #{decoder_forward.3} parent=11 // pred_check_branch
          %643 = sbr.rel (%p641) target = $region24
        $region23: #{decoder_forward.3} parent=11 // pred_region
          _
        $region24: #{decoder_forward.3} parent=11 // pred_fallthru
          _
        // Predicated region
        $region25: #{decoder_forward.3} parent=11 // pred_check
          %p644 = pneg %p214
        $region26: #{decoder_forward.3} parent=11 // pred_check_branch
          %646 = sbr.rel (%p644) target = $region28
        $region27: #{decoder_forward.3} parent=11 // pred_region
          _
        $region28: #{decoder_forward.3} parent=11 // pred_fallthru
          _
        // Predicated region
        $region29: #{decoder_forward.3} parent=11 // pred_check
          %p647 = pneg %p235
        $region30: #{decoder_forward.3} parent=11 // pred_check_branch
          %649 = sbr.rel (%p647) target = $region32
        $region31: #{decoder_forward.3} parent=11 // pred_region
          _
        $region32: #{decoder_forward.3} parent=11 // pred_fallthru
          _
        // Predicated region
        $region33: #{decoder_forward.3} parent=11 // pred_check
          %p650 = pneg %p256
        $region34: #{decoder_forward.3} parent=11 // pred_check_branch
          %652 = sbr.rel (%p650) target = $region36
        $region35: #{decoder_forward.3} parent=11 // pred_region
          _
        $region36: #{decoder_forward.3} parent=11 // pred_fallthru
          _
        // Predicated region
        $region37: #{decoder_forward.3} parent=11 // pred_check
          %p653 = pneg %p277
        $region38: #{decoder_forward.3} parent=11 // pred_check_branch
          %655 = sbr.rel (%p653) target = $region40
        $region39: #{decoder_forward.3} parent=11 // pred_region
          _
        $region40: #{decoder_forward.3} parent=11 // pred_fallthru
          _
        // Predicated region
        $region41: #{decoder_forward.3} parent=11 // pred_check
          %p656 = pneg %p298
        $region42: #{decoder_forward.3} parent=11 // pred_check_branch
          %658 = sbr.rel (%p656) target = $region44
        $region43: #{decoder_forward.3} parent=11 // pred_region
          _
        $region44: #{decoder_forward.3} parent=11 // pred_fallthru
          _
        // Predicated region
        $region45: #{decoder_forward.3} parent=11 // pred_check
          %p659 = pneg %p319
        $region46: #{decoder_forward.3} parent=11 // pred_check_branch
          %661 = sbr.rel (%p659) target = $region48
        $region47: #{decoder_forward.3} parent=11 // pred_region
          _
        $region48: #{decoder_forward.3} parent=11 // pred_fallthru
          _
        // Predicated region
        $region49: #{decoder_forward.3} parent=11 // pred_check
          %p662 = pneg %p340
        $region50: #{decoder_forward.3} parent=11 // pred_check_branch
          %664 = sbr.rel (%p662) target = $region52
        $region51: #{decoder_forward.3} parent=11 // pred_region
          _
        $region52: #{decoder_forward.3} parent=11 // pred_fallthru
          _
        // Predicated region
        $region53: #{decoder_forward.3} parent=11 // pred_check
          %p665 = pneg %p361
        $region54: #{decoder_forward.3} parent=11 // pred_check_branch
          %667 = sbr.rel (%p665) target = $region56
        $region55: #{decoder_forward.3} parent=11 // pred_region
          _
        $region56: #{decoder_forward.3} parent=11 // pred_fallthru
          _
        // Predicated region
        $region57: #{decoder_forward.3} parent=11 // pred_check
          %p668 = pneg %p382
        $region58: #{decoder_forward.3} parent=11 // pred_check_branch
          %670 = sbr.rel (%p668) target = $region60
        $region59: #{decoder_forward.3} parent=11 // pred_region
          _
        $region60: #{decoder_forward.3} parent=11 // pred_fallthru
          _
        // Predicated region
        $region61: #{decoder_forward.3} parent=11 // pred_check
          %p671 = pneg %p403
        $region62: #{decoder_forward.3} parent=11 // pred_check_branch
          %673 = sbr.rel (%p671) target = $region64
        $region63: #{decoder_forward.3} parent=11 // pred_region
          _
        $region64: #{decoder_forward.3} parent=11 // pred_fallthru
          _
        // Predicated region
        $region65: #{decoder_forward.3} parent=11 // pred_check
          %p674 = pneg %p424
        $region66: #{decoder_forward.3} parent=11 // pred_check_branch
          %676 = sbr.rel (%p674) target = $region68
        $region67: #{decoder_forward.3} parent=11 // pred_region
          _
        $region68: #{decoder_forward.3} parent=11 // pred_fallthru
          _
        // Predicated region
        $region69: #{decoder_forward.3} parent=11 // pred_check
          %p677 = pneg %p445
        $region70: #{decoder_forward.3} parent=11 // pred_check_branch
          %679 = sbr.rel (%p677) target = $region72
        $region71: #{decoder_forward.3} parent=11 // pred_region
          %681 = vsyncadd [#allocation3], 0
          %s683 = sshll.u32 %s17, 4
          %s684 = int_to_ptr.hbm [resolvable:$true] %s683
          %s685 = sshll.u32 [#allocation2], 4
          %s686 = int_to_ptr.vmem [resolvable:$true] %s685
          %688 = dma.hbm_to_vmem [thread:$0]  %s684, 16, %s686, [#allocation3]
        $region72: #{decoder_forward.3} parent=11 // pred_fallthru
          _
        // Predicated region
        $region73: #{decoder_forward.3} parent=11 // pred_check
          %p689 = pneg %p466
        $region74: #{decoder_forward.3} parent=11 // pred_check_branch
          %691 = sbr.rel (%p689) target = $region76
        $region75: #{decoder_forward.3} parent=11 // pred_region
          %693 = vsyncadd [#allocation6], 0
          %s695 = sshll.u32 %s18, 4
          %s696 = int_to_ptr.hbm [resolvable:$true] %s695
          %s697 = sshll.u32 [#allocation5], 4
          %s698 = int_to_ptr.vmem [resolvable:$true] %s697
          %700 = dma.hbm_to_vmem [thread:$0]  %s696, 16, %s698, [#allocation6]
        $region76: #{decoder_forward.3} parent=11 // pred_fallthru
          _
        // Predicated region
        $region77: #{decoder_forward.3} parent=11 // pred_check
          %p701 = pneg %p487
        $region78: #{decoder_forward.3} parent=11 // pred_check_branch
          %703 = sbr.rel (%p701) target = $region80
        $region79: #{decoder_forward.3} parent=11 // pred_region
          _
        $region80: #{decoder_forward.3} parent=11 // pred_fallthru
          _
        // Predicated region
        $region81: #{decoder_forward.3} parent=11 // pred_check
          %p704 = pneg %p508
        $region82: #{decoder_forward.3} parent=11 // pred_check_branch
          %706 = sbr.rel (%p704) target = $region84
        $region83: #{decoder_forward.3} parent=11 // pred_region
          %708 = vsyncadd [#allocation6], 0
          %s710 = sshll.u32 %s20, 4
          %s711 = int_to_ptr.hbm [resolvable:$true] %s710
          %s712 = sshll.u32 [#allocation7], 4
          %s713 = int_to_ptr.vmem [resolvable:$true] %s712
          %715 = dma.hbm_to_vmem [thread:$0]  %s711, 16, %s713, [#allocation6]
        $region84: #{decoder_forward.3} parent=11 // pred_fallthru
          _
        // Predicated region
        $region85: #{decoder_forward.3} parent=11 // pred_check
          %p716 = pneg %p529
        $region86: #{decoder_forward.3} parent=11 // pred_check_branch
          %718 = sbr.rel (%p716) target = $region88
        $region87: #{decoder_forward.3} parent=11 // pred_region
          _
        $region88: #{decoder_forward.3} parent=11 // pred_fallthru
          _
        // Predicated region
        $region89: #{decoder_forward.3} parent=11 // pred_check
          %p719 = pneg %p550
        $region90: #{decoder_forward.3} parent=11 // pred_check_branch
          %721 = sbr.rel (%p719) target = $region92
        $region91: #{decoder_forward.3} parent=11 // pred_region
          %723 = vsyncadd [#allocation9], 0
          %s725 = sshll.u32 %s22, 4
          %s726 = int_to_ptr.hbm [resolvable:$true] %s725
          %s727 = sshll.u32 [#allocation8], 4
          %s728 = int_to_ptr.vmem [resolvable:$true] %s727
          %730 = dma.hbm_to_vmem [thread:$0]  %s726, 16, %s728, [#allocation9]
        $region92: #{decoder_forward.3} parent=11 // pred_fallthru
          _
        // Predicated region
        $region93: #{decoder_forward.3} parent=11 // pred_check
          %p731 = pneg %p571
        $region94: #{decoder_forward.3} parent=11 // pred_check_branch
          %733 = sbr.rel (%p731) target = $region96
        $region95: #{decoder_forward.3} parent=11 // pred_region
          %735 = vsyncadd [#allocation9], 0
          %s737 = sshll.u32 %s23, 4
          %s738 = int_to_ptr.hbm [resolvable:$true] %s737
          %s739 = sshll.u32 [#allocation10], 4
          %s740 = int_to_ptr.vmem [resolvable:$true] %s739
          %742 = dma.hbm_to_vmem [thread:$0]  %s738, 16, %s740, [#allocation9]
        $region96: #{decoder_forward.3} parent=11 // pred_fallthru
          _
        // Predicated region
        $region97: #{decoder_forward.3} parent=11 // pred_check
          %p743 = pneg %p592
        $region98: #{decoder_forward.3} parent=11 // pred_check_branch
          %745 = sbr.rel (%p743) target = $region100
        $region99: #{decoder_forward.3} parent=11 // pred_region
          %747 = vsyncadd [#allocation12], 0
          %s749 = sshll.u32 %s24, 4
          %s750 = int_to_ptr.hbm [resolvable:$true] %s749
          %s751 = sshll.u32 [#allocation11], 4
          %s752 = int_to_ptr.vmem [resolvable:$true] %s751
          %754 = dma.hbm_to_vmem [thread:$0]  %s750, 16, %s752, [#allocation12]
        $region100: #{decoder_forward.3} parent=11 // pred_fallthru
          _
      $region12: #{decoder_forward.3} parent=5 // pred_fallthru
        _
      %p755 = scmp.lt.s32.totalorder %s38, 2
      // Predicated region
      $region101: #{decoder_forward.3} parent=5 // pred_check
        %p756 = pneg %p755
      $region102: #{decoder_forward.3} parent=5 // pred_check_branch
        %758 = sbr.rel (%p756) target = $region104
      $region103: #{decoder_forward.3} parent=5 // pred_region
        // Predicated region
        $region105: #{decoder_forward.3} parent=103 // pred_check
          %p759 = pneg %p72
        $region106: #{decoder_forward.3} parent=103 // pred_check_branch
          %761 = sbr.rel (%p759) target = $region108
        $region107: #{decoder_forward.3} parent=103 // pred_region
          %p762 = scmp.lt.s32.totalorder %s45, 1
          %s763 = scalar_select %p762, %s45, 1
          %p764 = scmp.lt.s32.totalorder %s46, 0
          %s765 = scalar_select %p764, %s46, 0
          %s766 = sadd.s32 %s765, %s763
          %s767 = smul.addr %s766, 8
          %s768 = scalar_lea.vmem %s0, %s767
        $region108: #{decoder_forward.3} parent=103 // pred_fallthru
          _
        // Predicated region
        $region109: #{decoder_forward.3} parent=103 // pred_check
          %p769 = pneg %p98
        $region110: #{decoder_forward.3} parent=103 // pred_check_branch
          %771 = sbr.rel (%p769) target = $region112
        $region111: #{decoder_forward.3} parent=103 // pred_region
          %p772 = scmp.lt.s32.totalorder %s45, 1
          %s773 = scalar_select %p772, %s45, 1
          %s774 = smul.addr %s773, 8
          %s775 = scalar_lea.vmem %s1, %s774
        $region112: #{decoder_forward.3} parent=103 // pred_fallthru
          _
        // Predicated region
        $region113: #{decoder_forward.3} parent=103 // pred_check
          %p776 = pneg %p124
        $region114: #{decoder_forward.3} parent=103 // pred_check_branch
          %778 = sbr.rel (%p776) target = $region116
        $region115: #{decoder_forward.3} parent=103 // pred_region
          %p779 = scmp.lt.s32.totalorder %s45, 1
          %s780 = scalar_select %p779, %s45, 1
          %s781 = smul.addr %s780, 8
          %s782 = scalar_lea.vmem %s2, %s781
        $region116: #{decoder_forward.3} parent=103 // pred_fallthru
          _
      $region104: #{decoder_forward.3} parent=5 // pred_fallthru
        _
      %p783 = scmp.le.s32.totalorder 1, %s38
      %p784 = scmp.lt.s32.totalorder %s38, 3
      %p785 = pnand %p783, %p784
      %p786 = pneg %p785
      // Predicated region
      $region117: #{decoder_forward.3} parent=5 // pred_check
        _
      $region118: #{decoder_forward.3} parent=5 // pred_check_branch
        %788 = sbr.rel (%p785) target = $region120
      $region119: #{decoder_forward.3} parent=5 // pred_region
        %s789 = ssub.s32 %s38, 1
        // Predicated region
        $region121: #{decoder_forward.3} parent=119 // pred_check
          %p790 = pneg %p445
        $region122: #{decoder_forward.3} parent=119 // pred_check_branch
          %792 = sbr.rel (%p790) target = $region124
        $region123: #{decoder_forward.3} parent=119 // pred_region
          %794 = dma.done [#allocation3], 16
        $region124: #{decoder_forward.3} parent=119 // pred_fallthru
          _
        // Predicated region
        $region125: #{decoder_forward.3} parent=119 // pred_check
          %p795 = pneg %p466
        $region126: #{decoder_forward.3} parent=119 // pred_check_branch
          %797 = sbr.rel (%p795) target = $region128
        $region127: #{decoder_forward.3} parent=119 // pred_region
          %799 = dma.done [#allocation6], 16
        $region128: #{decoder_forward.3} parent=119 // pred_fallthru
          _
        // Predicated region
        $region129: #{decoder_forward.3} parent=119 // pred_check
          %p800 = pneg %p508
        $region130: #{decoder_forward.3} parent=119 // pred_check_branch
          %802 = sbr.rel (%p800) target = $region132
        $region131: #{decoder_forward.3} parent=119 // pred_region
          %804 = dma.done [#allocation6], 16
        $region132: #{decoder_forward.3} parent=119 // pred_fallthru
          _
        // Predicated region
        $region133: #{decoder_forward.3} parent=119 // pred_check
          %p805 = pneg %p550
        $region134: #{decoder_forward.3} parent=119 // pred_check_branch
          %807 = sbr.rel (%p805) target = $region136
        $region135: #{decoder_forward.3} parent=119 // pred_region
          %809 = dma.done [#allocation9], 16
        $region136: #{decoder_forward.3} parent=119 // pred_fallthru
          _
        // Predicated region
        $region137: #{decoder_forward.3} parent=119 // pred_check
          %p810 = pneg %p571
        $region138: #{decoder_forward.3} parent=119 // pred_check_branch
          %812 = sbr.rel (%p810) target = $region140
        $region139: #{decoder_forward.3} parent=119 // pred_region
          %814 = dma.done [#allocation9], 16
        $region140: #{decoder_forward.3} parent=119 // pred_fallthru
          _
        // Predicated region
        $region141: #{decoder_forward.3} parent=119 // pred_check
          %p815 = pneg %p592
        $region142: #{decoder_forward.3} parent=119 // pred_check_branch
          %817 = sbr.rel (%p815) target = $region144
        $region143: #{decoder_forward.3} parent=119 // pred_region
          %819 = dma.done [#allocation12], 16
        $region144: #{decoder_forward.3} parent=119 // pred_fallthru
          _
        %p820 = scmp.lt.s32.totalorder %s47, 1
        %s821 = scalar_select %p820, %s47, 1
        %p822 = scmp.lt.s32.totalorder %s48, 0
        %s823 = scalar_select %p822, %s48, 0
        %s824 = sadd.s32 %s823, %s821
        %s825 = smul.addr %s824, 8
        %s826 = scalar_lea.vmem %s0, %s825
        %p827 = pneg %p78
        %p828 = pneg %p75
        %p829 = scmp.lt.s32.totalorder %s47, 1
        %s830 = scalar_select %p829, %s47, 1
        %s831 = smul.addr %s830, 8
        %s832 = scalar_lea.vmem %s1, %s831
        %p833 = pneg %p104
        %p834 = pneg %p101
        %p835 = scmp.lt.s32.totalorder %s47, 1
        %s836 = scalar_select %p835, %s47, 1
        %s837 = smul.addr %s836, 8
        %s838 = scalar_lea.vmem %s2, %s837
        %p839 = pneg %p130
        %p840 = pneg %p127
        %p841 = pneg %p151
        %p842 = pneg %p148
        %p843 = pneg %p172
        %p844 = pneg %p169
        %p845 = pneg %p193
        %p846 = pneg %p190
        %p847 = pneg %p214
        %p848 = pneg %p211
        %p849 = pneg %p235
        %p850 = pneg %p232
        %p851 = pneg %p256
        %p852 = pneg %p253
        %p853 = pneg %p277
        %p854 = pneg %p274
        %p855 = pneg %p298
        %p856 = pneg %p295
        %p857 = pneg %p319
        %p858 = pneg %p316
        %p859 = pneg %p340
        %p860 = pneg %p337
        %p861 = pneg %p361
        %p862 = pneg %p358
        %p863 = pneg %p382
        %p864 = pneg %p379
        %p865 = pneg %p403
        %p866 = pneg %p400
        %p867 = pneg %p424
        %p868 = pneg %p421
        %p869 = pneg %p445
        %p870 = pneg %p442
        %p871 = pneg %p466
        %p872 = pneg %p463
        %p873 = pneg %p487
        %p874 = pneg %p484
        %p875 = pneg %p508
        %p876 = pneg %p505
        %p877 = pneg %p529
        %p878 = pneg %p526
        %p879 = pneg %p550
        %p880 = pneg %p547
        %p881 = pneg %p571
        %p882 = pneg %p568
        %p883 = pneg %p592
        %p884 = pneg %p589
        %p885 = pneg %p620
        %p886 = pneg %p617
        %s887 = sand.u32 %s607, 1
        %s888 = scalar_lea.sflag [#allocation4], %s887
        %s889 = sand.u32 %s607, 1
        %s890 = smul.addr %s889, 8
        %s891 = scalar_lea.vmem [#allocation13], %s890
        %p892 = scmp.lt.s32.totalorder %s47, 1
        %s893 = scalar_select %p892, %s47, 1
        %p894 = scmp.lt.s32.totalorder %s48, 0
        %s895 = scalar_select %p894, %s48, 0
        %s896 = sadd.s32 %s895, %s893
        %s897 = smul.addr %s896, 8
        %s898 = scalar_lea.vmem %s0, %s897
        %p899 = scmp.lt.s32.totalorder %s47, 1
        %s900 = scalar_select %p899, %s47, 1
        %s901 = smul.addr %s900, 8
        %s902 = scalar_lea.vmem %s1, %s901
        %p903 = scmp.lt.s32.totalorder %s47, 1
        %s904 = scalar_select %p903, %s47, 1
        %s905 = smul.addr %s904, 8
        %s906 = scalar_lea.vmem %s2, %s905
        %v908 = vld [vmem:[%s898] sm:$0xff]
        %v909 = vld [vmem:[%s902] sm:$0xff]
        %v910 = vld [vmem:[%s906] sm:$0xff]
        %v911 = vpack.c.bf16 %v908, %v908
        %v912 = vld [vmem:[%s3] sm:$0xf]
        %v913 = vld [vmem:[%s3 + $0x4] sm:$0xf]
        %v914 = vld [vmem:[%s3 + $0x8] sm:$0xf]
        %v915 = vld [vmem:[%s3 + $0xc] sm:$0xf]
        %v916 = vld [vmem:[%s4] sm:$0x1]
        %v918 = vperm.slane %v916, 0
        %v924 = vunpack.c.l.b16 %v912
        %v925 = vunpack.c.l.b16 %v913
        %v926 = vunpack.c.l.b16 %v914
        %v927 = vunpack.c.l.b16 %v915
        %v928 = vpack.c.b16 %v925, %v924
        %v929 = vpack.c.b16 %v927, %v926
        %vm932 = vcmask 261120
        %v934 = vsel %vm932, %v911, 0
        %936 = vmatpush.bf16.msra.mxu0 0
        %937 = vmatpush.bf16.msra.mxu0 0
        %938 = vmatpush.bf16.msra.mxu0 0
        %939 = vmatpush.bf16.msra.mxu0 0
        %940 = vmatpush.bf16.msra.mxu0 0
        %941 = vmatpush.bf16.msra.mxu0 0
        %942 = vmatpush.bf16.msra.mxu0 %v929
        %943 = vmatpush.bf16.msra.mxu0 %v928
        %944 = vmatmul.bf16.gmra.mxu0 %v934
        %v945 = vpop.f32.mrf.mxu0
        %v946 = vadd.f32 %v918, %v945
        %v947 = vpop.f32.mrf.mxu0
        %948 = vdwg.mxu0
        %v949 = vmul.f32 %v946, 0.35355338
        %v950 = vpack.c.bf16 %v909, %v909
        %v951 = vld [vmem:[%s5] sm:$0xf]
        %v952 = vld [vmem:[%s5 + $0x4] sm:$0xf]
        %v953 = vld [vmem:[%s5 + $0x8] sm:$0xf]
        %v954 = vld [vmem:[%s5 + $0xc] sm:$0xf]
        %v955 = vld [vmem:[%s6] sm:$0x1]
        %v957 = vperm.slane %v955, 0
        %v963 = vunpack.c.l.b16 %v951
        %v964 = vunpack.c.l.b16 %v952
        %v965 = vunpack.c.l.b16 %v953
        %v966 = vunpack.c.l.b16 %v954
        %v967 = vpack.c.b16 %v964, %v963
        %v968 = vpack.c.b16 %v966, %v965
        %v972 = vsel %vm932, %v950, 0
        %974 = vmatpush.bf16.msra.mxu0 0
        %975 = vmatpush.bf16.msra.mxu0 0
        %976 = vmatpush.bf16.msra.mxu0 0
        %977 = vmatpush.bf16.msra.mxu0 0
        %978 = vmatpush.bf16.msra.mxu0 0
        %979 = vmatpush.bf16.msra.mxu0 0
        %980 = vmatpush.bf16.msra.mxu0 %v968
        %981 = vmatpush.bf16.msra.mxu0 %v967
        %982 = vmatmul.bf16.gmra.mxu0 %v972
        %v983 = vpop.f32.mrf.mxu0
        %v984 = vadd.f32 %v957, %v983
        %v985 = vpop.f32.mrf.mxu0
        %986 = vdwg.mxu0
        %v987 = vld [vmem:[%s8] sm:$0x1]
        %vm988 = vcmask 64512
        %v990 = vsel %vm988, %v949, 0
        %v993 = vsel %vm988, %v984, 0
        %995 = vmatpush.xpose.msra.mxu0 0.0
        %996 = vmatpush.xpose.msra.mxu0 0.0
        %997 = vmatpush.xpose.msra.mxu0 0.0
        %998 = vmatpush.xpose.msra.mxu0 0.0
        %999 = vmatpush.xpose.msra.mxu0 0.0
        %1000 = vmatpush.xpose.msra.mxu0 0.0
        %1001 = vmatpush.xpose.msra.mxu0 0.0
        %1002 = vmatpush.xpose.msra.mxu0 0.0
        %1003 = vmatpush.xpose.msra.mxu0 0.0
        %1004 = vmatpush.xpose.msra.mxu0 0.0
        %1005 = vmatpush.xpose.msra.mxu0 0.0
        %1006 = vmatpush.xpose.msra.mxu0 0.0
        %1007 = vmatpush.xpose.msra.mxu0 0.0
        %1008 = vmatpush.xpose.msra.mxu0 0.0
        %1009 = vmatpush.xpose.msra.mxu0 0.0
        %1010 = vmatpush.xpose.msra.mxu0 %v993
        %1011 = vmatmul.f32.gmra.mxu0 %v990
        %v1012 = vpop.f32.mrf.mxu0
        %v1013 = vadd.f32 0.0, %v1012
        %1014 = vdwg.mxu0
        %v1015 = vsel %vm988, %v1013, -inf
        %1016 = vmax.xlane.f32.xlu0 %v1015
        %v1017 = vpop.xlane.xlu0 %1016
        %v1018 = vsub.f32 %v1013, %v1017
        %v1019 = vmul.f32 %v1018, 1.442695
        %v1020 = vpow.pop %v1019
        %v1021 = vsel %vm988, %v1020, 0.0
        %1022 = vadd.xlane.f32.xlu0 %v1021
        %v1023 = vpop.xlane.xlu0 %1022
        %v1024 = vrcp.pop %v1023
        %v1025 = vmul.f32 %v1023, %v1024
        %v1026 = vsub.f32 1.0, %v1025
        %v1027 = vmul.f32 %v1024, %v1026
        %v1028 = vadd.f32 %v1024, %v1027
        %vm1029 = vweird.f32 %v1023
        %vm1030 = vweird.f32 %v1024
        %vm1031 = vmor %vm1029, %vm1030
        %v1032 = vsel %vm1031, %v1024, %v1028
        %v1033 = vand.u32 2147483647, %v1023
        %vm1034 = vcmp.eq.f32.partialorder %v1033, 8.507059e+37
        %v1035 = vand.u32 %v1023, 2147483648
        %v1036 = vor.u32 1.1754944e-38, %v1035
        %v1037 = vsel %vm1034, %v1036, %v1032
        %v1038 = vmul.f32 %v1020, %v1037
        %1039 = vrot.lane.b32.xlu0 %v984, 96
        %v1040 = vpop.permute.xlu0 %1039
        %v1043 = vsel %vm988, %v1038, 0
        %1045 = vmatpush.msra.mxu0 0.0
        %1046 = vmatpush.msra.mxu0 0.0
        %1047 = vmatpush.msra.mxu0 0.0
        %1048 = vmatpush.msra.mxu0 0.0
        %1049 = vmatpush.msra.mxu0 0.0
        %1050 = vmatpush.msra.mxu0 0.0
        %1051 = vmatpush.msra.mxu0 0.0
        %1052 = vmatpush.msra.mxu0 0.0
        %1053 = vmatpush.msra.mxu0 0.0
        %1054 = vmatpush.msra.mxu0 0.0
        %1055 = vmatpush.msra.mxu0 0.0
        %1056 = vmatpush.msra.mxu0 0.0
        %1057 = vmatpush.msra.mxu0 0.0
        %1058 = vmatpush.msra.mxu0 0.0
        %1059 = vmatpush.msra.mxu0 0.0
        %1060 = vmatpush.msra.mxu0 %v1040
        %1061 = vmatmul.f32.gmra.mxu0 %v1043
        %v1062 = vpop.f32.mrf.mxu0
        %v1063 = vadd.f32 0.0, %v1062
        %1064 = vdwg.mxu0
        %v1065 = vpack.c.bf16 %v1063, %v1063
        %v1066 = vld [vmem:[%s7] sm:$0xf]
        %v1068 = vsel %vm988, %v1065, 0
        %vm1070 = vcmask 1043456
        %v1072 = vsel %vm1070, %v1066, 0
        %1074 = vmatpush.bf16.msra.mxu0 0
        %1075 = vmatpush.bf16.msra.mxu0 0
        %1076 = vmatpush.bf16.msra.mxu0 0
        %1077 = vmatpush.bf16.msra.mxu0 0
        %1078 = vmatpush.bf16.msra.mxu0 0
        %1079 = vmatpush.bf16.msra.mxu0 0
        %1080 = vmatpush.bf16.msra.mxu0 0
        %1081 = vmatpush.bf16.msra.mxu0 %v1072
        %1082 = vmatmul.bf16.gmra.mxu0 %v1068
        %v1083 = vpop.f32.mrf.mxu0
        %v1084 = vadd.f32 0.0, %v1083
        %v1085 = vpop.f32.mrf.mxu0
        %1086 = vdwg.mxu0
        %v1088 = vperm.slane %v987, 0
        %v1090 = vadd.f32 %v1088, %v1084
        %1091 = vrot.lane.b32.xlu0 %v949, 120
        %v1092 = vpop.permute.xlu0 %1091
        %1093 = vrot.lane.b32.xlu0 %v984, 120
        %v1094 = vpop.permute.xlu0 %1093
        %v1095 = vsel %vm988, %v1092, 0
        %v1097 = vsel %vm988, %v1094, 0
        %1099 = vmatpush.xpose.msra.mxu0 0.0
        %1100 = vmatpush.xpose.msra.mxu0 0.0
        %1101 = vmatpush.xpose.msra.mxu0 0.0
        %1102 = vmatpush.xpose.msra.mxu0 0.0
        %1103 = vmatpush.xpose.msra.mxu0 0.0
        %1104 = vmatpush.xpose.msra.mxu0 0.0
        %1105 = vmatpush.xpose.msra.mxu0 0.0
        %1106 = vmatpush.xpose.msra.mxu0 0.0
        %1107 = vmatpush.xpose.msra.mxu0 0.0
        %1108 = vmatpush.xpose.msra.mxu0 0.0
        %1109 = vmatpush.xpose.msra.mxu0 0.0
        %1110 = vmatpush.xpose.msra.mxu0 0.0
        %1111 = vmatpush.xpose.msra.mxu0 0.0
        %1112 = vmatpush.xpose.msra.mxu0 0.0
        %1113 = vmatpush.xpose.msra.mxu0 0.0
        %1114 = vmatpush.xpose.msra.mxu0 %v1097
        %1115 = vmatmul.f32.gmra.mxu0 %v1095
        %v1116 = vpop.f32.mrf.mxu0
        %v1117 = vadd.f32 0.0, %v1116
        %1118 = vdwg.mxu0
        %v1119 = vsel %vm988, %v1117, -inf
        %1120 = vmax.xlane.f32.xlu0 %v1119
        %v1121 = vpop.xlane.xlu0 %1120
        %v1122 = vsub.f32 %v1117, %v1121
        %v1123 = vmul.f32 %v1122, 1.442695
        %v1124 = vpow.pop %v1123
        %v1125 = vsel %vm988, %v1124, 0.0
        %1126 = vadd.xlane.f32.xlu0 %v1125
        %v1127 = vpop.xlane.xlu0 %1126
        %v1128 = vrcp.pop %v1127
        %v1129 = vmul.f32 %v1127, %v1128
        %v1130 = vsub.f32 1.0, %v1129
        %v1131 = vmul.f32 %v1128, %v1130
        %v1132 = vadd.f32 %v1128, %v1131
        %vm1133 = vweird.f32 %v1127
        %vm1134 = vweird.f32 %v1128
        %vm1135 = vmor %vm1133, %vm1134
        %v1136 = vsel %vm1135, %v1128, %v1132
        %v1137 = vand.u32 2147483647, %v1127
        %vm1138 = vcmp.eq.f32.partialorder %v1137, 8.507059e+37
        %v1139 = vand.u32 %v1127, 2147483648
        %v1140 = vor.u32 1.1754944e-38, %v1139
        %v1141 = vsel %vm1138, %v1140, %v1136
        %v1142 = vmul.f32 %v1124, %v1141
        %1143 = vrot.lane.b32.xlu0 %v984, 88
        %v1144 = vpop.permute.xlu0 %1143
        %v1147 = vsel %vm988, %v1142, 0
        %1149 = vmatpush.msra.mxu0 0.0
        %1150 = vmatpush.msra.mxu0 0.0
        %1151 = vmatpush.msra.mxu0 0.0
        %1152 = vmatpush.msra.mxu0 0.0
        %1153 = vmatpush.msra.mxu0 0.0
        %1154 = vmatpush.msra.mxu0 0.0
        %1155 = vmatpush.msra.mxu0 0.0
        %1156 = vmatpush.msra.mxu0 0.0
        %1157 = vmatpush.msra.mxu0 0.0
        %1158 = vmatpush.msra.mxu0 0.0
        %1159 = vmatpush.msra.mxu0 0.0
        %1160 = vmatpush.msra.mxu0 0.0
        %1161 = vmatpush.msra.mxu0 0.0
        %1162 = vmatpush.msra.mxu0 0.0
        %1163 = vmatpush.msra.mxu0 0.0
        %1164 = vmatpush.msra.mxu0 %v1144
        %1165 = vmatmul.f32.gmra.mxu0 %v1147
        %v1166 = vpop.f32.mrf.mxu0
        %v1167 = vadd.f32 0.0, %v1166
        %1168 = vdwg.mxu0
        %v1169 = vpack.c.bf16 %v1167, %v1167
        %v1170 = vld [vmem:[%s7 + $0x4] sm:$0xf]
        %v1172 = vsel %vm988, %v1169, 0
        %v1175 = vsel %vm1070, %v1170, 0
        %1177 = vmatpush.bf16.msra.mxu0 0
        %1178 = vmatpush.bf16.msra.mxu0 0
        %1179 = vmatpush.bf16.msra.mxu0 0
        %1180 = vmatpush.bf16.msra.mxu0 0
        %1181 = vmatpush.bf16.msra.mxu0 0
        %1182 = vmatpush.bf16.msra.mxu0 0
        %1183 = vmatpush.bf16.msra.mxu0 0
        %1184 = vmatpush.bf16.msra.mxu0 %v1175
        %1185 = vmatmul.bf16.gmra.mxu0 %v1172
        %v1186 = vpop.f32.mrf.mxu0
        %v1187 = vadd.f32 0.0, %v1186
        %v1188 = vpop.f32.mrf.mxu0
        %1189 = vdwg.mxu0
        %v1190 = vadd.f32 %v1090, %v1187
        %1191 = vrot.lane.b32.xlu0 %v949, 112
        %v1192 = vpop.permute.xlu0 %1191
        %1193 = vrot.lane.b32.xlu0 %v984, 112
        %v1194 = vpop.permute.xlu0 %1193
        %v1195 = vsel %vm988, %v1192, 0
        %v1197 = vsel %vm988, %v1194, 0
        %1199 = vmatpush.xpose.msra.mxu0 0.0
        %1200 = vmatpush.xpose.msra.mxu0 0.0
        %1201 = vmatpush.xpose.msra.mxu0 0.0
        %1202 = vmatpush.xpose.msra.mxu0 0.0
        %1203 = vmatpush.xpose.msra.mxu0 0.0
        %1204 = vmatpush.xpose.msra.mxu0 0.0
        %1205 = vmatpush.xpose.msra.mxu0 0.0
        %1206 = vmatpush.xpose.msra.mxu0 0.0
        %1207 = vmatpush.xpose.msra.mxu0 0.0
        %1208 = vmatpush.xpose.msra.mxu0 0.0
        %1209 = vmatpush.xpose.msra.mxu0 0.0
        %1210 = vmatpush.xpose.msra.mxu0 0.0
        %1211 = vmatpush.xpose.msra.mxu0 0.0
        %1212 = vmatpush.xpose.msra.mxu0 0.0
        %1213 = vmatpush.xpose.msra.mxu0 0.0
        %1214 = vmatpush.xpose.msra.mxu0 %v1197
        %1215 = vmatmul.f32.gmra.mxu0 %v1195
        %v1216 = vpop.f32.mrf.mxu0
        %v1217 = vadd.f32 0.0, %v1216
        %1218 = vdwg.mxu0
        %v1219 = vsel %vm988, %v1217, -inf
        %1220 = vmax.xlane.f32.xlu0 %v1219
        %v1221 = vpop.xlane.xlu0 %1220
        %v1222 = vsub.f32 %v1217, %v1221
        %v1223 = vmul.f32 %v1222, 1.442695
        %v1224 = vpow.pop %v1223
        %v1225 = vsel %vm988, %v1224, 0.0
        %1226 = vadd.xlane.f32.xlu0 %v1225
        %v1227 = vpop.xlane.xlu0 %1226
        %v1228 = vrcp.pop %v1227
        %v1229 = vmul.f32 %v1227, %v1228
        %v1230 = vsub.f32 1.0, %v1229
        %v1231 = vmul.f32 %v1228, %v1230
        %v1232 = vadd.f32 %v1228, %v1231
        %vm1233 = vweird.f32 %v1227
        %vm1234 = vweird.f32 %v1228
        %vm1235 = vmor %vm1233, %vm1234
        %v1236 = vsel %vm1235, %v1228, %v1232
        %v1237 = vand.u32 2147483647, %v1227
        %vm1238 = vcmp.eq.f32.partialorder %v1237, 8.507059e+37
        %v1239 = vand.u32 %v1227, 2147483648
        %v1240 = vor.u32 1.1754944e-38, %v1239
        %v1241 = vsel %vm1238, %v1240, %v1236
        %v1242 = vmul.f32 %v1224, %v1241
        %1243 = vrot.lane.b32.xlu0 %v984, 80
        %v1244 = vpop.permute.xlu0 %1243
        %v1247 = vsel %vm988, %v1242, 0
        %1249 = vmatpush.msra.mxu0 0.0
        %1250 = vmatpush.msra.mxu0 0.0
        %1251 = vmatpush.msra.mxu0 0.0
        %1252 = vmatpush.msra.mxu0 0.0
        %1253 = vmatpush.msra.mxu0 0.0
        %1254 = vmatpush.msra.mxu0 0.0
        %1255 = vmatpush.msra.mxu0 0.0
        %1256 = vmatpush.msra.mxu0 0.0
        %1257 = vmatpush.msra.mxu0 0.0
        %1258 = vmatpush.msra.mxu0 0.0
        %1259 = vmatpush.msra.mxu0 0.0
        %1260 = vmatpush.msra.mxu0 0.0
        %1261 = vmatpush.msra.mxu0 0.0
        %1262 = vmatpush.msra.mxu0 0.0
        %1263 = vmatpush.msra.mxu0 0.0
        %1264 = vmatpush.msra.mxu0 %v1244
        %1265 = vmatmul.f32.gmra.mxu0 %v1247
        %v1266 = vpop.f32.mrf.mxu0
        %v1267 = vadd.f32 0.0, %v1266
        %1268 = vdwg.mxu0
        %v1269 = vpack.c.bf16 %v1267, %v1267
        %v1270 = vld [vmem:[%s7 + $0x8] sm:$0xf]
        %v1272 = vsel %vm988, %v1269, 0
        %v1275 = vsel %vm1070, %v1270, 0
        %1277 = vmatpush.bf16.msra.mxu0 0
        %1278 = vmatpush.bf16.msra.mxu0 0
        %1279 = vmatpush.bf16.msra.mxu0 0
        %1280 = vmatpush.bf16.msra.mxu0 0
        %1281 = vmatpush.bf16.msra.mxu0 0
        %1282 = vmatpush.bf16.msra.mxu0 0
        %1283 = vmatpush.bf16.msra.mxu0 0
        %1284 = vmatpush.bf16.msra.mxu0 %v1275
        %1285 = vmatmul.bf16.gmra.mxu0 %v1272
        %v1286 = vpop.f32.mrf.mxu0
        %v1287 = vadd.f32 0.0, %v1286
        %v1288 = vpop.f32.mrf.mxu0
        %1289 = vdwg.mxu0
        %v1290 = vadd.f32 %v1190, %v1287
        %1291 = vrot.lane.b32.xlu0 %v949, 104
        %v1292 = vpop.permute.xlu0 %1291
        %1293 = vrot.lane.b32.xlu0 %v984, 104
        %v1294 = vpop.permute.xlu0 %1293
        %v1295 = vsel %vm988, %v1292, 0
        %v1297 = vsel %vm988, %v1294, 0
        %1299 = vmatpush.xpose.msra.mxu0 0.0
        %1300 = vmatpush.xpose.msra.mxu0 0.0
        %1301 = vmatpush.xpose.msra.mxu0 0.0
        %1302 = vmatpush.xpose.msra.mxu0 0.0
        %1303 = vmatpush.xpose.msra.mxu0 0.0
        %1304 = vmatpush.xpose.msra.mxu0 0.0
        %1305 = vmatpush.xpose.msra.mxu0 0.0
        %1306 = vmatpush.xpose.msra.mxu0 0.0
        %1307 = vmatpush.xpose.msra.mxu0 0.0
        %1308 = vmatpush.xpose.msra.mxu0 0.0
        %1309 = vmatpush.xpose.msra.mxu0 0.0
        %1310 = vmatpush.xpose.msra.mxu0 0.0
        %1311 = vmatpush.xpose.msra.mxu0 0.0
        %1312 = vmatpush.xpose.msra.mxu0 0.0
        %1313 = vmatpush.xpose.msra.mxu0 0.0
        %1314 = vmatpush.xpose.msra.mxu0 %v1297
        %1315 = vmatmul.f32.gmra.mxu0 %v1295
        %v1316 = vpop.f32.mrf.mxu0
        %v1317 = vadd.f32 0.0, %v1316
        %1318 = vdwg.mxu0
        %v1319 = vsel %vm988, %v1317, -inf
        %1320 = vmax.xlane.f32.xlu0 %v1319
        %v1321 = vpop.xlane.xlu0 %1320
        %v1322 = vsub.f32 %v1317, %v1321
        %v1323 = vmul.f32 %v1322, 1.442695
        %v1324 = vpow.pop %v1323
        %v1325 = vsel %vm988, %v1324, 0.0
        %1326 = vadd.xlane.f32.xlu0 %v1325
        %v1327 = vpop.xlane.xlu0 %1326
        %v1328 = vrcp.pop %v1327
        %v1329 = vmul.f32 %v1327, %v1328
        %v1330 = vsub.f32 1.0, %v1329
        %v1331 = vmul.f32 %v1328, %v1330
        %v1332 = vadd.f32 %v1328, %v1331
        %vm1333 = vweird.f32 %v1327
        %vm1334 = vweird.f32 %v1328
        %vm1335 = vmor %vm1333, %vm1334
        %v1336 = vsel %vm1335, %v1328, %v1332
        %v1337 = vand.u32 2147483647, %v1327
        %vm1338 = vcmp.eq.f32.partialorder %v1337, 8.507059e+37
        %v1339 = vand.u32 %v1327, 2147483648
        %v1340 = vor.u32 1.1754944e-38, %v1339
        %v1341 = vsel %vm1338, %v1340, %v1336
        %v1342 = vmul.f32 %v1324, %v1341
        %1343 = vrot.lane.b32.xlu0 %v984, 72
        %v1344 = vpop.permute.xlu0 %1343
        %v1347 = vsel %vm988, %v1342, 0
        %1349 = vmatpush.msra.mxu0 0.0
        %1350 = vmatpush.msra.mxu0 0.0
        %1351 = vmatpush.msra.mxu0 0.0
        %1352 = vmatpush.msra.mxu0 0.0
        %1353 = vmatpush.msra.mxu0 0.0
        %1354 = vmatpush.msra.mxu0 0.0
        %1355 = vmatpush.msra.mxu0 0.0
        %1356 = vmatpush.msra.mxu0 0.0
        %1357 = vmatpush.msra.mxu0 0.0
        %1358 = vmatpush.msra.mxu0 0.0
        %1359 = vmatpush.msra.mxu0 0.0
        %1360 = vmatpush.msra.mxu0 0.0
        %1361 = vmatpush.msra.mxu0 0.0
        %1362 = vmatpush.msra.mxu0 0.0
        %1363 = vmatpush.msra.mxu0 0.0
        %1364 = vmatpush.msra.mxu0 %v1344
        %1365 = vmatmul.f32.gmra.mxu0 %v1347
        %v1366 = vpop.f32.mrf.mxu0
        %v1367 = vadd.f32 0.0, %v1366
        %1368 = vdwg.mxu0
        %v1369 = vpack.c.bf16 %v1367, %v1367
        %v1370 = vld [vmem:[%s7 + $0xc] sm:$0xf]
        %v1372 = vsel %vm988, %v1369, 0
        %v1375 = vsel %vm1070, %v1370, 0
        %1377 = vmatpush.bf16.msra.mxu0 0
        %1378 = vmatpush.bf16.msra.mxu0 0
        %1379 = vmatpush.bf16.msra.mxu0 0
        %1380 = vmatpush.bf16.msra.mxu0 0
        %1381 = vmatpush.bf16.msra.mxu0 0
        %1382 = vmatpush.bf16.msra.mxu0 0
        %1383 = vmatpush.bf16.msra.mxu0 0
        %1384 = vmatpush.bf16.msra.mxu0 %v1375
        %1385 = vmatmul.bf16.gmra.mxu0 %v1372
        %v1386 = vpop.f32.mrf.mxu0
        %v1387 = vadd.f32 0.0, %v1386
        %v1388 = vpop.f32.mrf.mxu0
        %1389 = vdwg.mxu0
        %v1390 = vadd.f32 %v1290, %v1387
        %v1391 = vadd.f32 %v1390, %v908
        %v1392 = vsel %vm932, %v1391, 0.0
        %1393 = vadd.xlane.f32.xlu0 %v1392
        %v1394 = vpop.xlane.xlu0 %1393
        %v1395 = vrcp.pop 32.0
        %v1396 = vmul.f32 32.0, %v1395
        %v1397 = vsub.f32 1.0, %v1396
        %v1398 = vmul.f32 %v1395, %v1397
        %v1399 = vadd.f32 %v1395, %v1398
        %vm1400 = vweird.f32 %v1395
        %v1401 = vsel %vm1400, %v1395, %v1399
        %v1402 = vmul.f32 %v1394, %v1401
        %v1403 = vsub.f32 %v1391, %v1402
        %v1404 = vmul.f32 %v1403, %v1403
        %v1405 = vsel %vm932, %v1404, 0.0
        %1406 = vadd.xlane.f32.xlu0 %v1405
        %v1407 = vpop.xlane.xlu0 %1406
        %v1408 = vmul.f32 %v1407, %v1401
        %v1409 = vadd.f32 %v1408, 1e-05
        %v1410 = vrsqrt.pop %v1409
        %v1411 = vmul.f32 %v1410, %v1409
        %v1412 = vmul.f32 %v1411, %v1410
        %v1413 = vmul.f32 0.5, %v1412
        %v1414 = vsub.f32 1.5, %v1413
        %v1415 = vmul.f32 %v1410, %v1414
        %vm1416 = vweird.f32 %v1409
        %vm1417 = vweird.f32 %v1410
        %vm1418 = vmor %vm1416, %vm1417
        %v1419 = vsel %vm1418, %v1410, %v1415
        %v1420 = vmul.f32 %v1403, %v1419
        %v1421 = vld [vmem:[%s9] sm:$0x1]
        %v1423 = vperm.slane %v1421, 0
        %v1425 = vmul.f32 %v1420, %v1423
        %v1426 = vld [vmem:[%s10] sm:$0x1]
        %v1428 = vperm.slane %v1426, 0
        %v1430 = vadd.f32 %v1425, %v1428
        %v1431 = vpack.c.bf16 %v1430, %v1430
        %v1432 = vld [vmem:[%s11] sm:$0xf]
        %v1433 = vld [vmem:[%s11 + $0x4] sm:$0xf]
        %v1434 = vld [vmem:[%s11 + $0x8] sm:$0xf]
        %v1435 = vld [vmem:[%s11 + $0xc] sm:$0xf]
        %v1436 = vld [vmem:[%s12] sm:$0x1]
        %v1438 = vperm.slane %v1436, 0
        %v1444 = vunpack.c.l.b16 %v1432
        %v1445 = vunpack.c.l.b16 %v1433
        %v1446 = vunpack.c.l.b16 %v1434
        %v1447 = vunpack.c.l.b16 %v1435
        %v1448 = vpack.c.b16 %v1445, %v1444
        %v1449 = vpack.c.b16 %v1447, %v1446
        %v1453 = vsel %vm932, %v1431, 0
        %1455 = vmatpush.bf16.msra.mxu0 0
        %1456 = vmatpush.bf16.msra.mxu0 0
        %1457 = vmatpush.bf16.msra.mxu0 0
        %1458 = vmatpush.bf16.msra.mxu0 0
        %1459 = vmatpush.bf16.msra.mxu0 0
        %1460 = vmatpush.bf16.msra.mxu0 0
        %1461 = vmatpush.bf16.msra.mxu0 %v1449
        %1462 = vmatpush.bf16.msra.mxu0 %v1448
        %1463 = vmatmul.bf16.gmra.mxu0 %v1453
        %v1464 = vpop.f32.mrf.mxu0
        %v1465 = vadd.f32 %v1438, %v1464
        %v1466 = vpop.f32.mrf.mxu0
        %1467 = vdwg.mxu0
        %v1468 = vmul.f32 %v1465, 0.35355338
        %v1469 = vpack.c.bf16 %v910, %v910
        %v1470 = vld [vmem:[%s13] sm:$0xf]
        %v1471 = vld [vmem:[%s13 + $0x4] sm:$0xf]
        %v1472 = vld [vmem:[%s13 + $0x8] sm:$0xf]
        %v1473 = vld [vmem:[%s13 + $0xc] sm:$0xf]
        %v1474 = vld [vmem:[%s14] sm:$0x1]
        %v1476 = vperm.slane %v1474, 0
        %v1482 = vunpack.c.l.b16 %v1470
        %v1483 = vunpack.c.l.b16 %v1471
        %v1484 = vunpack.c.l.b16 %v1472
        %v1485 = vunpack.c.l.b16 %v1473
        %v1486 = vpack.c.b16 %v1483, %v1482
        %v1487 = vpack.c.b16 %v1485, %v1484
        %v1491 = vsel %vm932, %v1469, 0
        %1493 = vmatpush.bf16.msra.mxu0 0
        %1494 = vmatpush.bf16.msra.mxu0 0
        %1495 = vmatpush.bf16.msra.mxu0 0
        %1496 = vmatpush.bf16.msra.mxu0 0
        %1497 = vmatpush.bf16.msra.mxu0 0
        %1498 = vmatpush.bf16.msra.mxu0 0
        %1499 = vmatpush.bf16.msra.mxu0 %v1487
        %1500 = vmatpush.bf16.msra.mxu0 %v1486
        %1501 = vmatmul.bf16.gmra.mxu0 %v1491
        %v1502 = vpop.f32.mrf.mxu0
        %v1503 = vadd.f32 %v1476, %v1502
        %v1504 = vpop.f32.mrf.mxu0
        %1505 = vdwg.mxu0
        %v1506 = vld [vmem:[%s16] sm:$0x1]
        %v1508 = vsel %vm988, %v1468, 0
        %v1511 = vsel %vm988, %v1503, 0
        %1513 = vmatpush.xpose.msra.mxu0 0.0
        %1514 = vmatpush.xpose.msra.mxu0 0.0
        %1515 = vmatpush.xpose.msra.mxu0 0.0
        %1516 = vmatpush.xpose.msra.mxu0 0.0
        %1517 = vmatpush.xpose.msra.mxu0 0.0
        %1518 = vmatpush.xpose.msra.mxu0 0.0
        %1519 = vmatpush.xpose.msra.mxu0 0.0
        %1520 = vmatpush.xpose.msra.mxu0 0.0
        %1521 = vmatpush.xpose.msra.mxu0 0.0
        %1522 = vmatpush.xpose.msra.mxu0 0.0
        %1523 = vmatpush.xpose.msra.mxu0 0.0
        %1524 = vmatpush.xpose.msra.mxu0 0.0
        %1525 = vmatpush.xpose.msra.mxu0 0.0
        %1526 = vmatpush.xpose.msra.mxu0 0.0
        %1527 = vmatpush.xpose.msra.mxu0 0.0
        %1528 = vmatpush.xpose.msra.mxu0 %v1511
        %1529 = vmatmul.f32.gmra.mxu0 %v1508
        %v1530 = vpop.f32.mrf.mxu0
        %v1531 = vadd.f32 0.0, %v1530
        %1532 = vdwg.mxu0
        %v1533 = vsel %vm988, %v1531, -inf
        %1534 = vmax.xlane.f32.xlu0 %v1533
        %v1535 = vpop.xlane.xlu0 %1534
        %v1536 = vsub.f32 %v1531, %v1535
        %v1537 = vmul.f32 %v1536, 1.442695
        %v1538 = vpow.pop %v1537
        %v1539 = vsel %vm988, %v1538, 0.0
        %1540 = vadd.xlane.f32.xlu0 %v1539
        %v1541 = vpop.xlane.xlu0 %1540
        %v1542 = vrcp.pop %v1541
        %v1543 = vmul.f32 %v1541, %v1542
        %v1544 = vsub.f32 1.0, %v1543
        %v1545 = vmul.f32 %v1542, %v1544
        %v1546 = vadd.f32 %v1542, %v1545
        %vm1547 = vweird.f32 %v1541
        %vm1548 = vweird.f32 %v1542
        %vm1549 = vmor %vm1547, %vm1548
        %v1550 = vsel %vm1549, %v1542, %v1546
        %v1551 = vand.u32 2147483647, %v1541
        %vm1552 = vcmp.eq.f32.partialorder %v1551, 8.507059e+37
        %v1553 = vand.u32 %v1541, 2147483648
        %v1554 = vor.u32 1.1754944e-38, %v1553
        %v1555 = vsel %vm1552, %v1554, %v1550
        %v1556 = vmul.f32 %v1538, %v1555
        %1557 = vrot.lane.b32.xlu0 %v1503, 96
        %v1558 = vpop.permute.xlu0 %1557
        %v1561 = vsel %vm988, %v1556, 0
        %1563 = vmatpush.msra.mxu0 0.0
        %1564 = vmatpush.msra.mxu0 0.0
        %1565 = vmatpush.msra.mxu0 0.0
        %1566 = vmatpush.msra.mxu0 0.0
        %1567 = vmatpush.msra.mxu0 0.0
        %1568 = vmatpush.msra.mxu0 0.0
        %1569 = vmatpush.msra.mxu0 0.0
        %1570 = vmatpush.msra.mxu0 0.0
        %1571 = vmatpush.msra.mxu0 0.0
        %1572 = vmatpush.msra.mxu0 0.0
        %1573 = vmatpush.msra.mxu0 0.0
        %1574 = vmatpush.msra.mxu0 0.0
        %1575 = vmatpush.msra.mxu0 0.0
        %1576 = vmatpush.msra.mxu0 0.0
        %1577 = vmatpush.msra.mxu0 0.0
        %1578 = vmatpush.msra.mxu0 %v1558
        %1579 = vmatmul.f32.gmra.mxu0 %v1561
        %v1580 = vpop.f32.mrf.mxu0
        %v1581 = vadd.f32 0.0, %v1580
        %1582 = vdwg.mxu0
        %v1583 = vpack.c.bf16 %v1581, %v1581
        %v1584 = vld [vmem:[%s15] sm:$0xf]
        %v1586 = vsel %vm988, %v1583, 0
        %v1589 = vsel %vm1070, %v1584, 0
        %1591 = vmatpush.bf16.msra.mxu0 0
        %1592 = vmatpush.bf16.msra.mxu0 0
        %1593 = vmatpush.bf16.msra.mxu0 0
        %1594 = vmatpush.bf16.msra.mxu0 0
        %1595 = vmatpush.bf16.msra.mxu0 0
        %1596 = vmatpush.bf16.msra.mxu0 0
        %1597 = vmatpush.bf16.msra.mxu0 0
        %1598 = vmatpush.bf16.msra.mxu0 %v1589
        %1599 = vmatmul.bf16.gmra.mxu0 %v1586
        %v1600 = vpop.f32.mrf.mxu0
        %v1601 = vadd.f32 0.0, %v1600
        %v1602 = vpop.f32.mrf.mxu0
        %1603 = vdwg.mxu0
        %v1605 = vperm.slane %v1506, 0
        %v1607 = vadd.f32 %v1605, %v1601
        %1608 = vrot.lane.b32.xlu0 %v1468, 120
        %v1609 = vpop.permute.xlu0 %1608
        %1610 = vrot.lane.b32.xlu0 %v1503, 120
        %v1611 = vpop.permute.xlu0 %1610
        %v1612 = vsel %vm988, %v1609, 0
        %v1614 = vsel %vm988, %v1611, 0
        %1616 = vmatpush.xpose.msra.mxu0 0.0
        %1617 = vmatpush.xpose.msra.mxu0 0.0
        %1618 = vmatpush.xpose.msra.mxu0 0.0
        %1619 = vmatpush.xpose.msra.mxu0 0.0
        %1620 = vmatpush.xpose.msra.mxu0 0.0
        %1621 = vmatpush.xpose.msra.mxu0 0.0
        %1622 = vmatpush.xpose.msra.mxu0 0.0
        %1623 = vmatpush.xpose.msra.mxu0 0.0
        %1624 = vmatpush.xpose.msra.mxu0 0.0
        %1625 = vmatpush.xpose.msra.mxu0 0.0
        %1626 = vmatpush.xpose.msra.mxu0 0.0
        %1627 = vmatpush.xpose.msra.mxu0 0.0
        %1628 = vmatpush.xpose.msra.mxu0 0.0
        %1629 = vmatpush.xpose.msra.mxu0 0.0
        %1630 = vmatpush.xpose.msra.mxu0 0.0
        %1631 = vmatpush.xpose.msra.mxu0 %v1614
        %1632 = vmatmul.f32.gmra.mxu0 %v1612
        %v1633 = vpop.f32.mrf.mxu0
        %v1634 = vadd.f32 0.0, %v1633
        %1635 = vdwg.mxu0
        %v1636 = vsel %vm988, %v1634, -inf
        %1637 = vmax.xlane.f32.xlu0 %v1636
        %v1638 = vpop.xlane.xlu0 %1637
        %v1639 = vsub.f32 %v1634, %v1638
        %v1640 = vmul.f32 %v1639, 1.442695
        %v1641 = vpow.pop %v1640
        %v1642 = vsel %vm988, %v1641, 0.0
        %1643 = vadd.xlane.f32.xlu0 %v1642
        %v1644 = vpop.xlane.xlu0 %1643
        %v1645 = vrcp.pop %v1644
        %v1646 = vmul.f32 %v1644, %v1645
        %v1647 = vsub.f32 1.0, %v1646
        %v1648 = vmul.f32 %v1645, %v1647
        %v1649 = vadd.f32 %v1645, %v1648
        %vm1650 = vweird.f32 %v1644
        %vm1651 = vweird.f32 %v1645
        %vm1652 = vmor %vm1650, %vm1651
        %v1653 = vsel %vm1652, %v1645, %v1649
        %v1654 = vand.u32 2147483647, %v1644
        %vm1655 = vcmp.eq.f32.partialorder %v1654, 8.507059e+37
        %v1656 = vand.u32 %v1644, 2147483648
        %v1657 = vor.u32 1.1754944e-38, %v1656
        %v1658 = vsel %vm1655, %v1657, %v1653
        %v1659 = vmul.f32 %v1641, %v1658
        %1660 = vrot.lane.b32.xlu0 %v1503, 88
        %v1661 = vpop.permute.xlu0 %1660
        %v1664 = vsel %vm988, %v1659, 0
        %1666 = vmatpush.msra.mxu0 0.0
        %1667 = vmatpush.msra.mxu0 0.0
        %1668 = vmatpush.msra.mxu0 0.0
        %1669 = vmatpush.msra.mxu0 0.0
        %1670 = vmatpush.msra.mxu0 0.0
        %1671 = vmatpush.msra.mxu0 0.0
        %1672 = vmatpush.msra.mxu0 0.0
        %1673 = vmatpush.msra.mxu0 0.0
        %1674 = vmatpush.msra.mxu0 0.0
        %1675 = vmatpush.msra.mxu0 0.0
        %1676 = vmatpush.msra.mxu0 0.0
        %1677 = vmatpush.msra.mxu0 0.0
        %1678 = vmatpush.msra.mxu0 0.0
        %1679 = vmatpush.msra.mxu0 0.0
        %1680 = vmatpush.msra.mxu0 0.0
        %1681 = vmatpush.msra.mxu0 %v1661
        %1682 = vmatmul.f32.gmra.mxu0 %v1664
        %v1683 = vpop.f32.mrf.mxu0
        %v1684 = vadd.f32 0.0, %v1683
        %1685 = vdwg.mxu0
        %v1686 = vpack.c.bf16 %v1684, %v1684
        %v1687 = vld [vmem:[%s15 + $0x4] sm:$0xf]
        %v1689 = vsel %vm988, %v1686, 0
        %v1692 = vsel %vm1070, %v1687, 0
        %1694 = vmatpush.bf16.msra.mxu0 0
        %1695 = vmatpush.bf16.msra.mxu0 0
        %1696 = vmatpush.bf16.msra.mxu0 0
        %1697 = vmatpush.bf16.msra.mxu0 0
        %1698 = vmatpush.bf16.msra.mxu0 0
        %1699 = vmatpush.bf16.msra.mxu0 0
        %1700 = vmatpush.bf16.msra.mxu0 0
        %1701 = vmatpush.bf16.msra.mxu0 %v1692
        %1702 = vmatmul.bf16.gmra.mxu0 %v1689
        %v1703 = vpop.f32.mrf.mxu0
        %v1704 = vadd.f32 0.0, %v1703
        %v1705 = vpop.f32.mrf.mxu0
        %1706 = vdwg.mxu0
        %v1707 = vadd.f32 %v1607, %v1704
        %1708 = vrot.lane.b32.xlu0 %v1468, 112
        %v1709 = vpop.permute.xlu0 %1708
        %1710 = vrot.lane.b32.xlu0 %v1503, 112
        %v1711 = vpop.permute.xlu0 %1710
        %v1712 = vsel %vm988, %v1709, 0
        %v1714 = vsel %vm988, %v1711, 0
        %1716 = vmatpush.xpose.msra.mxu0 0.0
        %1717 = vmatpush.xpose.msra.mxu0 0.0
        %1718 = vmatpush.xpose.msra.mxu0 0.0
        %1719 = vmatpush.xpose.msra.mxu0 0.0
        %1720 = vmatpush.xpose.msra.mxu0 0.0
        %1721 = vmatpush.xpose.msra.mxu0 0.0
        %1722 = vmatpush.xpose.msra.mxu0 0.0
        %1723 = vmatpush.xpose.msra.mxu0 0.0
        %1724 = vmatpush.xpose.msra.mxu0 0.0
        %1725 = vmatpush.xpose.msra.mxu0 0.0
        %1726 = vmatpush.xpose.msra.mxu0 0.0
        %1727 = vmatpush.xpose.msra.mxu0 0.0
        %1728 = vmatpush.xpose.msra.mxu0 0.0
        %1729 = vmatpush.xpose.msra.mxu0 0.0
        %1730 = vmatpush.xpose.msra.mxu0 0.0
        %1731 = vmatpush.xpose.msra.mxu0 %v1714
        %1732 = vmatmul.f32.gmra.mxu0 %v1712
        %v1733 = vpop.f32.mrf.mxu0
        %v1734 = vadd.f32 0.0, %v1733
        %1735 = vdwg.mxu0
        %v1736 = vsel %vm988, %v1734, -inf
        %1737 = vmax.xlane.f32.xlu0 %v1736
        %v1738 = vpop.xlane.xlu0 %1737
        %v1739 = vsub.f32 %v1734, %v1738
        %v1740 = vmul.f32 %v1739, 1.442695
        %v1741 = vpow.pop %v1740
        %v1742 = vsel %vm988, %v1741, 0.0
        %1743 = vadd.xlane.f32.xlu0 %v1742
        %v1744 = vpop.xlane.xlu0 %1743
        %v1745 = vrcp.pop %v1744
        %v1746 = vmul.f32 %v1744, %v1745
        %v1747 = vsub.f32 1.0, %v1746
        %v1748 = vmul.f32 %v1745, %v1747
        %v1749 = vadd.f32 %v1745, %v1748
        %vm1750 = vweird.f32 %v1744
        %vm1751 = vweird.f32 %v1745
        %vm1752 = vmor %vm1750, %vm1751
        %v1753 = vsel %vm1752, %v1745, %v1749
        %v1754 = vand.u32 2147483647, %v1744
        %vm1755 = vcmp.eq.f32.partialorder %v1754, 8.507059e+37
        %v1756 = vand.u32 %v1744, 2147483648
        %v1757 = vor.u32 1.1754944e-38, %v1756
        %v1758 = vsel %vm1755, %v1757, %v1753
        %v1759 = vmul.f32 %v1741, %v1758
        %1760 = vrot.lane.b32.xlu0 %v1503, 80
        %v1761 = vpop.permute.xlu0 %1760
        %v1764 = vsel %vm988, %v1759, 0
        %1766 = vmatpush.msra.mxu0 0.0
        %1767 = vmatpush.msra.mxu0 0.0
        %1768 = vmatpush.msra.mxu0 0.0
        %1769 = vmatpush.msra.mxu0 0.0
        %1770 = vmatpush.msra.mxu0 0.0
        %1771 = vmatpush.msra.mxu0 0.0
        %1772 = vmatpush.msra.mxu0 0.0
        %1773 = vmatpush.msra.mxu0 0.0
        %1774 = vmatpush.msra.mxu0 0.0
        %1775 = vmatpush.msra.mxu0 0.0
        %1776 = vmatpush.msra.mxu0 0.0
        %1777 = vmatpush.msra.mxu0 0.0
        %1778 = vmatpush.msra.mxu0 0.0
        %1779 = vmatpush.msra.mxu0 0.0
        %1780 = vmatpush.msra.mxu0 0.0
        %1781 = vmatpush.msra.mxu0 %v1761
        %1782 = vmatmul.f32.gmra.mxu0 %v1764
        %v1783 = vpop.f32.mrf.mxu0
        %v1784 = vadd.f32 0.0, %v1783
        %1785 = vdwg.mxu0
        %v1786 = vpack.c.bf16 %v1784, %v1784
        %v1787 = vld [vmem:[%s15 + $0x8] sm:$0xf]
        %v1789 = vsel %vm988, %v1786, 0
        %v1792 = vsel %vm1070, %v1787, 0
        %1794 = vmatpush.bf16.msra.mxu0 0
        %1795 = vmatpush.bf16.msra.mxu0 0
        %1796 = vmatpush.bf16.msra.mxu0 0
        %1797 = vmatpush.bf16.msra.mxu0 0
        %1798 = vmatpush.bf16.msra.mxu0 0
        %1799 = vmatpush.bf16.msra.mxu0 0
        %1800 = vmatpush.bf16.msra.mxu0 0
        %1801 = vmatpush.bf16.msra.mxu0 %v1792
        %1802 = vmatmul.bf16.gmra.mxu0 %v1789
        %v1803 = vpop.f32.mrf.mxu0
        %v1804 = vadd.f32 0.0, %v1803
        %v1805 = vpop.f32.mrf.mxu0
        %1806 = vdwg.mxu0
        %v1807 = vadd.f32 %v1707, %v1804
        %1808 = vrot.lane.b32.xlu0 %v1468, 104
        %v1809 = vpop.permute.xlu0 %1808
        %1810 = vrot.lane.b32.xlu0 %v1503, 104
        %v1811 = vpop.permute.xlu0 %1810
        %v1812 = vsel %vm988, %v1809, 0
        %v1814 = vsel %vm988, %v1811, 0
        %1816 = vmatpush.xpose.msra.mxu0 0.0
        %1817 = vmatpush.xpose.msra.mxu0 0.0
        %1818 = vmatpush.xpose.msra.mxu0 0.0
        %1819 = vmatpush.xpose.msra.mxu0 0.0
        %1820 = vmatpush.xpose.msra.mxu0 0.0
        %1821 = vmatpush.xpose.msra.mxu0 0.0
        %1822 = vmatpush.xpose.msra.mxu0 0.0
        %1823 = vmatpush.xpose.msra.mxu0 0.0
        %1824 = vmatpush.xpose.msra.mxu0 0.0
        %1825 = vmatpush.xpose.msra.mxu0 0.0
        %1826 = vmatpush.xpose.msra.mxu0 0.0
        %1827 = vmatpush.xpose.msra.mxu0 0.0
        %1828 = vmatpush.xpose.msra.mxu0 0.0
        %1829 = vmatpush.xpose.msra.mxu0 0.0
        %1830 = vmatpush.xpose.msra.mxu0 0.0
        %1831 = vmatpush.xpose.msra.mxu0 %v1814
        %1832 = vmatmul.f32.gmra.mxu0 %v1812
        %v1833 = vpop.f32.mrf.mxu0
        %v1834 = vadd.f32 0.0, %v1833
        %1835 = vdwg.mxu0
        %v1836 = vsel %vm988, %v1834, -inf
        %1837 = vmax.xlane.f32.xlu0 %v1836
        %v1838 = vpop.xlane.xlu0 %1837
        %v1839 = vsub.f32 %v1834, %v1838
        %v1840 = vmul.f32 %v1839, 1.442695
        %v1841 = vpow.pop %v1840
        %v1842 = vsel %vm988, %v1841, 0.0
        %1843 = vadd.xlane.f32.xlu0 %v1842
        %v1844 = vpop.xlane.xlu0 %1843
        %v1845 = vrcp.pop %v1844
        %v1846 = vmul.f32 %v1844, %v1845
        %v1847 = vsub.f32 1.0, %v1846
        %v1848 = vmul.f32 %v1845, %v1847
        %v1849 = vadd.f32 %v1845, %v1848
        %vm1850 = vweird.f32 %v1844
        %vm1851 = vweird.f32 %v1845
        %vm1852 = vmor %vm1850, %vm1851
        %v1853 = vsel %vm1852, %v1845, %v1849
        %v1854 = vand.u32 2147483647, %v1844
        %vm1855 = vcmp.eq.f32.partialorder %v1854, 8.507059e+37
        %v1856 = vand.u32 %v1844, 2147483648
        %v1857 = vor.u32 1.1754944e-38, %v1856
        %v1858 = vsel %vm1855, %v1857, %v1853
        %v1859 = vmul.f32 %v1841, %v1858
        %1860 = vrot.lane.b32.xlu0 %v1503, 72
        %v1861 = vpop.permute.xlu0 %1860
        %v1864 = vsel %vm988, %v1859, 0
        %1866 = vmatpush.msra.mxu0 0.0
        %1867 = vmatpush.msra.mxu0 0.0
        %1868 = vmatpush.msra.mxu0 0.0
        %1869 = vmatpush.msra.mxu0 0.0
        %1870 = vmatpush.msra.mxu0 0.0
        %1871 = vmatpush.msra.mxu0 0.0
        %1872 = vmatpush.msra.mxu0 0.0
        %1873 = vmatpush.msra.mxu0 0.0
        %1874 = vmatpush.msra.mxu0 0.0
        %1875 = vmatpush.msra.mxu0 0.0
        %1876 = vmatpush.msra.mxu0 0.0
        %1877 = vmatpush.msra.mxu0 0.0
        %1878 = vmatpush.msra.mxu0 0.0
        %1879 = vmatpush.msra.mxu0 0.0
        %1880 = vmatpush.msra.mxu0 0.0
        %1881 = vmatpush.msra.mxu0 %v1861
        %1882 = vmatmul.f32.gmra.mxu0 %v1864
        %v1883 = vpop.f32.mrf.mxu0
        %v1884 = vadd.f32 0.0, %v1883
        %1885 = vdwg.mxu0
        %v1886 = vpack.c.bf16 %v1884, %v1884
        %v1887 = vld [vmem:[%s15 + $0xc] sm:$0xf]
        %v1889 = vsel %vm988, %v1886, 0
        %v1892 = vsel %vm1070, %v1887, 0
        %1894 = vmatpush.bf16.msra.mxu0 0
        %1895 = vmatpush.bf16.msra.mxu0 0
        %1896 = vmatpush.bf16.msra.mxu0 0
        %1897 = vmatpush.bf16.msra.mxu0 0
        %1898 = vmatpush.bf16.msra.mxu0 0
        %1899 = vmatpush.bf16.msra.mxu0 0
        %1900 = vmatpush.bf16.msra.mxu0 0
        %1901 = vmatpush.bf16.msra.mxu0 %v1892
        %1902 = vmatmul.bf16.gmra.mxu0 %v1889
        %v1903 = vpop.f32.mrf.mxu0
        %v1904 = vadd.f32 0.0, %v1903
        %v1905 = vpop.f32.mrf.mxu0
        %1906 = vdwg.mxu0
        %v1907 = vadd.f32 %v1807, %v1904
        %v1908 = vadd.f32 %v1907, %v1430
        %v1909 = vsel %vm932, %v1908, 0.0
        %1910 = vadd.xlane.f32.xlu0 %v1909
        %v1911 = vpop.xlane.xlu0 %1910
        %v1912 = vmul.f32 %v1911, %v1401
        %v1913 = vsub.f32 %v1908, %v1912
        %v1914 = vmul.f32 %v1913, %v1913
        %v1915 = vsel %vm932, %v1914, 0.0
        %1916 = vadd.xlane.f32.xlu0 %v1915
        %v1917 = vpop.xlane.xlu0 %1916
        %v1918 = vmul.f32 %v1917, %v1401
        %v1919 = vadd.f32 %v1918, 1e-05
        %v1920 = vrsqrt.pop %v1919
        %v1921 = vmul.f32 %v1920, %v1919
        %v1922 = vmul.f32 %v1921, %v1920
        %v1923 = vmul.f32 0.5, %v1922
        %v1924 = vsub.f32 1.5, %v1923
        %v1925 = vmul.f32 %v1920, %v1924
        %vm1926 = vweird.f32 %v1919
        %vm1927 = vweird.f32 %v1920
        %vm1928 = vmor %vm1926, %vm1927
        %v1929 = vsel %vm1928, %v1920, %v1925
        %v1930 = vmul.f32 %v1913, %v1929
        %v1931 = vld [vmem:[#allocation2] sm:$0x1]
        %v1933 = vperm.slane %v1931, 0
        %v1935 = vmul.f32 %v1930, %v1933
        %v1936 = vld [vmem:[#allocation5] sm:$0x1]
        %v1938 = vperm.slane %v1936, 0
        %v1940 = vadd.f32 %v1935, %v1938
        %v1941 = vpack.c.bf16 %v1940, %v1940
        %v1942 = vld [vmem:[%s19] sm:$0xf]
        %v1943 = vld [vmem:[%s19 + $0x4] sm:$0xf]
        %v1944 = vld [vmem:[%s19 + $0x8] sm:$0xf]
        %v1945 = vld [vmem:[%s19 + $0xc] sm:$0xf]
        %v1946 = vld [vmem:[#allocation7] sm:$0x1]
        %v1948 = vperm.slane %v1946, 0
        %v1954 = vunpack.c.l.b16 %v1942
        %v1955 = vunpack.c.l.b16 %v1943
        %v1956 = vunpack.c.l.b16 %v1944
        %v1957 = vunpack.c.l.b16 %v1945
        %v1958 = vpack.c.b16 %v1955, %v1954
        %v1959 = vpack.c.b16 %v1957, %v1956
        %v1963 = vsel %vm932, %v1941, 0
        %1965 = vmatpush.bf16.msra.mxu0 0
        %1966 = vmatpush.bf16.msra.mxu0 0
        %1967 = vmatpush.bf16.msra.mxu0 0
        %1968 = vmatpush.bf16.msra.mxu0 0
        %1969 = vmatpush.bf16.msra.mxu0 0
        %1970 = vmatpush.bf16.msra.mxu0 0
        %1971 = vmatpush.bf16.msra.mxu0 %v1959
        %1972 = vmatpush.bf16.msra.mxu0 %v1958
        %1973 = vmatmul.bf16.gmra.mxu0 %v1963
        %v1974 = vpop.f32.mrf.mxu0
        %v1975 = vadd.f32 %v1948, %v1974
        %v1976 = vpop.f32.mrf.mxu0
        %1977 = vdwg.mxu0
        %v1978 = vmax.f32 %v1975, 0.0
        %v1979 = vpack.c.bf16 %v1978, %v1978
        %v1980 = vld [vmem:[%s21] sm:$0xf]
        %v1981 = vld [vmem:[%s21 + $0x4] sm:$0xf]
        %v1982 = vld [vmem:[%s21 + $0x8] sm:$0xf]
        %v1983 = vld [vmem:[%s21 + $0xc] sm:$0xf]
        %v1984 = vld [vmem:[%s21 + $0x10] sm:$0xf]
        %v1985 = vld [vmem:[%s21 + $0x14] sm:$0xf]
        %v1986 = vld [vmem:[%s21 + $0x18] sm:$0xf]
        %v1987 = vld [vmem:[%s21 + $0x1c] sm:$0xf]
        %v1988 = vld [vmem:[#allocation8] sm:$0x1]
        %v1990 = vperm.slane %v1988, 0
        %v2000 = vunpack.c.l.b16 %v1980
        %v2001 = vunpack.c.l.b16 %v1981
        %v2002 = vunpack.c.l.b16 %v1982
        %v2003 = vunpack.c.l.b16 %v1983
        %v2004 = vunpack.c.l.b16 %v1984
        %v2005 = vunpack.c.l.b16 %v1985
        %v2006 = vunpack.c.l.b16 %v1986
        %v2007 = vunpack.c.l.b16 %v1987
        %v2008 = vpack.c.b16 %v2001, %v2000
        %v2009 = vpack.c.b16 %v2003, %v2002
        %v2010 = vpack.c.b16 %v2005, %v2004
        %v2011 = vpack.c.b16 %v2007, %v2006
        %vm2016 = vcmask 523264
        %v2018 = vsel %vm2016, %v1979, 0
        %2020 = vmatpush.bf16.msra.mxu0 0
        %2021 = vmatpush.bf16.msra.mxu0 0
        %2022 = vmatpush.bf16.msra.mxu0 0
        %2023 = vmatpush.bf16.msra.mxu0 0
        %2024 = vmatpush.bf16.msra.mxu0 %v2011
        %2025 = vmatpush.bf16.msra.mxu0 %v2010
        %2026 = vmatpush.bf16.msra.mxu0 %v2009
        %2027 = vmatpush.bf16.msra.mxu0 %v2008
        %2028 = vmatmul.bf16.gmra.mxu0 %v2018
        %v2029 = vpop.f32.mrf.mxu0
        %v2030 = vadd.f32 %v1990, %v2029
        %v2031 = vpop.f32.mrf.mxu0
        %2032 = vdwg.mxu0
        %v2033 = vadd.f32 %v2030, %v1940
        %v2034 = vsel %vm932, %v2033, 0.0
        %2035 = vadd.xlane.f32.xlu0 %v2034
        %v2036 = vpop.xlane.xlu0 %2035
        %v2037 = vmul.f32 %v2036, %v1401
        %v2038 = vsub.f32 %v2033, %v2037
        %v2039 = vmul.f32 %v2038, %v2038
        %v2040 = vsel %vm932, %v2039, 0.0
        %2041 = vadd.xlane.f32.xlu0 %v2040
        %v2042 = vpop.xlane.xlu0 %2041
        %v2043 = vmul.f32 %v2042, %v1401
        %v2044 = vadd.f32 %v2043, 1e-05
        %v2045 = vrsqrt.pop %v2044
        %v2046 = vmul.f32 %v2045, %v2044
        %v2047 = vmul.f32 %v2046, %v2045
        %v2048 = vmul.f32 0.5, %v2047
        %v2049 = vsub.f32 1.5, %v2048
        %v2050 = vmul.f32 %v2045, %v2049
        %vm2051 = vweird.f32 %v2044
        %vm2052 = vweird.f32 %v2045
        %vm2053 = vmor %vm2051, %vm2052
        %v2054 = vsel %vm2053, %v2045, %v2050
        %v2055 = vmul.f32 %v2038, %v2054
        %v2056 = vld [vmem:[#allocation10] sm:$0x1]
        %v2058 = vperm.slane %v2056, 0
        %v2060 = vmul.f32 %v2055, %v2058
        %v2061 = vld [vmem:[#allocation11] sm:$0x1]
        %v2063 = vperm.slane %v2061, 0
        %v2065 = vadd.f32 %v2060, %v2063
        %2066 = vst.msk [vmem:[%s891] sm:$0xff] %vm932, %v2065
        %s2067 = sand.u32 %s607, 1
        %s2068 = scalar_lea.sflag [#allocation4], %s2067
        %s2069 = sand.u32 %s607, 1
        %s2070 = smul.addr %s2069, 8
        %s2071 = scalar_lea.vmem [#allocation13], %s2070
        // Predicated region
        $region145: #{decoder_forward.3} parent=119 // pred_check
          %p2072 = pneg %p617
        $region146: #{decoder_forward.3} parent=119 // pred_check_branch
          %2074 = sbr.rel (%p2072) target = $region148
        $region147: #{decoder_forward.3} parent=119 // pred_region
          %2076 = vsyncadd %s2068, 0
          %s2077 = sadd.s32 %s48, %s47
          %s2078 = smul.addr %s2077, 8
          %s2079 = scalar_lea.hbm %s25, %s2078
          %s2081 = sshll.u32 %s2071, 4
          %s2082 = int_to_ptr.vmem [resolvable:$true] %s2081
          %s2083 = sshll.u32 %s2079, 4
          %s2084 = int_to_ptr.hbm [resolvable:$true] %s2083
          %2086 = dma.vmem_to_hbm [thread:$0]  %s2082, 128, %s2084, %s2068
        $region148: #{decoder_forward.3} parent=119 // pred_fallthru
          _
      $region120: #{decoder_forward.3} parent=5 // pred_fallthru
        _
      %p2087 = scmp.le.s32.totalorder 2, %s38
      // Predicated region
      $region149: #{decoder_forward.3} parent=5 // pred_check
        %p2088 = pneg %p2087
      $region150: #{decoder_forward.3} parent=5 // pred_check_branch
        %2090 = sbr.rel (%p2088) target = $region152
      $region151: #{decoder_forward.3} parent=5 // pred_region
        %s2091 = ssub.s32 %s38, 2
        // Predicated region
        $region153: #{decoder_forward.3} parent=151 // pred_check
          %p2092 = pneg %p623
        $region154: #{decoder_forward.3} parent=151 // pred_check_branch
          %2094 = sbr.rel (%p2092) target = $region156
        $region155: #{decoder_forward.3} parent=151 // pred_region
          %s2095 = sand.u32 %s608, 1
          %s2096 = scalar_lea.sflag [#allocation4], %s2095
          %s2097 = sand.u32 %s608, 1
          %s2098 = smul.addr %s2097, 8
          %s2099 = scalar_lea.vmem [#allocation13], %s2098
          %2101 = dma.done %s2096, 128
        $region156: #{decoder_forward.3} parent=151 // pred_fallthru
          _
      $region152: #{decoder_forward.3} parent=5 // pred_fallthru
        _
    $region6: #{decoder_forward.3} parent=1 // loop_footer
      %s42 = sadd.s32 1, %s38
    $region7: #{decoder_forward.3} parent=1 // loop_footer_branch
      %37 = sbr.rel target = $region3
    $region8: #{decoder_forward.3} parent=1 // loop_exit
      _
    %2102 = vsyncpa [#allocation3], 1
    %s2103 = scalar_lea.sflag [#allocation3], 1
    %2104 = vsyncpa %s2103, 1
    %2105 = vsyncpa [#allocation6], 1
    %2106 = vsyncpa [#allocation9], 1
    %2107 = vsyncpa [#allocation12], 1
    %2108 = vsyncpa [#allocation4], 1
    %s2109 = scalar_lea.sflag [#allocation4], 1
    %2110 = vsyncpa %s2109, 1

</llo_original>
